<compile_context>
chip_gen: v7x
topology: tpu7x:2x2x1
jax: 0.10.0
libtpu: 0.0.40
codegen_flags: <defaults>
</compile_context>

<pallas_src>
import functools

import numpy as np
import jax
import jax.numpy as jnp
from jax import lax
from jax.experimental import pallas as pl
from jax.experimental.pallas import tpu as pltpu


# ----------------------------------------------------------------------------
# Stage 1:  t  = relu(a1 * x_up_pad + d1) * mask
#           y1 = W1_im2col @ im2col(t) + b1
#           stats = per-channel [sum, sum_sq] of y1 over valid pixels (for condbn2)
# ----------------------------------------------------------------------------
def _stage1_kernel(x_ref, a1_ref, d1_ref, mask_ref, cmask_ref, w1_ref, b1_ref,
                   out_ref, stat_ref, *, taps, l_out):
    nb = x_ref.shape[0]
    cout = out_ref.shape[1]
    # loop-invariant loads hoisted out of the per-sample unroll
    m = mask_ref[...]
    cm = cmask_ref[...]
    w1 = w1_ref[...]
    b1 = b1_ref[...]
    acc_sum = jnp.zeros((cout, 1), jnp.float32)
    acc_sq = jnp.zeros((cout, 1), jnp.float32)
    for n in range(nb):                      # static unroll over the block batch
        x = x_ref[n]                         # (Cin, S1) f32, padded upsampled input
        # fused conditional-BN affine + ReLU; mask re-zeroes the padding border
        t = jnp.maximum(a1_ref[n] * x + d1_ref[n], 0.0) * m
        tb = t.astype(jnp.bfloat16)          # cast once; im2col slices stay bf16
        # im2col: the 9 taps are contiguous lane-axis slices of the flat padded image
        patches = jnp.concatenate([tb[:, off:off + l_out] for off in taps], axis=0)
        y = jnp.dot(w1, patches, preferred_element_type=jnp.float32) + b1
        out_ref[n] = y                       # (Cout, L1)
        # batch-norm statistics for condbn2, valid pixels only (junk columns masked)
        yv = y * cm
        acc_sum = acc_sum + jnp.sum(yv, axis=1, keepdims=True)
        acc_sq = acc_sq + jnp.sum(yv * yv, axis=1, keepdims=True)
    stat_ref[0] = jnp.concatenate([acc_sum, acc_sq], axis=1)      # (Cout, 2)


# ----------------------------------------------------------------------------
# Stage 2:  v = relu(a2 * y1 + d2) ;  out = W2_im2col @ im2col(v) + b2
#                                          + Wb @ x_up + bb   (1x1 bypass conv)
# ----------------------------------------------------------------------------
def _stage2_kernel(y1_ref, a2_ref, d2_ref, cmask_ref, w2_ref, b2_ref,
                   x_ref, wb_ref, bb_ref, out_ref, *, taps, l_out, wp, s_in):
    nb = y1_ref.shape[0]
    c = y1_ref.shape[1]
    # loop-invariant loads / constants hoisted out of the per-sample unroll
    cm = cmask_ref[...]
    w2 = w2_ref[...]
    b2 = b2_ref[...]
    wb = wb_ref[...]
    bb = bb_ref[...]
    head = jnp.zeros((c, wp + 1), jnp.bfloat16)
    tail = jnp.zeros((c, s_in - (wp + 1) - l_out), jnp.bfloat16)
    for n in range(nb):
        v = jnp.maximum(a2_ref[n] * y1_ref[n] + d2_ref[n], 0.0) * cm
        vb = v.astype(jnp.bfloat16)
        # Re-pad v into the same flat padded geometry as stage 1's input.  The two
        # masked junk columns per row double as the left/right zero border, so only a
        # small zero head/tail is needed (no padded scratch, no re-zeroing).
        vpad = jnp.concatenate([head, vb, tail], axis=1)          # (Cout, S1) bf16
        patches = jnp.concatenate([vpad[:, off:off + l_out] for off in taps], axis=0)
        main = jnp.dot(w2, patches, preferred_element_type=jnp.float32) + b2
        xs = x_ref[n][:, wp + 1:wp + 1 + l_out].astype(jnp.bfloat16)   # up2(x), (Cin,L1)
        byp = jnp.dot(wb, xs, preferred_element_type=jnp.float32) + bb
        out_ref[n] = main + byp


# ----------------------------------------------------------------------------
# Wrapper: parameter/layout plumbing + the two pallas_calls
# ----------------------------------------------------------------------------
def res_block_generator(x_nchw, y, params, *, eps=1e-5, block_batch=1):
    N, Cin, H, W = x_nchw.shape
    Cout = params["b1"].shape[0]
    assert N % block_batch == 0
    H2, W2 = 2 * H, 2 * W
    Wp = W2 + 2                    # width-padded row length (1 left + 1 right)
    S1 = (H2 + 3) * Wp             # rows: 1 top pad + H2 valid + 2 bottom pad
    L1 = H2 * Wp                   # flat length of the conv-output layout

    x = x_nchw.astype(jnp.float32)

    # --- condbn1: fold batch stats + per-sample (gamma, beta) into scale/shift.
    # TODO(synk): cross-batch BN statistics of the input + embedding gather are JAX glue
    #             (global reduction / table lookup); the affine itself runs in-kernel.
    mean1 = jnp.mean(x, axis=(0, 2, 3))
    inv1 = lax.rsqrt(jnp.var(x, axis=(0, 2, 3)) + eps)
    gb1 = params["embed1"][y]
    g1, be1 = gb1[:, :Cin], gb1[:, Cin:]
    a1 = (g1 * inv1[None, :])[:, :, None]                              # (N, Cin, 1)
    d1 = (be1 - g1 * mean1[None, :] * inv1[None, :])[:, :, None]

    # --- nearest 2x upsample + zero pad, flattened (pure replication: layout plumbing).
    # TODO(synk): the replication could be folded into conv1 via a sub-pixel tap
    #             decomposition to avoid materialising the 4x tensor in HBM.
    x_up = jnp.repeat(jnp.repeat(x, 2, axis=2), 2, axis=3)             # (N, Cin, 2H, 2W)
    x_flat = jnp.pad(x_up, ((0, 0), (0, 0), (1, 2), (1, 1))).reshape(N, Cin, S1)

    # masks: padded-grid border / junk columns of the flat output layout
    mask = jnp.pad(jnp.ones((H2, W2), jnp.float32), ((1, 2), (1, 1))).reshape(1, S1)
    colmask = jnp.tile(
        jnp.concatenate([jnp.ones((W2,), jnp.float32), jnp.zeros((2,), jnp.float32)]),
        H2).reshape(1, L1)

    # weights in im2col layout, bf16 for the MXU (f32 accumulation in-kernel)
    w1m = params["w1m"].astype(jnp.bfloat16)     # (Cout, 9*Cin)
    w2m = params["w2m"].astype(jnp.bfloat16)     # (Cout, 9*Cout)
    wbm = params["wbm"].astype(jnp.bfloat16)     # (Cout, Cin)
    b1 = params["b1"].reshape(Cout, 1)
    b2 = params["b2"].reshape(Cout, 1)
    bb = params["bb"].reshape(Cout, 1)

    taps = tuple(ky * Wp + kx for ky in range(3) for kx in range(3))
    nb = block_batch
    grid = (N // nb,)

    # ---- stage 1: relu(condbn1) -> conv1 (+ per-block BN2 statistic partials) --------
    y1, stats = pl.pallas_call(
        functools.partial(_stage1_kernel, taps=taps, l_out=L1),
        out_shape=(jax.ShapeDtypeStruct((N, Cout, L1), jnp.float32),
                   jax.ShapeDtypeStruct((N // nb, Cout, 2), jnp.float32)),
        grid_spec=pltpu.PrefetchScalarGridSpec(
            num_scalar_prefetch=0,
            grid=grid,
            in_specs=[
                pl.BlockSpec((nb, Cin, S1), lambda n: (n, 0, 0)),
                pl.BlockSpec((nb, Cin, 1), lambda n: (n, 0, 0)),
                pl.BlockSpec((nb, Cin, 1), lambda n: (n, 0, 0)),
                pl.BlockSpec((1, S1), lambda n: (0, 0)),
                pl.BlockSpec((1, L1), lambda n: (0, 0)),
                pl.BlockSpec((Cout, 9 * Cin), lambda n: (0, 0)),
                pl.BlockSpec((Cout, 1), lambda n: (0, 0)),
            ],
            out_specs=[
                pl.BlockSpec((nb, Cout, L1), lambda n: (n, 0, 0)),
                pl.BlockSpec((1, Cout, 2), lambda n: (n, 0, 0)),
            ],
        ),
        compiler_params=pltpu.CompilerParams(dimension_semantics=("parallel",)),
    )(x_flat, a1, d1, mask, colmask, w1m, b1)

    # --- condbn2: batch statistics from the in-kernel partials (tiny reduction; no
    #     full HBM re-read of y1).
    s = jnp.sum(stats, axis=0)                                         # (Cout, 2)
    cnt = jnp.float32(N * H2 * W2)
    mean2 = s[:, 0] / cnt
    var2 = jnp.maximum(s[:, 1] / cnt - mean2 * mean2, 0.0)
    inv2 = lax.rsqrt(var2 + eps)
    gb2 = params["embed2"][y]
    g2, be2 = gb2[:, :Cout], gb2[:, Cout:]
    a2 = (g2 * inv2[None, :])[:, :, None]                              # (N, Cout, 1)
    d2 = (be2 - g2 * mean2[None, :] * inv2[None, :])[:, :, None]

    # ---- stage 2: relu(condbn2) -> conv2, plus the 1x1 bypass on up2(x) -------
    out = pl.pallas_call(
        functools.partial(_stage2_kernel, taps=taps, l_out=L1, wp=Wp, s_in=S1),
        out_shape=jax.ShapeDtypeStruct((N, Cout, L1), jnp.float32),
        grid_spec=pltpu.PrefetchScalarGridSpec(
            num_scalar_prefetch=0,
            grid=grid,
            in_specs=[
                pl.BlockSpec((nb, Cout, L1), lambda n: (n, 0, 0)),
                pl.BlockSpec((nb, Cout, 1), lambda n: (n, 0, 0)),
                pl.BlockSpec((nb, Cout, 1), lambda n: (n, 0, 0)),
                pl.BlockSpec((1, L1), lambda n: (0, 0)),
                pl.BlockSpec((Cout, 9 * Cout), lambda n: (0, 0)),
                pl.BlockSpec((Cout, 1), lambda n: (0, 0)),
                pl.BlockSpec((nb, Cin, S1), lambda n: (n, 0, 0)),
                pl.BlockSpec((Cout, Cin), lambda n: (0, 0)),
                pl.BlockSpec((Cout, 1), lambda n: (0, 0)),
            ],
            out_specs=pl.BlockSpec((nb, Cout, L1), lambda n: (n, 0, 0)),
        ),
        compiler_params=pltpu.CompilerParams(dimension_semantics=("parallel",)),
    )(y1, a2, d2, colmask, w2m, b2, x_flat, wbm, bb)

    # strip the 2 junk columns per row -> (N, Cout, 2H, 2W); already NCHW
    return out.reshape(N, Cout, H2, Wp)[:, :, :, :W2]


# ----------------------------------------------------------------------------
# Deterministic parameter init (xavier_uniform, PyTorch-style embed + spectral norm)
# ----------------------------------------------------------------------------
def _xavier_uniform(key, cout, cin, kh, kw, gain):
    fan_in = cin * kh * kw
    fan_out = cout * kh * kw
    bound = gain * np.sqrt(6.0 / (fan_in + fan_out))
    return jax.random.uniform(key, (cout, cin, kh, kw),
                              minval=-bound, maxval=bound, dtype=jnp.float32)


def _bias_init(key, cout, fan_in):
    bound = 1.0 / np.sqrt(fan_in)
    return jax.random.uniform(key, (cout,), minval=-bound, maxval=bound,
                              dtype=jnp.float32)


def _embed_init(key, num_classes, num_features):
    g = 1.0 + 0.02 * jax.random.normal(key, (num_classes, num_features),
                                       dtype=jnp.float32)
    return jnp.concatenate(
        [g, jnp.zeros((num_classes, num_features), jnp.float32)], axis=1)


def _spectral_norm(w2d, key, n_iter=1, eps=1e-12):
    u = jax.random.normal(key, (w2d.shape[0],), dtype=jnp.float32)
    u = u / (jnp.linalg.norm(u) + eps)
    v = None
    for _ in range(n_iter):
        v = w2d.T @ u
        v = v / (jnp.linalg.norm(v) + eps)
        u = w2d @ v
        u = u / (jnp.linalg.norm(u) + eps)
    sigma = u @ (w2d @ v)
    return w2d / sigma


def make_params(key, in_ch, out_ch, num_classes):
    ks = jax.random.split(key, 10)
    w1 = _xavier_uniform(ks[0], out_ch, in_ch, 3, 3, np.sqrt(2.0))
    w2 = _xavier_uniform(ks[1], out_ch, out_ch, 3, 3, np.sqrt(2.0))
    wb = _xavier_uniform(ks[2], out_ch, in_ch, 1, 1, 1.0)
    b1 = _bias_init(ks[3], out_ch, in_ch * 9)
    b2 = _bias_init(ks[4], out_ch, out_ch * 9)
    bb = _bias_init(ks[5], out_ch, in_ch)
    # spectral_norm wraps the class-conditional embeddings in the PyTorch module
    embed1 = _spectral_norm(_embed_init(ks[6], num_classes, in_ch), ks[8])
    embed2 = _spectral_norm(_embed_init(ks[7], num_classes, out_ch), ks[9])
    return {
        # OIHW weights (for the pure-JAX reference)
        "w1": w1, "w2": w2, "wb": wb,
        # im2col layout for the kernel: [co, (ky*3 + kx)*Cin + ci]
        "w1m": jnp.transpose(w1, (0, 2, 3, 1)).reshape(out_ch, 9 * in_ch),
        "w2m": jnp.transpose(w2, (0, 2, 3, 1)).reshape(out_ch, 9 * out_ch),
        "wbm": wb[:, :, 0, 0],
        "b1": b1, "b2": b2, "bb": bb,
        "embed1": embed1, "embed2": embed2,
    }


# ----------------------------------------------------------------------------
# Pure-JAX reference (training-mode conditional BN; bf16 matmul inputs mirrored)
# ----------------------------------------------------------------------------
def _ref_forward(x_nchw, y, params, eps=1e-5):
    x = x_nchw.astype(jnp.float32)
    Cin = x.shape[1]
    Cout = params["b1"].shape[0]
    dn = ("NCHW", "OIHW", "NCHW")

    def cbn(v, embed, nf):
        mean = jnp.mean(v, axis=(0, 2, 3))
        inv = lax.rsqrt(jnp.var(v, axis=(0, 2, 3)) + eps)
        vn = (v - mean[None, :, None, None]) * inv[None, :, None, None]
        gb = embed[y]
        g, b = gb[:, :nf], gb[:, nf:]
        return g[:, :, None, None] * vn + b[:, :, None, None]

    def up2(v):
        return jnp.repeat(jnp.repeat(v, 2, axis=2), 2, axis=3)

    def conv(v, w, b, pad):
        out = lax.conv_general_dilated(
            v.astype(jnp.bfloat16), w.astype(jnp.bfloat16), (1, 1), pad,
            dimension_numbers=dn, preferred_element_type=jnp.float32)
        return out + b[None, :, None, None]

    h = up2(jnp.maximum(cbn(x, params["embed1"], Cin), 0.0))
    y1 = conv(h, params["w1"], params["b1"], [(1, 1), (1, 1)])
    v = jnp.maximum(cbn(y1, params["embed2"], Cout), 0.0)
    main = conv(v, params["w2"], params["b2"], [(1, 1), (1, 1)])
    byp = conv(up2(x), params["wb"], params["bb"], [(0, 0), (0, 0)])
    return main + byp


if __name__ == "__main__":
    key = jax.random.PRNGKey(0)
    k_x, k_y, k_p = jax.random.split(key, 3)

    N, Cin, H, W = 2, 4, 16, 16
    Cout, num_classes = 8, 10

    x = jax.random.normal(k_x, (N, Cin, H, W), dtype=jnp.float32)
    y_lbl = jax.random.randint(k_y, (N,), 0, num_classes)
    params = make_params(k_p, Cin, Cout, num_classes)

    out = jax.jit(res_block_generator)(x, y_lbl, params)
    out = jax.block_until_ready(out)

    ref = _ref_forward(x, y_lbl, params)
    assert out.shape == (N, Cout, 2 * H, 2 * W), out.shape
    # tolerance accounts for intentional bf16 MXU inputs (kernel and reference both
    # quantize, but rounding near boundaries may differ between the two pipelines)
    np.testing.assert_allclose(np.asarray(out), np.asarray(ref),
                               rtol=1e-2, atol=1e-2)
    print("KERNEL_OK")
</pallas_src>

<mosaic_0001>
module attributes {stable_mosaic.version = 11 : i64} {
  func.func @_stage1_kernel(%arg0: i32, %arg1: memref<1x4x1190xf32, #tpu.memory_space<vmem>>, %arg2: memref<1x4x1xf32, #tpu.memory_space<vmem>>, %arg3: memref<1x4x1xf32, #tpu.memory_space<vmem>>, %arg4: memref<1x1190xf32, #tpu.memory_space<vmem>>, %arg5: memref<1x1088xf32, #tpu.memory_space<vmem>>, %arg6: memref<8x36xbf16, #tpu.memory_space<vmem>>, %arg7: memref<8x1xf32, #tpu.memory_space<vmem>>, %arg8: memref<1x8x1088xf32, #tpu.memory_space<vmem>>, %arg9: memref<1x8x2xf32, #tpu.memory_space<vmem>>) attributes {dimension_semantics = [#tpu.dimension_semantics<parallel>], iteration_bounds = array<i64: 2>, scalar_prefetch = 0 : i64, scratch_operands = 0 : i64, tpu.core_type = #tpu.core_type<tc>, window_params = [{transform_indices = @transform_0, window_bounds = array<i64: 1, 4, 1190>}, {transform_indices = @transform_1, window_bounds = array<i64: 1, 4, 1>}, {transform_indices = @transform_2, window_bounds = array<i64: 1, 4, 1>}, {pipeline_mode = #tpu.pipeline_mode<synchronous>, transform_indices = @transform_3, window_bounds = array<i64: 1, 1190>}, {pipeline_mode = #tpu.pipeline_mode<synchronous>, transform_indices = @transform_4, window_bounds = array<i64: 1, 1088>}, {pipeline_mode = #tpu.pipeline_mode<synchronous>, transform_indices = @transform_5, window_bounds = array<i64: 8, 36>}, {pipeline_mode = #tpu.pipeline_mode<synchronous>, transform_indices = @transform_6, window_bounds = array<i64: 8, 1>}, {transform_indices = @transform_7, window_bounds = array<i64: 1, 8, 1088>}, {transform_indices = @transform_8, window_bounds = array<i64: 1, 8, 2>}]} {
    %c0 = arith.constant 0 : index
    %c0_0 = arith.constant 0 : index
    %0 = vector.load %arg4[%c0, %c0_0] : memref<1x1190xf32, #tpu.memory_space<vmem>>, vector<1x1190xf32>
    %c0_1 = arith.constant 0 : index
    %c0_2 = arith.constant 0 : index
    %1 = vector.load %arg5[%c0_1, %c0_2] : memref<1x1088xf32, #tpu.memory_space<vmem>>, vector<1x1088xf32>
    %c0_3 = arith.constant 0 : index
    %c0_4 = arith.constant 0 : index
    %2 = vector.load %arg6[%c0_3, %c0_4] : memref<8x36xbf16, #tpu.memory_space<vmem>>, vector<8x36xbf16>
    %c0_5 = arith.constant 0 : index
    %c0_6 = arith.constant 0 : index
    %3 = vector.load %arg7[%c0_5, %c0_6] : memref<8x1xf32, #tpu.memory_space<vmem>>, vector<8x1xf32>
    %cst = arith.constant 0.000000e+00 : f32
    %4 = vector.broadcast %cst : f32 to vector<8x1xf32>
    %cst_7 = arith.constant 0.000000e+00 : f32
    %5 = vector.broadcast %cst_7 : f32 to vector<8x1xf32>
    %c0_8 = arith.constant 0 : index
    %c0_9 = arith.constant 0 : index
    %c0_10 = arith.constant 0 : index
    %6 = vector.load %arg1[%c0_8, %c0_9, %c0_10] : memref<1x4x1190xf32, #tpu.memory_space<vmem>>, vector<1x4x1190xf32>
    %7 = vector.shape_cast %6 : vector<1x4x1190xf32> to vector<4x1190xf32>
    %c0_11 = arith.constant 0 : index
    %c0_12 = arith.constant 0 : index
    %c0_13 = arith.constant 0 : index
    %8 = vector.load %arg2[%c0_11, %c0_12, %c0_13] : memref<1x4x1xf32, #tpu.memory_space<vmem>>, vector<1x4x1xf32>
    %9 = vector.shape_cast %8 : vector<1x4x1xf32> to vector<4x1xf32>
    %10 = vector.broadcast %9 : vector<4x1xf32> to vector<4x1190xf32>
    %11 = arith.mulf %10, %7 : vector<4x1190xf32>
    %c0_14 = arith.constant 0 : index
    %c0_15 = arith.constant 0 : index
    %c0_16 = arith.constant 0 : index
    %12 = vector.load %arg3[%c0_14, %c0_15, %c0_16] : memref<1x4x1xf32, #tpu.memory_space<vmem>>, vector<1x4x1xf32>
    %13 = vector.shape_cast %12 : vector<1x4x1xf32> to vector<4x1xf32>
    %14 = vector.broadcast %13 : vector<4x1xf32> to vector<4x1190xf32>
    %15 = arith.addf %11, %14 : vector<4x1190xf32>
    %cst_17 = arith.constant 0.000000e+00 : f32
    %16 = vector.broadcast %cst_17 : f32 to vector<4x1190xf32>
    %17 = arith.maximumf %15, %16 : vector<4x1190xf32>
    %18 = vector.broadcast %0 : vector<1x1190xf32> to vector<4x1190xf32>
    %19 = arith.mulf %17, %18 : vector<4x1190xf32>
    %20 = arith.truncf %19 : vector<4x1190xf32> to vector<4x1190xbf16>
    %21 = vector.extract_strided_slice %20 {offsets = [0, 0], sizes = [4, 1088], strides = [1, 1]} : vector<4x1190xbf16> to vector<4x1088xbf16>
    %22 = vector.extract_strided_slice %20 {offsets = [0, 1], sizes = [4, 1088], strides = [1, 1]} : vector<4x1190xbf16> to vector<4x1088xbf16>
    %23 = vector.extract_strided_slice %20 {offsets = [0, 2], sizes = [4, 1088], strides = [1, 1]} : vector<4x1190xbf16> to vector<4x1088xbf16>
    %24 = vector.extract_strided_slice %20 {offsets = [0, 34], sizes = [4, 1088], strides = [1, 1]} : vector<4x1190xbf16> to vector<4x1088xbf16>
    %25 = vector.extract_strided_slice %20 {offsets = [0, 35], sizes = [4, 1088], strides = [1, 1]} : vector<4x1190xbf16> to vector<4x1088xbf16>
    %26 = vector.extract_strided_slice %20 {offsets = [0, 36], sizes = [4, 1088], strides = [1, 1]} : vector<4x1190xbf16> to vector<4x1088xbf16>
    %27 = vector.extract_strided_slice %20 {offsets = [0, 68], sizes = [4, 1088], strides = [1, 1]} : vector<4x1190xbf16> to vector<4x1088xbf16>
    %28 = vector.extract_strided_slice %20 {offsets = [0, 69], sizes = [4, 1088], strides = [1, 1]} : vector<4x1190xbf16> to vector<4x1088xbf16>
    %29 = vector.extract_strided_slice %20 {offsets = [0, 70], sizes = [4, 1088], strides = [1, 1]} : vector<4x1190xbf16> to vector<4x1088xbf16>
    %30 = tpu.concatenate %21, %22, %23, %24, %25, %26, %27, %28, %29 in 0 : vector<4x1088xbf16>, vector<4x1088xbf16>, vector<4x1088xbf16>, vector<4x1088xbf16>, vector<4x1088xbf16>, vector<4x1088xbf16>, vector<4x1088xbf16>, vector<4x1088xbf16>, vector<4x1088xbf16> -> vector<36x1088xbf16>
    %cst_18 = arith.constant dense<0.000000e+00> : vector<8x1088xf32>
    %31 = tpu.matmul %2, %30, %cst_18 {dimension_numbers = #tpu.dot_dimension_numbers<[1], [0], [0], [1], [0, 0, 1, 1], [], []>} : vector<8x36xbf16>, vector<36x1088xbf16>, vector<8x1088xf32> -> vector<8x1088xf32>
    %32 = vector.broadcast %3 : vector<8x1xf32> to vector<8x1088xf32>
    %33 = arith.addf %31, %32 : vector<8x1088xf32>
    %c0_19 = arith.constant 0 : index
    %c0_20 = arith.constant 0 : index
    %c0_21 = arith.constant 0 : index
    %34 = vector.load %arg8[%c0_19, %c0_20, %c0_21] : memref<1x8x1088xf32, #tpu.memory_space<vmem>>, vector<1x8x1088xf32>
    %35 = vector.shape_cast %34 : vector<1x8x1088xf32> to vector<8x1088xf32>
    %36 = vector.shape_cast %33 : vector<8x1088xf32> to vector<1x8x1088xf32>
    tpu.vector_store %arg8[%c0_19, %c0_20, %c0_21], %36 {strides = array<i32>} : memref<1x8x1088xf32, #tpu.memory_space<vmem>>, vector<1x8x1088xf32>,
    %37 = vector.broadcast %1 : vector<1x1088xf32> to vector<8x1088xf32>
    %38 = arith.mulf %33, %37 : vector<8x1088xf32>
    %cst_22 = arith.constant dense<0.000000e+00> : vector<8xf32>
    %39 = vector.multi_reduction <add>, %38, %cst_22 [1] : vector<8x1088xf32> to vector<8xf32>
    %40 = vector.shape_cast %39 : vector<8xf32> to vector<8x1xf32>
    %41 = arith.addf %4, %40 : vector<8x1xf32>
    %42 = arith.mulf %38, %38 : vector<8x1088xf32>
    %cst_23 = arith.constant dense<0.000000e+00> : vector<8xf32>
    %43 = vector.multi_reduction <add>, %42, %cst_23 [1] : vector<8x1088xf32> to vector<8xf32>
    %44 = vector.shape_cast %43 : vector<8xf32> to vector<8x1xf32>
    %45 = arith.addf %5, %44 : vector<8x1xf32>
    %46 = tpu.concatenate %41, %45 in 1 : vector<8x1xf32>, vector<8x1xf32> -> vector<8x2xf32>
    %c0_24 = arith.constant 0 : index
    %c0_25 = arith.constant 0 : index
    %c0_26 = arith.constant 0 : index
    %47 = vector.load %arg9[%c0_24, %c0_25, %c0_26] : memref<1x8x2xf32, #tpu.memory_space<vmem>>, vector<1x8x2xf32>
    %48 = vector.shape_cast %47 : vector<1x8x2xf32> to vector<8x2xf32>
    %49 = vector.shape_cast %46 : vector<8x2xf32> to vector<1x8x2xf32>
    tpu.vector_store %arg9[%c0_24, %c0_25, %c0_26], %49 {strides = array<i32>} : memref<1x8x2xf32, #tpu.memory_space<vmem>>, vector<1x8x2xf32>,
    return
  }
  func.func @transform_0(%arg0: i32) -> (i32, i32, i32) {
    %c0_i32 = arith.constant 0 : i32
    %c0_i32_0 = arith.constant 0 : i32
    %c0_i32_1 = arith.constant 0 : i32
    return %arg0, %c0_i32, %c0_i32_0 : i32, i32, i32
  }
  func.func @transform_1(%arg0: i32) -> (i32, i32, i32) {
    %c0_i32 = arith.constant 0 : i32
    %c0_i32_0 = arith.constant 0 : i32
    %c0_i32_1 = arith.constant 0 : i32
    return %arg0, %c0_i32, %c0_i32_0 : i32, i32, i32
  }
  func.func @transform_2(%arg0: i32) -> (i32, i32, i32) {
    %c0_i32 = arith.constant 0 : i32
    %c0_i32_0 = arith.constant 0 : i32
    %c0_i32_1 = arith.constant 0 : i32
    return %arg0, %c0_i32, %c0_i32_0 : i32, i32, i32
  }
  func.func @transform_3(%arg0: i32) -> (i32, i32) {
    %c0_i32 = arith.constant 0 : i32
    %c0_i32_0 = arith.constant 0 : i32
    %c0_i32_1 = arith.constant 0 : i32
    return %c0_i32, %c0_i32_0 : i32, i32
  }
  func.func @transform_4(%arg0: i32) -> (i32, i32) {
    %c0_i32 = arith.constant 0 : i32
    %c0_i32_0 = arith.constant 0 : i32
    %c0_i32_1 = arith.constant 0 : i32
    return %c0_i32, %c0_i32_0 : i32, i32
  }
  func.func @transform_5(%arg0: i32) -> (i32, i32) {
    %c0_i32 = arith.constant 0 : i32
    %c0_i32_0 = arith.constant 0 : i32
    %c0_i32_1 = arith.constant 0 : i32
    return %c0_i32, %c0_i32_0 : i32, i32
  }
  func.func @transform_6(%arg0: i32) -> (i32, i32) {
    %c0_i32 = arith.constant 0 : i32
    %c0_i32_0 = arith.constant 0 : i32
    %c0_i32_1 = arith.constant 0 : i32
    return %c0_i32, %c0_i32_0 : i32, i32
  }
  func.func @transform_7(%arg0: i32) -> (i32, i32, i32) {
    %c0_i32 = arith.constant 0 : i32
    %c0_i32_0 = arith.constant 0 : i32
    %c0_i32_1 = arith.constant 0 : i32
    return %arg0, %c0_i32, %c0_i32_0 : i32, i32, i32
  }
  func.func @transform_8(%arg0: i32) -> (i32, i32, i32) {
    %c0_i32 = arith.constant 0 : i32
    %c0_i32_0 = arith.constant 0 : i32
    %c0_i32_1 = arith.constant 0 : i32
    return %arg0, %c0_i32, %c0_i32_0 : i32, i32, i32
  }
}

module attributes {stable_mosaic.version = 11 : i64} {
  func.func @_stage2_kernel(%arg0: i32, %arg1: memref<1x8x1088xf32, #tpu.memory_space<vmem>>, %arg2: memref<1x8x1xf32, #tpu.memory_space<vmem>>, %arg3: memref<1x8x1xf32, #tpu.memory_space<vmem>>, %arg4: memref<1x1088xf32, #tpu.memory_space<vmem>>, %arg5: memref<8x72xbf16, #tpu.memory_space<vmem>>, %arg6: memref<8x1xf32, #tpu.memory_space<vmem>>, %arg7: memref<1x4x1190xf32, #tpu.memory_space<vmem>>, %arg8: memref<8x4xbf16, #tpu.memory_space<vmem>>, %arg9: memref<8x1xf32, #tpu.memory_space<vmem>>, %arg10: memref<1x8x1088xf32, #tpu.memory_space<vmem>>) attributes {dimension_semantics = [#tpu.dimension_semantics<parallel>], iteration_bounds = array<i64: 2>, scalar_prefetch = 0 : i64, scratch_operands = 0 : i64, tpu.core_type = #tpu.core_type<tc>, window_params = [{transform_indices = @transform_0, window_bounds = array<i64: 1, 8, 1088>}, {transform_indices = @transform_1, window_bounds = array<i64: 1, 8, 1>}, {transform_indices = @transform_2, window_bounds = array<i64: 1, 8, 1>}, {pipeline_mode = #tpu.pipeline_mode<synchronous>, transform_indices = @transform_3, window_bounds = array<i64: 1, 1088>}, {pipeline_mode = #tpu.pipeline_mode<synchronous>, transform_indices = @transform_4, window_bounds = array<i64: 8, 72>}, {pipeline_mode = #tpu.pipeline_mode<synchronous>, transform_indices = @transform_5, window_bounds = array<i64: 8, 1>}, {transform_indices = @transform_6, window_bounds = array<i64: 1, 4, 1190>}, {pipeline_mode = #tpu.pipeline_mode<synchronous>, transform_indices = @transform_7, window_bounds = array<i64: 8, 4>}, {pipeline_mode = #tpu.pipeline_mode<synchronous>, transform_indices = @transform_8, window_bounds = array<i64: 8, 1>}, {transform_indices = @transform_9, window_bounds = array<i64: 1, 8, 1088>}]} {
    %c0 = arith.constant 0 : index
    %c0_0 = arith.constant 0 : index
    %0 = vector.load %arg4[%c0, %c0_0] : memref<1x1088xf32, #tpu.memory_space<vmem>>, vector<1x1088xf32>
    %c0_1 = arith.constant 0 : index
    %c0_2 = arith.constant 0 : index
    %1 = vector.load %arg5[%c0_1, %c0_2] : memref<8x72xbf16, #tpu.memory_space<vmem>>, vector<8x72xbf16>
    %c0_3 = arith.constant 0 : index
    %c0_4 = arith.constant 0 : index
    %2 = vector.load %arg6[%c0_3, %c0_4] : memref<8x1xf32, #tpu.memory_space<vmem>>, vector<8x1xf32>
    %c0_5 = arith.constant 0 : index
    %c0_6 = arith.constant 0 : index
    %3 = vector.load %arg8[%c0_5, %c0_6] : memref<8x4xbf16, #tpu.memory_space<vmem>>, vector<8x4xbf16>
    %c0_7 = arith.constant 0 : index
    %c0_8 = arith.constant 0 : index
    %4 = vector.load %arg9[%c0_7, %c0_8] : memref<8x1xf32, #tpu.memory_space<vmem>>, vector<8x1xf32>
    %cst = arith.constant 0.000000e+00 : bf16
    %5 = vector.broadcast %cst : bf16 to vector<8x35xbf16>
    %cst_9 = arith.constant 0.000000e+00 : bf16
    %6 = vector.broadcast %cst_9 : bf16 to vector<8x67xbf16>
    %c0_10 = arith.constant 0 : index
    %c0_11 = arith.constant 0 : index
    %c0_12 = arith.constant 0 : index
    %7 = vector.load %arg2[%c0_10, %c0_11, %c0_12] : memref<1x8x1xf32, #tpu.memory_space<vmem>>, vector<1x8x1xf32>
    %8 = vector.shape_cast %7 : vector<1x8x1xf32> to vector<8x1xf32>
    %c0_13 = arith.constant 0 : index
    %c0_14 = arith.constant 0 : index
    %c0_15 = arith.constant 0 : index
    %9 = vector.load %arg1[%c0_13, %c0_14, %c0_15] : memref<1x8x1088xf32, #tpu.memory_space<vmem>>, vector<1x8x1088xf32>
    %10 = vector.shape_cast %9 : vector<1x8x1088xf32> to vector<8x1088xf32>
    %11 = vector.broadcast %8 : vector<8x1xf32> to vector<8x1088xf32>
    %12 = arith.mulf %11, %10 : vector<8x1088xf32>
    %c0_16 = arith.constant 0 : index
    %c0_17 = arith.constant 0 : index
    %c0_18 = arith.constant 0 : index
    %13 = vector.load %arg3[%c0_16, %c0_17, %c0_18] : memref<1x8x1xf32, #tpu.memory_space<vmem>>, vector<1x8x1xf32>
    %14 = vector.shape_cast %13 : vector<1x8x1xf32> to vector<8x1xf32>
    %15 = vector.broadcast %14 : vector<8x1xf32> to vector<8x1088xf32>
    %16 = arith.addf %12, %15 : vector<8x1088xf32>
    %cst_19 = arith.constant 0.000000e+00 : f32
    %17 = vector.broadcast %cst_19 : f32 to vector<8x1088xf32>
    %18 = arith.maximumf %16, %17 : vector<8x1088xf32>
    %19 = vector.broadcast %0 : vector<1x1088xf32> to vector<8x1088xf32>
    %20 = arith.mulf %18, %19 : vector<8x1088xf32>
    %21 = arith.truncf %20 : vector<8x1088xf32> to vector<8x1088xbf16>
    %22 = tpu.concatenate %5, %21, %6 in 1 : vector<8x35xbf16>, vector<8x1088xbf16>, vector<8x67xbf16> -> vector<8x1190xbf16>
    %23 = vector.extract_strided_slice %22 {offsets = [0, 0], sizes = [8, 1088], strides = [1, 1]} : vector<8x1190xbf16> to vector<8x1088xbf16>
    %24 = vector.extract_strided_slice %22 {offsets = [0, 1], sizes = [8, 1088], strides = [1, 1]} : vector<8x1190xbf16> to vector<8x1088xbf16>
    %25 = vector.extract_strided_slice %22 {offsets = [0, 2], sizes = [8, 1088], strides = [1, 1]} : vector<8x1190xbf16> to vector<8x1088xbf16>
    %26 = vector.extract_strided_slice %22 {offsets = [0, 34], sizes = [8, 1088], strides = [1, 1]} : vector<8x1190xbf16> to vector<8x1088xbf16>
    %27 = vector.extract_strided_slice %22 {offsets = [0, 35], sizes = [8, 1088], strides = [1, 1]} : vector<8x1190xbf16> to vector<8x1088xbf16>
    %28 = vector.extract_strided_slice %22 {offsets = [0, 36], sizes = [8, 1088], strides = [1, 1]} : vector<8x1190xbf16> to vector<8x1088xbf16>
    %29 = vector.extract_strided_slice %22 {offsets = [0, 68], sizes = [8, 1088], strides = [1, 1]} : vector<8x1190xbf16> to vector<8x1088xbf16>
    %30 = vector.extract_strided_slice %22 {offsets = [0, 69], sizes = [8, 1088], strides = [1, 1]} : vector<8x1190xbf16> to vector<8x1088xbf16>
    %31 = vector.extract_strided_slice %22 {offsets = [0, 70], sizes = [8, 1088], strides = [1, 1]} : vector<8x1190xbf16> to vector<8x1088xbf16>
    %32 = tpu.concatenate %23, %24, %25, %26, %27, %28, %29, %30, %31 in 0 : vector<8x1088xbf16>, vector<8x1088xbf16>, vector<8x1088xbf16>, vector<8x1088xbf16>, vector<8x1088xbf16>, vector<8x1088xbf16>, vector<8x1088xbf16>, vector<8x1088xbf16>, vector<8x1088xbf16> -> vector<72x1088xbf16>
    %cst_20 = arith.constant dense<0.000000e+00> : vector<8x1088xf32>
    %33 = tpu.matmul %1, %32, %cst_20 {dimension_numbers = #tpu.dot_dimension_numbers<[1], [0], [0], [1], [0, 0, 1, 1], [], []>} : vector<8x72xbf16>, vector<72x1088xbf16>, vector<8x1088xf32> -> vector<8x1088xf32>
    %34 = vector.broadcast %2 : vector<8x1xf32> to vector<8x1088xf32>
    %35 = arith.addf %33, %34 : vector<8x1088xf32>
    %c0_21 = arith.constant 0 : index
    %c0_22 = arith.constant 0 : index
    %c0_23 = arith.constant 0 : index
    %36 = vector.load %arg7[%c0_21, %c0_22, %c0_23] : memref<1x4x1190xf32, #tpu.memory_space<vmem>>, vector<1x4x1190xf32>
    %37 = vector.shape_cast %36 : vector<1x4x1190xf32> to vector<4x1190xf32>
    %38 = vector.extract_strided_slice %37 {offsets = [0, 35], sizes = [4, 1088], strides = [1, 1]} : vector<4x1190xf32> to vector<4x1088xf32>
    %39 = arith.truncf %38 : vector<4x1088xf32> to vector<4x1088xbf16>
    %cst_24 = arith.constant dense<0.000000e+00> : vector<8x1088xf32>
    %40 = tpu.matmul %3, %39, %cst_24 {dimension_numbers = #tpu.dot_dimension_numbers<[1], [0], [0], [1], [0, 0, 1, 1], [], []>} : vector<8x4xbf16>, vector<4x1088xbf16>, vector<8x1088xf32> -> vector<8x1088xf32>
    %41 = vector.broadcast %4 : vector<8x1xf32> to vector<8x1088xf32>
    %42 = arith.addf %40, %41 : vector<8x1088xf32>
    %43 = arith.addf %35, %42 : vector<8x1088xf32>
    %c0_25 = arith.constant 0 : index
    %c0_26 = arith.constant 0 : index
    %c0_27 = arith.constant 0 : index
    %44 = vector.load %arg10[%c0_25, %c0_26, %c0_27] : memref<1x8x1088xf32, #tpu.memory_space<vmem>>, vector<1x8x1088xf32>
    %45 = vector.shape_cast %44 : vector<1x8x1088xf32> to vector<8x1088xf32>
    %46 = vector.shape_cast %43 : vector<8x1088xf32> to vector<1x8x1088xf32>
    tpu.vector_store %arg10[%c0_25, %c0_26, %c0_27], %46 {strides = array<i32>} : memref<1x8x1088xf32, #tpu.memory_space<vmem>>, vector<1x8x1088xf32>,
    return
  }
  func.func @transform_0(%arg0: i32) -> (i32, i32, i32) {
    %c0_i32 = arith.constant 0 : i32
    %c0_i32_0 = arith.constant 0 : i32
    %c0_i32_1 = arith.constant 0 : i32
    return %arg0, %c0_i32, %c0_i32_0 : i32, i32, i32
  }
  func.func @transform_1(%arg0: i32) -> (i32, i32, i32) {
    %c0_i32 = arith.constant 0 : i32
    %c0_i32_0 = arith.constant 0 : i32
    %c0_i32_1 = arith.constant 0 : i32
    return %arg0, %c0_i32, %c0_i32_0 : i32, i32, i32
  }
  func.func @transform_2(%arg0: i32) -> (i32, i32, i32) {
    %c0_i32 = arith.constant 0 : i32
    %c0_i32_0 = arith.constant 0 : i32
    %c0_i32_1 = arith.constant 0 : i32
    return %arg0, %c0_i32, %c0_i32_0 : i32, i32, i32
  }
  func.func @transform_3(%arg0: i32) -> (i32, i32) {
    %c0_i32 = arith.constant 0 : i32
    %c0_i32_0 = arith.constant 0 : i32
    %c0_i32_1 = arith.constant 0 : i32
    return %c0_i32, %c0_i32_0 : i32, i32
  }
  func.func @transform_4(%arg0: i32) -> (i32, i32) {
    %c0_i32 = arith.constant 0 : i32
    %c0_i32_0 = arith.constant 0 : i32
    %c0_i32_1 = arith.constant 0 : i32
    return %c0_i32, %c0_i32_0 : i32, i32
  }
  func.func @transform_5(%arg0: i32) -> (i32, i32) {
    %c0_i32 = arith.constant 0 : i32
    %c0_i32_0 = arith.constant 0 : i32
    %c0_i32_1 = arith.constant 0 : i32
    return %c0_i32, %c0_i32_0 : i32, i32
  }
  func.func @transform_6(%arg0: i32) -> (i32, i32, i32) {
    %c0_i32 = arith.constant 0 : i32
    %c0_i32_0 = arith.constant 0 : i32
    %c0_i32_1 = arith.constant 0 : i32
    return %arg0, %c0_i32, %c0_i32_0 : i32, i32, i32
  }
  func.func @transform_7(%arg0: i32) -> (i32, i32) {
    %c0_i32 = arith.constant 0 : i32
    %c0_i32_0 = arith.constant 0 : i32
    %c0_i32_1 = arith.constant 0 : i32
    return %c0_i32, %c0_i32_0 : i32, i32
  }
  func.func @transform_8(%arg0: i32) -> (i32, i32) {
    %c0_i32 = arith.constant 0 : i32
    %c0_i32_0 = arith.constant 0 : i32
    %c0_i32_1 = arith.constant 0 : i32
    return %c0_i32, %c0_i32_0 : i32, i32
  }
  func.func @transform_9(%arg0: i32) -> (i32, i32, i32) {
    %c0_i32 = arith.constant 0 : i32
    %c0_i32_0 = arith.constant 0 : i32
    %c0_i32_1 = arith.constant 0 : i32
    return %arg0, %c0_i32, %c0_i32_0 : i32, i32, i32
  }
}

</mosaic_0001>

<llo_original>
// kernel: tile.6
$region0: #{tile.6}
  #allocation0 [shape = 's32[1]{0}', space=sflag, size = 0x4, scoped, tag = 'scoped memory for tile.6']
  %s0 = inlined_call_operand.vmem [shape: f32[34], index: 0, kind: input, shape index: {}]
  %s1 = inlined_call_operand.vmem [shape: f32[32,34], index: 1, kind: output, shape index: {}]
  // Predicated region
  $region2: #{tile.6} parent=0 // pred_check
    _
  $region3: #{tile.6} parent=0 // pred_check_branch
    %3 = sbr.rel (0) target = $region5
  $region4: #{tile.6} parent=0 // pred_region
    _
  $region5: #{tile.6} parent=0 // pred_fallthru
    _
  %v4 = vld [vmem:[%s0] ss:$0 sm:$0xff]
  %5 = vst [vmem:[%s1] sm:$0xff] %v4
  %s6 = scalar_lea.vmem %s1, 8
  %7 = vst [vmem:[%s6] sm:$0xff] %v4
  %s8 = scalar_lea.vmem %s1, 16
  %9 = vst [vmem:[%s8] sm:$0xff] %v4
  %s10 = scalar_lea.vmem %s1, 24
  %11 = vst [vmem:[%s10] sm:$0xff] %v4

// kernel: tile.7
$region0: #{tile.7}
  %s0 = inlined_call_operand.vmem [shape: f32[32,34], index: 0, kind: input, shape index: {}]
  %s1 = inlined_call_operand.vmem [shape: f32[1,1088], index: 1, kind: output, shape index: {}]
  $region1: #{tile.7} parent=0
    #allocation0 [shape = 'u8[36864]{0}', space=vmem, size = 0x9000, scoped, tag = 'scoped mem for output reshape']
    %v2 = vld [vmem:[%s0] sm:$0x1]
    %vm3 = vcmask 277504
    %4 = vst.msk [vmem:[#allocation0] sm:$0x1] %vm3, %v2
    %s5 = scalar_lea.vmem %s0, 15
    %v6 = vld [vmem:[%s5] sm:$0x1]
    %s7 = scalar_lea.vmem %s0, 15
    %v8 = vld [vmem:[%s7] sm:$0x1]
    %vm9 = vcmask 15360
    %v10 = vsel %vm9, %v8, %v6
    %11 = vrot.lane.b32.xlu0 %v10, 126
    %v12 = vpop.permute.xlu0 %11
    %vm13 = vcmask 261120
    %s14 = scalar_lea.vmem [#allocation0], 32
    %15 = vst.msk [vmem:[%s14] sm:$0x1] %vm13, %v12
    %vm16 = vcmask 1048560
    %s17 = scalar_lea.vmem [#allocation0], 24
    %18 = vst.msk [vmem:[%s17] sm:$0x1] %vm16, %v12
    %s19 = scalar_lea.vmem %s0, 30
    %v20 = vld [vmem:[%s19] sm:$0x1]
    %s21 = scalar_lea.vmem %s0, 30
    %v22 = vld [vmem:[%s21] sm:$0x1]
    %vm23 = vcmask 31744
    %v24 = vsel %vm23, %v22, %v20
    %25 = vrot.lane.b32.xlu0 %v24, 124
    %v26 = vpop.permute.xlu0 %25
    %vm27 = vcmask 244736
    %s28 = scalar_lea.vmem [#allocation0], 64
    %29 = vst.msk [vmem:[%s28] sm:$0x1] %vm27, %v26
    %vm30 = vcmask 1048544
    %s31 = scalar_lea.vmem [#allocation0], 56
    %32 = vst.msk [vmem:[%s31] sm:$0x1] %vm30, %v26
    %s33 = scalar_lea.vmem %s0, 11
    %v34 = vld [vmem:[%s33] sm:$0x1]
    %s35 = scalar_lea.vmem %s0, 11
    %v36 = vld [vmem:[%s35] sm:$0x1]
    %vm37 = vcmask 80896
    %v38 = vsel %vm37, %v36, %v34
    %39 = vrot.lane.b32.xlu0 %v38, 118
    %v40 = vpop.permute.xlu0 %39
    %vm41 = vcmask 195584
    %s42 = scalar_lea.vmem [#allocation0], 24
    %43 = vst.msk [vmem:[%s42] sm:$0x1] %vm41, %v40
    %vm44 = vcmask 1048496
    %s45 = scalar_lea.vmem [#allocation0], 16
    %46 = vst.msk [vmem:[%s45] sm:$0x1] %vm44, %v40
    %s47 = scalar_lea.vmem %s0, 26
    %v48 = vld [vmem:[%s47] sm:$0x1]
    %s49 = scalar_lea.vmem %s0, 26
    %v50 = vld [vmem:[%s49] sm:$0x1]
    %vm51 = vcmask 97280
    %v52 = vsel %vm51, %v50, %v48
    %53 = vrot.lane.b32.xlu0 %v52, 116
    %v54 = vpop.permute.xlu0 %53
    %vm55 = vcmask 179200
    %s56 = scalar_lea.vmem [#allocation0], 56
    %57 = vst.msk [vmem:[%s56] sm:$0x1] %vm55, %v54
    %vm58 = vcmask 1048480
    %s59 = scalar_lea.vmem [#allocation0], 48
    %60 = vst.msk [vmem:[%s59] sm:$0x1] %vm58, %v54
    %s61 = scalar_lea.vmem %s0, 7
    %v62 = vld [vmem:[%s61] sm:$0x1]
    %s63 = scalar_lea.vmem %s0, 7
    %v64 = vld [vmem:[%s63] sm:$0x1]
    %vm65 = vcmask 146432
    %v66 = vsel %vm65, %v64, %v62
    %67 = vrot.lane.b32.xlu0 %v66, 110
    %v68 = vpop.permute.xlu0 %67
    %vm69 = vcmask 130048
    %s70 = scalar_lea.vmem [#allocation0], 16
    %71 = vst.msk [vmem:[%s70] sm:$0x1] %vm69, %v68
    %vm72 = vcmask 1048432
    %s73 = scalar_lea.vmem [#allocation0], 8
    %74 = vst.msk [vmem:[%s73] sm:$0x1] %vm72, %v68
    %s75 = scalar_lea.vmem %s0, 22
    %v76 = vld [vmem:[%s75] sm:$0x1]
    %s77 = scalar_lea.vmem %s0, 22
    %v78 = vld [vmem:[%s77] sm:$0x1]
    %vm79 = vcmask 162816
    %v80 = vsel %vm79, %v78, %v76
    %81 = vrot.lane.b32.xlu0 %v80, 108
    %v82 = vpop.permute.xlu0 %81
    %vm83 = vcmask 113664
    %s84 = scalar_lea.vmem [#allocation0], 48
    %85 = vst.msk [vmem:[%s84] sm:$0x1] %vm83, %v82
    %vm86 = vcmask 1048416
    %s87 = scalar_lea.vmem [#allocation0], 40
    %88 = vst.msk [vmem:[%s87] sm:$0x1] %vm86, %v82
    %s89 = scalar_lea.vmem %s0, 3
    %v90 = vld [vmem:[%s89] sm:$0x1]
    %s91 = scalar_lea.vmem %s0, 3
    %v92 = vld [vmem:[%s91] sm:$0x1]
    %vm93 = vcmask 211968
    %v94 = vsel %vm93, %v92, %v90
    %95 = vrot.lane.b32.xlu0 %v94, 102
    %v96 = vpop.permute.xlu0 %95
    %vm97 = vcmask 64512
    %s98 = scalar_lea.vmem [#allocation0], 8
    %99 = vst.msk [vmem:[%s98] sm:$0x1] %vm97, %v96
    %vm100 = vcmask 1048368
    %101 = vst.msk [vmem:[#allocation0] sm:$0x1] %vm100, %v96
    %s102 = scalar_lea.vmem %s0, 18
    %v103 = vld [vmem:[%s102] sm:$0x1]
    %s104 = scalar_lea.vmem %s0, 18
    %v105 = vld [vmem:[%s104] sm:$0x1]
    %vm106 = vcmask 228352
    %v107 = vsel %vm106, %v105, %v103
    %108 = vrot.lane.b32.xlu0 %v107, 100
    %v109 = vpop.permute.xlu0 %108
    %vm110 = vcmask 48128
    %s111 = scalar_lea.vmem [#allocation0], 40
    %112 = vst.msk [vmem:[%s111] sm:$0x1] %vm110, %v109
    %vm113 = vcmask 1048352
    %s114 = scalar_lea.vmem [#allocation0], 32
    %115 = vst.msk [vmem:[%s114] sm:$0x1] %vm113, %v109
    %s116 = scalar_lea.vmem %s0, 14
    %v117 = vld [vmem:[%s116] sm:$0x1]
    %118 = vrot.lane.b32.xlu0 %v117, 92
    %v119 = vpop.permute.xlu0 %118
    %vm120 = vcmask 1031904
    %s121 = scalar_lea.vmem [#allocation0], 24
    %122 = vst.msk [vmem:[%s121] sm:$0x1] %vm120, %v119
    %s123 = scalar_lea.vmem %s0, 29
    %v124 = vld [vmem:[%s123] sm:$0x1]
    %125 = vrot.lane.b32.xlu0 %v124, 90
    %v126 = vpop.permute.xlu0 %125
    %vm127 = vcmask 1015504
    %s128 = scalar_lea.vmem [#allocation0], 56
    %129 = vst.msk [vmem:[%s128] sm:$0x1] %vm127, %v126
    %s130 = scalar_lea.vmem %s0, 10
    %v131 = vld [vmem:[%s130] sm:$0x1]
    %132 = vrot.lane.b32.xlu0 %v131, 84
    %v133 = vpop.permute.xlu0 %132
    %vm134 = vcmask 966304
    %s135 = scalar_lea.vmem [#allocation0], 16
    %136 = vst.msk [vmem:[%s135] sm:$0x1] %vm134, %v133
    %s137 = scalar_lea.vmem %s0, 25
    %v138 = vld [vmem:[%s137] sm:$0x1]
    %139 = vrot.lane.b32.xlu0 %v138, 82
    %v140 = vpop.permute.xlu0 %139
    %vm141 = vcmask 949904
    %s142 = scalar_lea.vmem [#allocation0], 48
    %143 = vst.msk [vmem:[%s142] sm:$0x1] %vm141, %v140
    %s144 = scalar_lea.vmem %s0, 6
    %v145 = vld [vmem:[%s144] sm:$0x1]
    %146 = vrot.lane.b32.xlu0 %v145, 76
    %v147 = vpop.permute.xlu0 %146
    %vm148 = vcmask 900704
    %s149 = scalar_lea.vmem [#allocation0], 8
    %150 = vst.msk [vmem:[%s149] sm:$0x1] %vm148, %v147
    %s151 = scalar_lea.vmem %s0, 21
    %v152 = vld [vmem:[%s151] sm:$0x1]
    %153 = vrot.lane.b32.xlu0 %v152, 74
    %v154 = vpop.permute.xlu0 %153
    %vm155 = vcmask 884304
    %s156 = scalar_lea.vmem [#allocation0], 40
    %157 = vst.msk [vmem:[%s156] sm:$0x1] %vm155, %v154
    %s158 = scalar_lea.vmem %s0, 2
    %v159 = vld [vmem:[%s158] sm:$0x1]
    %160 = vrot.lane.b32.xlu0 %v159, 68
    %v161 = vpop.permute.xlu0 %160
    %vm162 = vcmask 835104
    %163 = vst.msk [vmem:[#allocation0] sm:$0x1] %vm162, %v161
    %s164 = scalar_lea.vmem %s0, 17
    %v165 = vld [vmem:[%s164] sm:$0x1]
    %166 = vrot.lane.b32.xlu0 %v165, 66
    %v167 = vpop.permute.xlu0 %166
    %vm168 = vcmask 818704
    %s169 = scalar_lea.vmem [#allocation0], 32
    %170 = vst.msk [vmem:[%s169] sm:$0x1] %vm168, %v167
    %s171 = scalar_lea.vmem %s0, 13
    %v172 = vld [vmem:[%s171] sm:$0x1]
    %173 = vrot.lane.b32.xlu0 %v172, 58
    %v174 = vpop.permute.xlu0 %173
    %vm175 = vcmask 753104
    %s176 = scalar_lea.vmem [#allocation0], 24
    %177 = vst.msk [vmem:[%s176] sm:$0x1] %vm175, %v174
    %s178 = scalar_lea.vmem %s0, 28
    %v179 = vld [vmem:[%s178] sm:$0x1]
    %180 = vrot.lane.b32.xlu0 %v179, 56
    %v181 = vpop.permute.xlu0 %180
    %vm182 = vcmask 736704
    %s183 = scalar_lea.vmem [#allocation0], 56
    %184 = vst.msk [vmem:[%s183] sm:$0x1] %vm182, %v181
    %s185 = scalar_lea.vmem %s0, 9
    %v186 = vld [vmem:[%s185] sm:$0x1]
    %187 = vrot.lane.b32.xlu0 %v186, 50
    %v188 = vpop.permute.xlu0 %187
    %vm189 = vcmask 687504
    %s190 = scalar_lea.vmem [#allocation0], 16
    %191 = vst.msk [vmem:[%s190] sm:$0x1] %vm189, %v188
    %s192 = scalar_lea.vmem %s0, 24
    %v193 = vld [vmem:[%s192] sm:$0x1]
    %194 = vrot.lane.b32.xlu0 %v193, 48
    %v195 = vpop.permute.xlu0 %194
    %vm196 = vcmask 671104
    %s197 = scalar_lea.vmem [#allocation0], 48
    %198 = vst.msk [vmem:[%s197] sm:$0x1] %vm196, %v195
    %s199 = scalar_lea.vmem %s0, 5
    %v200 = vld [vmem:[%s199] sm:$0x1]
    %201 = vrot.lane.b32.xlu0 %v200, 42
    %v202 = vpop.permute.xlu0 %201
    %vm203 = vcmask 621904
    %s204 = scalar_lea.vmem [#allocation0], 8
    %205 = vst.msk [vmem:[%s204] sm:$0x1] %vm203, %v202
    %s206 = scalar_lea.vmem %s0, 20
    %v207 = vld [vmem:[%s206] sm:$0x1]
    %208 = vrot.lane.b32.xlu0 %v207, 40
    %v209 = vpop.permute.xlu0 %208
    %vm210 = vcmask 605504
    %s211 = scalar_lea.vmem [#allocation0], 40
    %212 = vst.msk [vmem:[%s211] sm:$0x1] %vm210, %v209
    %s213 = scalar_lea.vmem %s0, 1
    %v214 = vld [vmem:[%s213] sm:$0x1]
    %215 = vrot.lane.b32.xlu0 %v214, 34
    %v216 = vpop.permute.xlu0 %215
    %vm217 = vcmask 556304
    %218 = vst.msk [vmem:[#allocation0] sm:$0x1] %vm217, %v216
    %s219 = scalar_lea.vmem %s0, 16
    %v220 = vld [vmem:[%s219] sm:$0x1]
    %221 = vrot.lane.b32.xlu0 %v220, 32
    %v222 = vpop.permute.xlu0 %221
    %vm223 = vcmask 539904
    %s224 = scalar_lea.vmem [#allocation0], 32
    %225 = vst.msk [vmem:[%s224] sm:$0x1] %vm223, %v222
    %s226 = scalar_lea.vmem %s0, 31
    %v227 = vld [vmem:[%s226] sm:$0x1]
    %228 = vrot.lane.b32.xlu0 %v227, 30
    %v229 = vpop.permute.xlu0 %228
    %vm230 = vcmask 523504
    %s231 = scalar_lea.vmem [#allocation0], 64
    %232 = vst.msk [vmem:[%s231] sm:$0x1] %vm230, %v229
    %s233 = scalar_lea.vmem %s0, 12
    %v234 = vld [vmem:[%s233] sm:$0x1]
    %235 = vrot.lane.b32.xlu0 %v234, 24
    %v236 = vpop.permute.xlu0 %235
    %vm237 = vcmask 474304
    %s238 = scalar_lea.vmem [#allocation0], 24
    %239 = vst.msk [vmem:[%s238] sm:$0x1] %vm237, %v236
    %s240 = scalar_lea.vmem %s0, 27
    %v241 = vld [vmem:[%s240] sm:$0x1]
    %242 = vrot.lane.b32.xlu0 %v241, 22
    %v243 = vpop.permute.xlu0 %242
    %vm244 = vcmask 457904
    %s245 = scalar_lea.vmem [#allocation0], 56
    %246 = vst.msk [vmem:[%s245] sm:$0x1] %vm244, %v243
    %s247 = scalar_lea.vmem %s0, 8
    %v248 = vld [vmem:[%s247] sm:$0x1]
    %249 = vrot.lane.b32.xlu0 %v248, 16
    %v250 = vpop.permute.xlu0 %249
    %vm251 = vcmask 408704
    %s252 = scalar_lea.vmem [#allocation0], 16
    %253 = vst.msk [vmem:[%s252] sm:$0x1] %vm251, %v250
    %s254 = scalar_lea.vmem %s0, 23
    %v255 = vld [vmem:[%s254] sm:$0x1]
    %256 = vrot.lane.b32.xlu0 %v255, 14
    %v257 = vpop.permute.xlu0 %256
    %vm258 = vcmask 392304
    %s259 = scalar_lea.vmem [#allocation0], 48
    %260 = vst.msk [vmem:[%s259] sm:$0x1] %vm258, %v257
    %s261 = scalar_lea.vmem %s0, 4
    %v262 = vld [vmem:[%s261] sm:$0x1]
    %263 = vrot.lane.b32.xlu0 %v262, 8
    %v264 = vpop.permute.xlu0 %263
    %vm265 = vcmask 343104
    %s266 = scalar_lea.vmem [#allocation0], 8
    %267 = vst.msk [vmem:[%s266] sm:$0x1] %vm265, %v264
    %s268 = scalar_lea.vmem %s0, 19
    %v269 = vld [vmem:[%s268] sm:$0x1]
    %270 = vrot.lane.b32.xlu0 %v269, 6
    %v271 = vpop.permute.xlu0 %270
    %vm272 = vcmask 326704
    %s273 = scalar_lea.vmem [#allocation0], 40
    %274 = vst.msk [vmem:[%s273] sm:$0x1] %vm272, %v271
    %s276 = sshllo.u32 0, 1
    %v278 = vld [vmem:[#allocation0] sm:%s276]
    %s279 = sshllo.u32 0, 1
    %280 = vst [vmem:[%s1] sm:%s279] %v278
    %s281 = scalar_lea.vmem [#allocation0], 8
    %v282 = vld [vmem:[%s281] sm:%s276]
    %s283 = sshllo.u32 0, 1
    %s284 = scalar_lea.vmem %s1, 1
    %285 = vst [vmem:[%s284] sm:%s283] %v282
    %s286 = scalar_lea.vmem [#allocation0], 16
    %v287 = vld [vmem:[%s286] sm:%s276]
    %s288 = sshllo.u32 0, 1
    %s289 = smul.addr 1, 2
    %s290 = scalar_lea.vmem %s1, %s289
    %291 = vst [vmem:[%s290] sm:%s288] %v287
    %s292 = scalar_lea.vmem [#allocation0], 24
    %v293 = vld [vmem:[%s292] sm:%s276]
    %s294 = sshllo.u32 0, 1
    %s295 = smul.addr 1, 3
    %s296 = scalar_lea.vmem %s1, %s295
    %297 = vst [vmem:[%s296] sm:%s294] %v293
    %s298 = scalar_lea.vmem [#allocation0], 32
    %v299 = vld [vmem:[%s298] sm:%s276]
    %s300 = sshllo.u32 0, 1
    %s301 = smul.addr 1, 4
    %s302 = scalar_lea.vmem %s1, %s301
    %303 = vst [vmem:[%s302] sm:%s300] %v299
    %s304 = scalar_lea.vmem [#allocation0], 40
    %v305 = vld [vmem:[%s304] sm:%s276]
    %s306 = sshllo.u32 0, 1
    %s307 = smul.addr 1, 5
    %s308 = scalar_lea.vmem %s1, %s307
    %309 = vst [vmem:[%s308] sm:%s306] %v305
    %s310 = scalar_lea.vmem [#allocation0], 48
    %v311 = vld [vmem:[%s310] sm:%s276]
    %s312 = sshllo.u32 0, 1
    %s313 = smul.addr 1, 6
    %s314 = scalar_lea.vmem %s1, %s313
    %315 = vst [vmem:[%s314] sm:%s312] %v311
    %s316 = scalar_lea.vmem [#allocation0], 56
    %v317 = vld [vmem:[%s316] sm:%s276]
    %s318 = sshllo.u32 0, 1
    %s319 = smul.addr 1, 7
    %s320 = scalar_lea.vmem %s1, %s319
    %321 = vst [vmem:[%s320] sm:%s318] %v317
    %s322 = scalar_lea.vmem [#allocation0], 64
    %v323 = vld [vmem:[%s322] sm:%s276]
    %s324 = sshllo.u32 0, 1
    %s325 = smul.addr 1, 8
    %s326 = scalar_lea.vmem %s1, %s325
    %327 = vst [vmem:[%s326] sm:%s324] %v323

// kernel: res_block_generator.2
$region0: #{res_block_generator.2}
  #allocation0 [shape = 'u32[]', space=smem, size = 0x4, offset = 0x4, fixed_abs, tag = 'smem constant byte address 0x4 - core index']
  #allocation1 [shape = 'u32[144,128]{1,0:T(1,128)}', space=vmem, size = 0x12000, scoped, tag = 'internal scratch']
  %s0 = inlined_call_operand.vmem [shape: f32[2,4,1190], index: 0, kind: input, shape index: {}]
  %s1 = inlined_call_operand.vmem [shape: f32[2,4,1], index: 1, kind: input, shape index: {}]
  %s2 = inlined_call_operand.vmem [shape: f32[2,4,1], index: 2, kind: input, shape index: {}]
  %s3 = inlined_call_operand.vmem [shape: f32[1,1190], index: 3, kind: input, shape index: {}]
  %s4 = inlined_call_operand.vmem [shape: f32[1,1088], index: 4, kind: input, shape index: {}]
  %s5 = inlined_call_operand.vmem [shape: bf16[8,36], index: 5, kind: input, shape index: {}]
  %s6 = inlined_call_operand.vmem [shape: f32[8,1], index: 6, kind: input, shape index: {}]
  %s7 = inlined_call_operand.vmem [shape: f32[2,8,1088], index: 7, kind: output, shape index: {0}]
  %s8 = inlined_call_operand.vmem [shape: f32[2,8,2], index: 8, kind: output, shape index: {1}]
  %9 = xla_tuple %s7, %s8
  %s10 = sld [smem:[#allocation0]]
  $region69: #{res_block_generator.2} parent=0
    _
  %s12 = ssub.s32 1, %s10
  %s13 = scalar_select 0, %s12, %s10
  loop: start=0, step=1, limit=4
  $region2: #{res_block_generator.2} parent=0 // loop_pre_header
    _
  $region3: #{res_block_generator.2} parent=0 // loop_header
    %s15 = sphi 0, %s19
    %p16 = scmp.ge.s32.totalorder %s15, 4
    %s25 = sphi 0, %s27
    %s28 = sphi 0, %s25
    %s29 = sphi 0, %s28
    %s45 = sphi 0, %s29
    %s51 = sphi 0, %s53
    %s54 = sphi 0, %s51
    %s55 = sphi 0, %s54
    %s71 = sphi 0, %s55
    %s77 = sphi 0, %s79
    %s80 = sphi 0, %s77
    %s81 = sphi 0, %s80
    %s97 = sphi 0, %s81
    %s101 = sphi 0, %s101
    %s103 = sphi 0, %s101
    %s104 = sphi 0, %s103
    %s118 = sphi 0, %s104
    %s122 = sphi 0, %s122
    %s124 = sphi 0, %s122
    %s125 = sphi 0, %s124
    %s139 = sphi 0, %s125
    %s143 = sphi 0, %s143
    %s145 = sphi 0, %s143
    %s146 = sphi 0, %s145
    %s160 = sphi 0, %s146
    %s164 = sphi 0, %s164
    %s166 = sphi 0, %s164
    %s167 = sphi 0, %s166
    %s181 = sphi 0, %s167
    %s187 = sphi 0, %s189
    %s190 = sphi 0, %s187
    %s191 = sphi 0, %s190
    %s207 = sphi 0, %s191
    %s213 = sphi 0, %s215
    %s216 = sphi 0, %s213
    %s217 = sphi 0, %s216
    %s233 = sphi 0, %s217
  $region4: #{res_block_generator.2} parent=0 // loop_header_branch
    %18 = sbr.rel (%p16) target = $region8
  $region5: #{res_block_generator.2} parent=0 // loop_body
    %s20 = ssub.s32 %s15, 1
    %s21 = ssub.s32 %s15, 2
    %s22 = sadd.s32 %s15, 1
    %s23 = ssub.s32 %s15, %s22
    %p24 = scmp.eq.s32.totalorder %s23, 0
    %s26 = sadd.s32 %s25, 1
    %s27 = scalar_select %p24, %s25, %s26
    %p30 = pneg %p24
    %p31 = scmp.eq.s32.totalorder %s15, 1
    %p32 = por %p30, %p31
    %p33 = scmp.ne.s32.totalorder %s25, %s28
    %p34 = scmp.eq.s32.totalorder %s15, 0
    %p35 = por %p33, %p34
    %p36 = scmp.ne.s32.totalorder %s25, %s28
    %p37 = scmp.eq.s32.totalorder %s20, 1
    %p38 = por %p36, %p37
    %p39 = scmp.ne.s32.totalorder %s28, %s29
    %p40 = scmp.eq.s32.totalorder %s20, 0
    %p41 = por %p39, %p40
    %p42 = scmp.ne.s32.totalorder %s28, %s29
    %p43 = scmp.eq.s32.totalorder %s21, 1
    %p44 = por %p42, %p43
    %p46 = scmp.ne.s32.totalorder %s29, %s45
    %p47 = scmp.eq.s32.totalorder %s21, 0
    %p48 = por %p46, %p47
    %s49 = ssub.s32 %s15, %s22
    %p50 = scmp.eq.s32.totalorder %s49, 0
    %s52 = sadd.s32 %s51, 1
    %s53 = scalar_select %p50, %s51, %s52
    %p56 = pneg %p50
    %p57 = scmp.eq.s32.totalorder %s15, 1
    %p58 = por %p56, %p57
    %p59 = scmp.ne.s32.totalorder %s51, %s54
    %p60 = scmp.eq.s32.totalorder %s15, 0
    %p61 = por %p59, %p60
    %p62 = scmp.ne.s32.totalorder %s51, %s54
    %p63 = scmp.eq.s32.totalorder %s20, 1
    %p64 = por %p62, %p63
    %p65 = scmp.ne.s32.totalorder %s54, %s55
    %p66 = scmp.eq.s32.totalorder %s20, 0
    %p67 = por %p65, %p66
    %p68 = scmp.ne.s32.totalorder %s54, %s55
    %p69 = scmp.eq.s32.totalorder %s21, 1
    %p70 = por %p68, %p69
    %p72 = scmp.ne.s32.totalorder %s55, %s71
    %p73 = scmp.eq.s32.totalorder %s21, 0
    %p74 = por %p72, %p73
    %s75 = ssub.s32 %s15, %s22
    %p76 = scmp.eq.s32.totalorder %s75, 0
    %s78 = sadd.s32 %s77, 1
    %s79 = scalar_select %p76, %s77, %s78
    %p82 = pneg %p76
    %p83 = scmp.eq.s32.totalorder %s15, 1
    %p84 = por %p82, %p83
    %p85 = scmp.ne.s32.totalorder %s77, %s80
    %p86 = scmp.eq.s32.totalorder %s15, 0
    %p87 = por %p85, %p86
    %p88 = scmp.ne.s32.totalorder %s77, %s80
    %p89 = scmp.eq.s32.totalorder %s20, 1
    %p90 = por %p88, %p89
    %p91 = scmp.ne.s32.totalorder %s80, %s81
    %p92 = scmp.eq.s32.totalorder %s20, 0
    %p93 = por %p91, %p92
    %p94 = scmp.ne.s32.totalorder %s80, %s81
    %p95 = scmp.eq.s32.totalorder %s21, 1
    %p96 = por %p94, %p95
    %p98 = scmp.ne.s32.totalorder %s81, %s97
    %p99 = scmp.eq.s32.totalorder %s21, 0
    %p100 = por %p98, %p99
    %s102 = sadd.s32 %s101, 1
    %p105 = scmp.eq.s32.totalorder %s15, 1
    %p106 = scmp.ne.s32.totalorder %s101, %s103
    %p107 = scmp.eq.s32.totalorder %s15, 0
    %p108 = por %p106, %p107
    %p109 = scmp.ne.s32.totalorder %s101, %s103
    %p110 = scmp.eq.s32.totalorder %s20, 1
    %p111 = por %p109, %p110
    %p112 = scmp.ne.s32.totalorder %s103, %s104
    %p113 = scmp.eq.s32.totalorder %s20, 0
    %p114 = por %p112, %p113
    %p115 = scmp.ne.s32.totalorder %s103, %s104
    %p116 = scmp.eq.s32.totalorder %s21, 1
    %p117 = por %p115, %p116
    %p119 = scmp.ne.s32.totalorder %s104, %s118
    %p120 = scmp.eq.s32.totalorder %s21, 0
    %p121 = por %p119, %p120
    %s123 = sadd.s32 %s122, 1
    %p126 = scmp.eq.s32.totalorder %s15, 1
    %p127 = scmp.ne.s32.totalorder %s122, %s124
    %p128 = scmp.eq.s32.totalorder %s15, 0
    %p129 = por %p127, %p128
    %p130 = scmp.ne.s32.totalorder %s122, %s124
    %p131 = scmp.eq.s32.totalorder %s20, 1
    %p132 = por %p130, %p131
    %p133 = scmp.ne.s32.totalorder %s124, %s125
    %p134 = scmp.eq.s32.totalorder %s20, 0
    %p135 = por %p133, %p134
    %p136 = scmp.ne.s32.totalorder %s124, %s125
    %p137 = scmp.eq.s32.totalorder %s21, 1
    %p138 = por %p136, %p137
    %p140 = scmp.ne.s32.totalorder %s125, %s139
    %p141 = scmp.eq.s32.totalorder %s21, 0
    %p142 = por %p140, %p141
    %s144 = sadd.s32 %s143, 1
    %p147 = scmp.eq.s32.totalorder %s15, 1
    %p148 = scmp.ne.s32.totalorder %s143, %s145
    %p149 = scmp.eq.s32.totalorder %s15, 0
    %p150 = por %p148, %p149
    %p151 = scmp.ne.s32.totalorder %s143, %s145
    %p152 = scmp.eq.s32.totalorder %s20, 1
    %p153 = por %p151, %p152
    %p154 = scmp.ne.s32.totalorder %s145, %s146
    %p155 = scmp.eq.s32.totalorder %s20, 0
    %p156 = por %p154, %p155
    %p157 = scmp.ne.s32.totalorder %s145, %s146
    %p158 = scmp.eq.s32.totalorder %s21, 1
    %p159 = por %p157, %p158
    %p161 = scmp.ne.s32.totalorder %s146, %s160
    %p162 = scmp.eq.s32.totalorder %s21, 0
    %p163 = por %p161, %p162
    %s165 = sadd.s32 %s164, 1
    %p168 = scmp.eq.s32.totalorder %s15, 1
    %p169 = scmp.ne.s32.totalorder %s164, %s166
    %p170 = scmp.eq.s32.totalorder %s15, 0
    %p171 = por %p169, %p170
    %p172 = scmp.ne.s32.totalorder %s164, %s166
    %p173 = scmp.eq.s32.totalorder %s20, 1
    %p174 = por %p172, %p173
    %p175 = scmp.ne.s32.totalorder %s166, %s167
    %p176 = scmp.eq.s32.totalorder %s20, 0
    %p177 = por %p175, %p176
    %p178 = scmp.ne.s32.totalorder %s166, %s167
    %p179 = scmp.eq.s32.totalorder %s21, 1
    %p180 = por %p178, %p179
    %p182 = scmp.ne.s32.totalorder %s167, %s181
    %p183 = scmp.eq.s32.totalorder %s21, 0
    %p184 = por %p182, %p183
    %s185 = ssub.s32 %s15, %s22
    %p186 = scmp.eq.s32.totalorder %s185, 0
    %s188 = sadd.s32 %s187, 1
    %s189 = scalar_select %p186, %s187, %s188
    %p192 = pneg %p186
    %p193 = scmp.eq.s32.totalorder %s15, 1
    %p194 = por %p192, %p193
    %p195 = scmp.ne.s32.totalorder %s187, %s190
    %p196 = scmp.eq.s32.totalorder %s15, 0
    %p197 = por %p195, %p196
    %p198 = scmp.ne.s32.totalorder %s187, %s190
    %p199 = scmp.eq.s32.totalorder %s20, 1
    %p200 = por %p198, %p199
    %p201 = scmp.ne.s32.totalorder %s190, %s191
    %p202 = scmp.eq.s32.totalorder %s20, 0
    %p203 = por %p201, %p202
    %p204 = scmp.ne.s32.totalorder %s190, %s191
    %p205 = scmp.eq.s32.totalorder %s21, 1
    %p206 = por %p204, %p205
    %p208 = scmp.ne.s32.totalorder %s191, %s207
    %p209 = scmp.eq.s32.totalorder %s21, 0
    %p210 = por %p208, %p209
    %s211 = ssub.s32 %s15, %s22
    %p212 = scmp.eq.s32.totalorder %s211, 0
    %s214 = sadd.s32 %s213, 1
    %s215 = scalar_select %p212, %s213, %s214
    %p218 = pneg %p212
    %p219 = scmp.eq.s32.totalorder %s15, 1
    %p220 = por %p218, %p219
    %p221 = scmp.ne.s32.totalorder %s213, %s216
    %p222 = scmp.eq.s32.totalorder %s15, 0
    %p223 = por %p221, %p222
    %p224 = scmp.ne.s32.totalorder %s213, %s216
    %p225 = scmp.eq.s32.totalorder %s20, 1
    %p226 = por %p224, %p225
    %p227 = scmp.ne.s32.totalorder %s216, %s217
    %p228 = scmp.eq.s32.totalorder %s20, 0
    %p229 = por %p227, %p228
    %p230 = scmp.ne.s32.totalorder %s216, %s217
    %p231 = scmp.eq.s32.totalorder %s21, 1
    %p232 = por %p230, %p231
    %p234 = scmp.ne.s32.totalorder %s217, %s233
    %p235 = scmp.eq.s32.totalorder %s21, 0
    %p236 = por %p234, %p235
    %p237 = scmp.le.s32.totalorder 1, %s15
    %p238 = scmp.lt.s32.totalorder %s15, 3
    %p239 = pnand %p237, %p238
    %p240 = pneg %p239
    // Predicated region
    $region9: #{res_block_generator.2} parent=5 // pred_check
      _
    $region10: #{res_block_generator.2} parent=5 // pred_check_branch
      %242 = sbr.rel (%p239) target = $region12
    $region11: #{res_block_generator.2} parent=5 // pred_region
      %s243 = ssub.s32 %s15, 1
      // Predicated region
      $region13: #{res_block_generator.2} parent=11 // pred_check
        %p244 = pneg %p114
      $region14: #{res_block_generator.2} parent=11 // pred_check_branch
        %246 = sbr.rel (%p244) target = $region16
      $region15: #{res_block_generator.2} parent=11 // pred_region
        _
      $region16: #{res_block_generator.2} parent=11 // pred_fallthru
        _
      // Predicated region
      $region17: #{res_block_generator.2} parent=11 // pred_check
        %p247 = pneg %p135
      $region18: #{res_block_generator.2} parent=11 // pred_check_branch
        %249 = sbr.rel (%p247) target = $region20
      $region19: #{res_block_generator.2} parent=11 // pred_region
        _
      $region20: #{res_block_generator.2} parent=11 // pred_fallthru
        _
      // Predicated region
      $region21: #{res_block_generator.2} parent=11 // pred_check
        %p250 = pneg %p156
      $region22: #{res_block_generator.2} parent=11 // pred_check_branch
        %252 = sbr.rel (%p250) target = $region24
      $region23: #{res_block_generator.2} parent=11 // pred_region
        _
      $region24: #{res_block_generator.2} parent=11 // pred_fallthru
        _
      // Predicated region
      $region25: #{res_block_generator.2} parent=11 // pred_check
        %p253 = pneg %p177
      $region26: #{res_block_generator.2} parent=11 // pred_check_branch
        %255 = sbr.rel (%p253) target = $region28
      $region27: #{res_block_generator.2} parent=11 // pred_region
        _
      $region28: #{res_block_generator.2} parent=11 // pred_fallthru
        _
    $region12: #{res_block_generator.2} parent=5 // pred_fallthru
      _
    %p256 = scmp.lt.s32.totalorder %s15, 2
    // Predicated region
    $region29: #{res_block_generator.2} parent=5 // pred_check
      %p257 = pneg %p256
    $region30: #{res_block_generator.2} parent=5 // pred_check_branch
      %259 = sbr.rel (%p257) target = $region32
    $region31: #{res_block_generator.2} parent=5 // pred_region
      // Predicated region
      $region33: #{res_block_generator.2} parent=31 // pred_check
        %p260 = pneg %p35
      $region34: #{res_block_generator.2} parent=31 // pred_check_branch
        %262 = sbr.rel (%p260) target = $region36
      $region35: #{res_block_generator.2} parent=31 // pred_region
        %p263 = scmp.lt.s32.totalorder %s15, 1
        %s264 = scalar_select %p263, %s15, 1
        %s265 = smul.addr %s264, 10
        %s266 = smul.addr %s265, 4
        %s267 = scalar_lea.vmem %s0, %s266
      $region36: #{res_block_generator.2} parent=31 // pred_fallthru
        _
      // Predicated region
      $region37: #{res_block_generator.2} parent=31 // pred_check
        %p268 = pneg %p61
      $region38: #{res_block_generator.2} parent=31 // pred_check_branch
        %270 = sbr.rel (%p268) target = $region40
      $region39: #{res_block_generator.2} parent=31 // pred_region
        %p271 = scmp.lt.s32.totalorder %s15, 1
        %s272 = scalar_select %p271, %s15, 1
        %s273 = smul.addr %s272, 4
        %s274 = scalar_lea.vmem %s1, %s273
      $region40: #{res_block_generator.2} parent=31 // pred_fallthru
        _
      // Predicated region
      $region41: #{res_block_generator.2} parent=31 // pred_check
        %p275 = pneg %p87
      $region42: #{res_block_generator.2} parent=31 // pred_check_branch
        %277 = sbr.rel (%p275) target = $region44
      $region43: #{res_block_generator.2} parent=31 // pred_region
        %p278 = scmp.lt.s32.totalorder %s15, 1
        %s279 = scalar_select %p278, %s15, 1
        %s280 = smul.addr %s279, 4
        %s281 = scalar_lea.vmem %s2, %s280
      $region44: #{res_block_generator.2} parent=31 // pred_fallthru
        _
    $region32: #{res_block_generator.2} parent=5 // pred_fallthru
      _
    %p282 = scmp.le.s32.totalorder 1, %s15
    %p283 = scmp.lt.s32.totalorder %s15, 3
    %p284 = pnand %p282, %p283
    %p285 = pneg %p284
    // Predicated region
    $region45: #{res_block_generator.2} parent=5 // pred_check
      _
    $region46: #{res_block_generator.2} parent=5 // pred_check_branch
      %287 = sbr.rel (%p284) target = $region48
    $region47: #{res_block_generator.2} parent=5 // pred_region
      %s288 = ssub.s32 %s15, 1
      %p289 = scmp.lt.s32.totalorder %s20, 1
      %s290 = scalar_select %p289, %s20, 1
      %s291 = smul.addr %s290, 10
      %s292 = smul.addr %s291, 4
      %s293 = scalar_lea.vmem %s0, %s292
      %p294 = pneg %p41
      %p295 = pneg %p38
      %p296 = scmp.lt.s32.totalorder %s20, 1
      %s297 = scalar_select %p296, %s20, 1
      %s298 = smul.addr %s297, 4
      %s299 = scalar_lea.vmem %s1, %s298
      %p300 = pneg %p67
      %p301 = pneg %p64
      %p302 = scmp.lt.s32.totalorder %s20, 1
      %s303 = scalar_select %p302, %s20, 1
      %s304 = smul.addr %s303, 4
      %s305 = scalar_lea.vmem %s2, %s304
      %p306 = pneg %p93
      %p307 = pneg %p90
      %p308 = pneg %p114
      %p309 = pneg %p111
      %p310 = pneg %p135
      %p311 = pneg %p132
      %p312 = pneg %p156
      %p313 = pneg %p153
      %p314 = pneg %p177
      %p315 = pneg %p174
      %p316 = pneg %p203
      %p317 = pneg %p200
      %p318 = scmp.lt.s32.totalorder %s20, 1
      %s319 = scalar_select %p318, %s20, 1
      %s320 = smul.addr %s319, 9
      %s321 = smul.addr %s320, 8
      %s322 = scalar_lea.vmem %s7, %s321
      %p323 = pneg %p229
      %p324 = pneg %p226
      %p325 = scmp.lt.s32.totalorder %s20, 1
      %s326 = scalar_select %p325, %s20, 1
      %s327 = smul.addr %s326, 8
      %s328 = scalar_lea.vmem %s8, %s327
      %p329 = scmp.lt.s32.totalorder %s20, 1
      %s330 = scalar_select %p329, %s20, 1
      %s331 = smul.addr %s330, 10
      %s332 = smul.addr %s331, 4
      %s333 = scalar_lea.vmem %s0, %s332
      %p334 = scmp.lt.s32.totalorder %s20, 1
      %s335 = scalar_select %p334, %s20, 1
      %s336 = smul.addr %s335, 4
      %s337 = scalar_lea.vmem %s1, %s336
      %p338 = scmp.lt.s32.totalorder %s20, 1
      %s339 = scalar_select %p338, %s20, 1
      %s340 = smul.addr %s339, 4
      %s341 = scalar_lea.vmem %s2, %s340
      %p342 = scmp.lt.s32.totalorder %s20, 1
      %s343 = scalar_select %p342, %s20, 1
      %s344 = smul.addr %s343, 9
      %s345 = smul.addr %s344, 8
      %s346 = scalar_lea.vmem %s7, %s345
      %p347 = scmp.lt.s32.totalorder %s20, 1
      %s348 = scalar_select %p347, %s20, 1
      %s349 = smul.addr %s348, 8
      %s350 = scalar_lea.vmem %s8, %s349
      %v352 = vld [vmem:[%s3] sm:$0xff]
      %v353 = vld [vmem:[%s3 + $0x8] sm:$0x3]
      %v354 = vld [vmem:[%s4] sm:$0xff]
      %v355 = vld [vmem:[%s4 + $0x8] sm:$0x1]
      %v356 = vld [vmem:[%s5] sm:$0xf]
      %v357 = vld [vmem:[%s6] sm:$0xff]
      %v358 = vld [vmem:[%s333] sm:$0xff]
      %v359 = vld [vmem:[%s333 + $0x8] sm:$0xff]
      %v360 = vld [vmem:[%s333 + $0x10] sm:$0xff]
      %v361 = vld [vmem:[%s333 + $0x18] sm:$0xff]
      %v362 = vld [vmem:[%s333 + $0x20] sm:$0xff]
      %v363 = vld [vmem:[%s337] sm:$0xf]
      %365 = vset.pattern.permute.xlu0 0
      %366 = vperm.xlu0 %365, %v363
      %v367 = vpop.permute.xlu0 %366
      %v374 = vcombine.high %v358, %v358
      %v375 = vcombine.high %v359, %v359
      %v376 = vcombine.high %v360, %v360
      %v377 = vcombine.high %v361, %v361
      %v378 = vcombine.high %v362, %v362
      %v384 = vmul.f32 %v367, %v358
      %v385 = vmul.f32 %v367, %v374
      %v386 = vmul.f32 %v367, %v359
      %v387 = vmul.f32 %v367, %v375
      %v388 = vmul.f32 %v367, %v360
      %v389 = vmul.f32 %v367, %v376
      %v390 = vmul.f32 %v367, %v361
      %v391 = vmul.f32 %v367, %v377
      %v392 = vmul.f32 %v367, %v362
      %v393 = vmul.f32 %v367, %v378
      %v394 = vld [vmem:[%s341] sm:$0xf]
      %396 = vset.pattern.permute.xlu0 0
      %397 = vperm.xlu0 %396, %v394
      %v398 = vpop.permute.xlu0 %397
      %v400 = vadd.f32 %v384, %v398
      %v401 = vadd.f32 %v385, %v398
      %v402 = vadd.f32 %v386, %v398
      %v403 = vadd.f32 %v387, %v398
      %v404 = vadd.f32 %v388, %v398
      %v405 = vadd.f32 %v389, %v398
      %v406 = vadd.f32 %v390, %v398
      %v407 = vadd.f32 %v391, %v398
      %v408 = vadd.f32 %v392, %v398
      %v409 = vadd.f32 %v393, %v398
      %v410 = vmax.f32 %v400, 0.0
      %v411 = vmax.f32 %v401, 0.0
      %v412 = vmax.f32 %v402, 0.0
      %v413 = vmax.f32 %v403, 0.0
      %v414 = vmax.f32 %v404, 0.0
      %v415 = vmax.f32 %v405, 0.0
      %v416 = vmax.f32 %v406, 0.0
      %v417 = vmax.f32 %v407, 0.0
      %v418 = vmax.f32 %v408, 0.0
      %v419 = vmax.f32 %v409, 0.0
      %v422 = vlaneseq
      %v423 = vshrl.u32 %v422, 7
      %v424 = vsub.s32 0, %v423
      %v425 = vrot.slane %v352, %v424
      %v426 = vlaneseq
      %v427 = vshrl.u32 %v426, 7
      %v428 = vsub.s32 1, %v427
      %v429 = vrot.slane %v352, %v428
      %v430 = vlaneseq
      %v431 = vshrl.u32 %v430, 7
      %v432 = vsub.s32 2, %v431
      %v433 = vrot.slane %v352, %v432
      %v434 = vlaneseq
      %v435 = vshrl.u32 %v434, 7
      %v436 = vsub.s32 3, %v435
      %v437 = vrot.slane %v352, %v436
      %v438 = vlaneseq
      %v439 = vshrl.u32 %v438, 7
      %v440 = vsub.s32 4, %v439
      %v441 = vrot.slane %v352, %v440
      %v442 = vlaneseq
      %v443 = vshrl.u32 %v442, 7
      %v444 = vsub.s32 5, %v443
      %v445 = vrot.slane %v352, %v444
      %v446 = vlaneseq
      %v447 = vshrl.u32 %v446, 7
      %v448 = vsub.s32 6, %v447
      %v449 = vrot.slane %v352, %v448
      %v450 = vlaneseq
      %v451 = vshrl.u32 %v450, 7
      %v452 = vsub.s32 7, %v451
      %v453 = vrot.slane %v352, %v452
      %v454 = vlaneseq
      %v455 = vshrl.u32 %v454, 7
      %v456 = vsub.s32 0, %v455
      %v457 = vrot.slane %v353, %v456
      %v458 = vlaneseq
      %v459 = vshrl.u32 %v458, 7
      %v460 = vsub.s32 1, %v459
      %v461 = vrot.slane %v353, %v460
      %v472 = vmul.f32 %v410, %v425
      %v473 = vmul.f32 %v411, %v429
      %v474 = vmul.f32 %v412, %v433
      %v475 = vmul.f32 %v413, %v437
      %v476 = vmul.f32 %v414, %v441
      %v477 = vmul.f32 %v415, %v445
      %v478 = vmul.f32 %v416, %v449
      %v479 = vmul.f32 %v417, %v453
      %v480 = vmul.f32 %v418, %v457
      %v481 = vmul.f32 %v419, %v461
      %v482 = vpack.c.bf16 %v472, %v472
      %v483 = vpack.c.bf16 %v473, %v473
      %v484 = vpack.c.bf16 %v474, %v474
      %v485 = vpack.c.bf16 %v475, %v475
      %v486 = vpack.c.bf16 %v476, %v476
      %v487 = vpack.c.bf16 %v477, %v477
      %v488 = vpack.c.bf16 %v478, %v478
      %v489 = vpack.c.bf16 %v479, %v479
      %v490 = vpack.c.bf16 %v480, %v480
      %v491 = vpack.c.bf16 %v481, %v481
      %v501 = vrot.slane %v482, 6
      %v502 = vrot.slane %v483, 6
      %v503 = vrot.slane %v484, 6
      %v504 = vrot.slane %v485, 6
      %v505 = vrot.slane %v486, 6
      %v506 = vrot.slane %v487, 6
      %v507 = vrot.slane %v488, 6
      %v508 = vrot.slane %v489, 6
      %v509 = vrot.slane %v490, 6
      %510 = vrot.lane.b32.xlu0 %v501, 127
      %v511 = vpop.permute.xlu0 %510
      %512 = vrot.lane.b32.xlu0 %v502, 127
      %v513 = vpop.permute.xlu0 %512
      %514 = vrot.lane.b32.xlu0 %v503, 127
      %v515 = vpop.permute.xlu0 %514
      %516 = vrot.lane.b32.xlu0 %v504, 127
      %v517 = vpop.permute.xlu0 %516
      %518 = vrot.lane.b32.xlu0 %v505, 127
      %v519 = vpop.permute.xlu0 %518
      %520 = vrot.lane.b32.xlu0 %v506, 127
      %v521 = vpop.permute.xlu0 %520
      %522 = vrot.lane.b32.xlu0 %v507, 127
      %v523 = vpop.permute.xlu0 %522
      %524 = vrot.lane.b32.xlu0 %v508, 127
      %v525 = vpop.permute.xlu0 %524
      %526 = vrot.lane.b32.xlu0 %v509, 127
      %v527 = vpop.permute.xlu0 %526
      %vm528 = vcmask 1039360
      %v529 = vsel %vm528, %v511, %v513
      %v530 = vsel %vm528, %v513, %v515
      %v531 = vsel %vm528, %v515, %v517
      %v532 = vsel %vm528, %v517, %v519
      %v533 = vsel %vm528, %v519, %v521
      %v534 = vsel %vm528, %v521, %v523
      %v535 = vsel %vm528, %v523, %v525
      %v536 = vsel %vm528, %v525, %v527
      %v537 = vrot.slane %v482, 4
      %v538 = vrot.slane %v483, 4
      %v539 = vrot.slane %v484, 4
      %v540 = vrot.slane %v485, 4
      %v541 = vrot.slane %v486, 4
      %v542 = vrot.slane %v487, 4
      %v543 = vrot.slane %v488, 4
      %v544 = vrot.slane %v489, 4
      %v545 = vrot.slane %v490, 4
      %546 = vrot.lane.b32.xlu0 %v537, 126
      %v547 = vpop.permute.xlu0 %546
      %548 = vrot.lane.b32.xlu0 %v538, 126
      %v549 = vpop.permute.xlu0 %548
      %550 = vrot.lane.b32.xlu0 %v539, 126
      %v551 = vpop.permute.xlu0 %550
      %552 = vrot.lane.b32.xlu0 %v540, 126
      %v553 = vpop.permute.xlu0 %552
      %554 = vrot.lane.b32.xlu0 %v541, 126
      %v555 = vpop.permute.xlu0 %554
      %556 = vrot.lane.b32.xlu0 %v542, 126
      %v557 = vpop.permute.xlu0 %556
      %558 = vrot.lane.b32.xlu0 %v543, 126
      %v559 = vpop.permute.xlu0 %558
      %560 = vrot.lane.b32.xlu0 %v544, 126
      %v561 = vpop.permute.xlu0 %560
      %562 = vrot.lane.b32.xlu0 %v545, 126
      %v563 = vpop.permute.xlu0 %562
      %vm564 = vcmask 1031168
      %v565 = vsel %vm564, %v547, %v549
      %v566 = vsel %vm564, %v549, %v551
      %v567 = vsel %vm564, %v551, %v553
      %v568 = vsel %vm564, %v553, %v555
      %v569 = vsel %vm564, %v555, %v557
      %v570 = vsel %vm564, %v557, %v559
      %v571 = vsel %vm564, %v559, %v561
      %v572 = vsel %vm564, %v561, %v563
      %v573 = vrot.slane %v482, 2
      %v574 = vrot.slane %v483, 2
      %v575 = vrot.slane %v484, 2
      %v576 = vrot.slane %v485, 2
      %v577 = vrot.slane %v486, 2
      %v578 = vrot.slane %v487, 2
      %v579 = vrot.slane %v488, 2
      %v580 = vrot.slane %v489, 2
      %v581 = vrot.slane %v490, 2
      %582 = vrot.lane.b32.xlu0 %v573, 94
      %v583 = vpop.permute.xlu0 %582
      %584 = vrot.lane.b32.xlu0 %v574, 94
      %v585 = vpop.permute.xlu0 %584
      %586 = vrot.lane.b32.xlu0 %v575, 94
      %v587 = vpop.permute.xlu0 %586
      %588 = vrot.lane.b32.xlu0 %v576, 94
      %v589 = vpop.permute.xlu0 %588
      %590 = vrot.lane.b32.xlu0 %v577, 94
      %v591 = vpop.permute.xlu0 %590
      %592 = vrot.lane.b32.xlu0 %v578, 94
      %v593 = vpop.permute.xlu0 %592
      %594 = vrot.lane.b32.xlu0 %v579, 94
      %v595 = vpop.permute.xlu0 %594
      %596 = vrot.lane.b32.xlu0 %v580, 94
      %v597 = vpop.permute.xlu0 %596
      %598 = vrot.lane.b32.xlu0 %v581, 94
      %v599 = vpop.permute.xlu0 %598
      %vm600 = vcmask 769024
      %v601 = vsel %vm600, %v583, %v585
      %v602 = vsel %vm600, %v585, %v587
      %v603 = vsel %vm600, %v587, %v589
      %v604 = vsel %vm600, %v589, %v591
      %v605 = vsel %vm600, %v591, %v593
      %v606 = vsel %vm600, %v593, %v595
      %v607 = vsel %vm600, %v595, %v597
      %v608 = vsel %vm600, %v597, %v599
      %609 = vrot.lane.b32.xlu0 %v482, 93
      %v610 = vpop.permute.xlu0 %609
      %611 = vrot.lane.b32.xlu0 %v483, 93
      %v612 = vpop.permute.xlu0 %611
      %613 = vrot.lane.b32.xlu0 %v484, 93
      %v614 = vpop.permute.xlu0 %613
      %615 = vrot.lane.b32.xlu0 %v485, 93
      %v616 = vpop.permute.xlu0 %615
      %617 = vrot.lane.b32.xlu0 %v486, 93
      %v618 = vpop.permute.xlu0 %617
      %619 = vrot.lane.b32.xlu0 %v487, 93
      %v620 = vpop.permute.xlu0 %619
      %621 = vrot.lane.b32.xlu0 %v488, 93
      %v622 = vpop.permute.xlu0 %621
      %623 = vrot.lane.b32.xlu0 %v489, 93
      %v624 = vpop.permute.xlu0 %623
      %625 = vrot.lane.b32.xlu0 %v490, 93
      %v626 = vpop.permute.xlu0 %625
      %vm627 = vcmask 760832
      %v628 = vsel %vm627, %v610, %v612
      %v629 = vsel %vm627, %v612, %v614
      %v630 = vsel %vm627, %v614, %v616
      %v631 = vsel %vm627, %v616, %v618
      %v632 = vsel %vm627, %v618, %v620
      %v633 = vsel %vm627, %v620, %v622
      %v634 = vsel %vm627, %v622, %v624
      %v635 = vsel %vm627, %v624, %v626
      %636 = vrot.lane.b32.xlu0 %v501, 92
      %v637 = vpop.permute.xlu0 %636
      %638 = vrot.lane.b32.xlu0 %v502, 92
      %v639 = vpop.permute.xlu0 %638
      %640 = vrot.lane.b32.xlu0 %v503, 92
      %v641 = vpop.permute.xlu0 %640
      %642 = vrot.lane.b32.xlu0 %v504, 92
      %v643 = vpop.permute.xlu0 %642
      %644 = vrot.lane.b32.xlu0 %v505, 92
      %v645 = vpop.permute.xlu0 %644
      %646 = vrot.lane.b32.xlu0 %v506, 92
      %v647 = vpop.permute.xlu0 %646
      %648 = vrot.lane.b32.xlu0 %v507, 92
      %v649 = vpop.permute.xlu0 %648
      %650 = vrot.lane.b32.xlu0 %v508, 92
      %v651 = vpop.permute.xlu0 %650
      %652 = vrot.lane.b32.xlu0 %v509, 92
      %v653 = vpop.permute.xlu0 %652
      %vm654 = vcmask 752640
      %v655 = vsel %vm654, %v637, %v639
      %v656 = vsel %vm654, %v639, %v641
      %v657 = vsel %vm654, %v641, %v643
      %v658 = vsel %vm654, %v643, %v645
      %v659 = vsel %vm654, %v645, %v647
      %v660 = vsel %vm654, %v647, %v649
      %v661 = vsel %vm654, %v649, %v651
      %v662 = vsel %vm654, %v651, %v653
      %v664 = vrot.slane %v491, 4
      %665 = vrot.lane.b32.xlu0 %v537, 60
      %v666 = vpop.permute.xlu0 %665
      %667 = vrot.lane.b32.xlu0 %v538, 60
      %v668 = vpop.permute.xlu0 %667
      %669 = vrot.lane.b32.xlu0 %v539, 60
      %v670 = vpop.permute.xlu0 %669
      %671 = vrot.lane.b32.xlu0 %v540, 60
      %v672 = vpop.permute.xlu0 %671
      %673 = vrot.lane.b32.xlu0 %v541, 60
      %v674 = vpop.permute.xlu0 %673
      %675 = vrot.lane.b32.xlu0 %v542, 60
      %v676 = vpop.permute.xlu0 %675
      %677 = vrot.lane.b32.xlu0 %v543, 60
      %v678 = vpop.permute.xlu0 %677
      %679 = vrot.lane.b32.xlu0 %v544, 60
      %v680 = vpop.permute.xlu0 %679
      %681 = vrot.lane.b32.xlu0 %v545, 60
      %v682 = vpop.permute.xlu0 %681
      %683 = vrot.lane.b32.xlu0 %v664, 60
      %v684 = vpop.permute.xlu0 %683
      %vm685 = vcmask 490496
      %v686 = vsel %vm685, %v666, %v668
      %v687 = vsel %vm685, %v668, %v670
      %v688 = vsel %vm685, %v670, %v672
      %v689 = vsel %vm685, %v672, %v674
      %v690 = vsel %vm685, %v674, %v676
      %v691 = vsel %vm685, %v676, %v678
      %v692 = vsel %vm685, %v678, %v680
      %v693 = vsel %vm685, %v680, %v682
      %v694 = vsel %vm685, %v682, %v684
      %v695 = vrot.slane %v491, 2
      %696 = vrot.lane.b32.xlu0 %v573, 59
      %v697 = vpop.permute.xlu0 %696
      %698 = vrot.lane.b32.xlu0 %v574, 59
      %v699 = vpop.permute.xlu0 %698
      %700 = vrot.lane.b32.xlu0 %v575, 59
      %v701 = vpop.permute.xlu0 %700
      %702 = vrot.lane.b32.xlu0 %v576, 59
      %v703 = vpop.permute.xlu0 %702
      %704 = vrot.lane.b32.xlu0 %v577, 59
      %v705 = vpop.permute.xlu0 %704
      %706 = vrot.lane.b32.xlu0 %v578, 59
      %v707 = vpop.permute.xlu0 %706
      %708 = vrot.lane.b32.xlu0 %v579, 59
      %v709 = vpop.permute.xlu0 %708
      %710 = vrot.lane.b32.xlu0 %v580, 59
      %v711 = vpop.permute.xlu0 %710
      %712 = vrot.lane.b32.xlu0 %v581, 59
      %v713 = vpop.permute.xlu0 %712
      %714 = vrot.lane.b32.xlu0 %v695, 59
      %v715 = vpop.permute.xlu0 %714
      %vm716 = vcmask 482304
      %v717 = vsel %vm716, %v697, %v699
      %v718 = vsel %vm716, %v699, %v701
      %v719 = vsel %vm716, %v701, %v703
      %v720 = vsel %vm716, %v703, %v705
      %v721 = vsel %vm716, %v705, %v707
      %v722 = vsel %vm716, %v707, %v709
      %v723 = vsel %vm716, %v709, %v711
      %v724 = vsel %vm716, %v711, %v713
      %v725 = vsel %vm716, %v713, %v715
      %726 = vrot.lane.b32.xlu0 %v482, 58
      %v727 = vpop.permute.xlu0 %726
      %728 = vrot.lane.b32.xlu0 %v483, 58
      %v729 = vpop.permute.xlu0 %728
      %730 = vrot.lane.b32.xlu0 %v484, 58
      %v731 = vpop.permute.xlu0 %730
      %732 = vrot.lane.b32.xlu0 %v485, 58
      %v733 = vpop.permute.xlu0 %732
      %734 = vrot.lane.b32.xlu0 %v486, 58
      %v735 = vpop.permute.xlu0 %734
      %736 = vrot.lane.b32.xlu0 %v487, 58
      %v737 = vpop.permute.xlu0 %736
      %738 = vrot.lane.b32.xlu0 %v488, 58
      %v739 = vpop.permute.xlu0 %738
      %740 = vrot.lane.b32.xlu0 %v489, 58
      %v741 = vpop.permute.xlu0 %740
      %742 = vrot.lane.b32.xlu0 %v490, 58
      %v743 = vpop.permute.xlu0 %742
      %744 = vrot.lane.b32.xlu0 %v491, 58
      %v745 = vpop.permute.xlu0 %744
      %vm746 = vcmask 474112
      %v747 = vsel %vm746, %v727, %v729
      %v748 = vsel %vm746, %v729, %v731
      %v749 = vsel %vm746, %v731, %v733
      %v750 = vsel %vm746, %v733, %v735
      %v751 = vsel %vm746, %v735, %v737
      %v752 = vsel %vm746, %v737, %v739
      %v753 = vsel %vm746, %v739, %v741
      %v754 = vsel %vm746, %v741, %v743
      %v755 = vsel %vm746, %v743, %v745
      %vm756 = vcmask 1041408
      %v759 = vsel %vm756, %v482, %v529
      %v762 = vsel %vm756, %v483, %v530
      %v765 = vsel %vm756, %v484, %v531
      %v768 = vsel %vm756, %v485, %v532
      %v771 = vsel %vm756, %v486, %v533
      %v774 = vsel %vm756, %v487, %v534
      %v777 = vsel %vm756, %v488, %v535
      %v780 = vsel %vm756, %v489, %v536
      %v783 = vsel %vm756, %v490, %v527
      %vm784 = vcmask 1043456
      %v786 = vsel %vm784, %v759, %v565
      %v788 = vsel %vm784, %v762, %v566
      %v790 = vsel %vm784, %v765, %v567
      %v792 = vsel %vm784, %v768, %v568
      %v794 = vsel %vm784, %v771, %v569
      %v796 = vsel %vm784, %v774, %v570
      %v798 = vsel %vm784, %v777, %v571
      %v800 = vsel %vm784, %v780, %v572
      %v802 = vsel %vm784, %v783, %v563
      %vm803 = vcmask 1045504
      %v805 = vsel %vm803, %v786, %v601
      %v808 = vsel %vm803, %v788, %v602
      %v811 = vsel %vm803, %v790, %v603
      %v814 = vsel %vm803, %v792, %v604
      %v817 = vsel %vm803, %v794, %v605
      %v820 = vsel %vm803, %v796, %v606
      %v823 = vsel %vm803, %v798, %v607
      %v826 = vsel %vm803, %v800, %v608
      %v829 = vsel %vm803, %v802, %v599
      %v833 = vsel %vm756, %v628, %v655
      %v836 = vsel %vm756, %v629, %v656
      %v839 = vsel %vm756, %v630, %v657
      %v842 = vsel %vm756, %v631, %v658
      %v845 = vsel %vm756, %v632, %v659
      %v848 = vsel %vm756, %v633, %v660
      %v851 = vsel %vm756, %v634, %v661
      %v854 = vsel %vm756, %v635, %v662
      %v857 = vsel %vm756, %v626, %v653
      %v859 = vsel %vm784, %v833, %v686
      %v861 = vsel %vm784, %v836, %v687
      %v863 = vsel %vm784, %v839, %v688
      %v865 = vsel %vm784, %v842, %v689
      %v867 = vsel %vm784, %v845, %v690
      %v869 = vsel %vm784, %v848, %v691
      %v871 = vsel %vm784, %v851, %v692
      %v873 = vsel %vm784, %v854, %v693
      %v875 = vsel %vm784, %v857, %v694
      %v877 = vsel %vm803, %v859, %v717
      %v880 = vsel %vm803, %v861, %v718
      %v883 = vsel %vm803, %v863, %v719
      %v886 = vsel %vm803, %v865, %v720
      %v889 = vsel %vm803, %v867, %v721
      %v892 = vsel %vm803, %v869, %v722
      %v895 = vsel %vm803, %v871, %v723
      %v898 = vsel %vm803, %v873, %v724
      %v901 = vsel %vm803, %v875, %v725
      %904 = vset.pattern.permute.xlu0 0
      %905 = vperm.xlu0 %904, %v357
      %v906 = vpop.permute.xlu0 %905
      %vm908 = vcmask 293888
      %v910 = vsel %vm908, %v356, 0
      %v913 = vsel %vm756, %v747, 0
      %v916 = vsel %vm756, %v748, 0
      %v919 = vsel %vm756, %v749, 0
      %v922 = vsel %vm756, %v750, 0
      %v925 = vsel %vm756, %v751, 0
      %v928 = vsel %vm756, %v752, 0
      %v931 = vsel %vm756, %v753, 0
      %v934 = vsel %vm756, %v754, 0
      %v937 = vsel %vm756, %v755, 0
      %939 = vmatprep.subr.bf16.mxu0 %v808
      %940 = vmatpush1.bf16.msra.mxu0 %v805
      %941 = vmatprep.subr.bf16.mxu0 %v880
      %942 = vmatpush1.bf16.msra.mxu0 %v877
      %943 = vmatprep.subr.bf16.mxu0 %v916
      %944 = vmatpush1.bf16.msra.mxu0 %v913
      %945 = vmatprep.subr.bf16.mxu0 0
      %946 = vmatpush1.bf16.msra.mxu0 0
      %947 = vmatprep.subr.bf16.mxu0 0
      %948 = vmatpush1.bf16.msra.mxu0 0
      %949 = vmatprep.subr.bf16.mxu0 0
      %950 = vmatpush1.bf16.msra.mxu0 0
      %951 = vmatprep.subr.bf16.mxu0 0
      %952 = vmatpush1.bf16.msra.mxu0 0
      %953 = vmatprep.subr.bf16.mxu0 0
      %954 = vmatpush1.bf16.msra.mxu0 0
      %955 = vmatprep.subr.bf16.mxu0 0
      %956 = vmatpush1.bf16.msra.mxu0 0
      %957 = vmatprep.subr.bf16.mxu0 0
      %958 = vmatpush1.bf16.msra.mxu0 0
      %959 = vmatprep.subr.bf16.mxu0 0
      %960 = vmatpush1.bf16.msra.mxu0 0
      %961 = vmatprep.subr.bf16.mxu0 0
      %962 = vmatpush1.bf16.msra.mxu0 0
      %963 = vmatprep.subr.bf16.mxu0 0
      %964 = vmatpush1.bf16.msra.mxu0 0
      %965 = vmatprep.subr.bf16.mxu0 0
      %966 = vmatpush1.bf16.msra.mxu0 0
      %967 = vmatprep.subr.bf16.mxu0 0
      %968 = vmatpush1.bf16.msra.mxu0 0
      %969 = vmatprep.subr.bf16.mxu0 0
      %970 = vmatpush1.bf16.msra.mxu0 0
      %971 = vmatprep.mubr.bf16.mxu0 0
      %972 = vmatmul.mubr.bf16.gmra.mrb[0].mxu0 %v910
      %v973 = vpop.f32.mrb[0].mxu0
      %v974 = vadd.f32 %v906, %v973
      %v975 = vpop.f32.mrb[0].mxu0
      %v976 = vadd.f32 %v906, %v975
      %v977 = vpop.f32.mrb[0].mxu0
      %v978 = vpop.f32.mrb[0].mxu0
      %979 = vdwg.mxu0
      %980 = vmatprep.subr.bf16.mxu0 %v814
      %981 = vmatpush1.bf16.msra.mxu0 %v811
      %982 = vmatprep.subr.bf16.mxu0 %v886
      %983 = vmatpush1.bf16.msra.mxu0 %v883
      %984 = vmatprep.subr.bf16.mxu0 %v922
      %985 = vmatpush1.bf16.msra.mxu0 %v919
      %986 = vmatprep.subr.bf16.mxu0 0
      %987 = vmatpush1.bf16.msra.mxu0 0
      %988 = vmatprep.subr.bf16.mxu0 0
      %989 = vmatpush1.bf16.msra.mxu0 0
      %990 = vmatprep.subr.bf16.mxu0 0
      %991 = vmatpush1.bf16.msra.mxu0 0
      %992 = vmatprep.subr.bf16.mxu0 0
      %993 = vmatpush1.bf16.msra.mxu0 0
      %994 = vmatprep.subr.bf16.mxu0 0
      %995 = vmatpush1.bf16.msra.mxu0 0
      %996 = vmatprep.subr.bf16.mxu0 0
      %997 = vmatpush1.bf16.msra.mxu0 0
      %998 = vmatprep.subr.bf16.mxu0 0
      %999 = vmatpush1.bf16.msra.mxu0 0
      %1000 = vmatprep.subr.bf16.mxu0 0
      %1001 = vmatpush1.bf16.msra.mxu0 0
      %1002 = vmatprep.subr.bf16.mxu0 0
      %1003 = vmatpush1.bf16.msra.mxu0 0
      %1004 = vmatprep.subr.bf16.mxu0 0
      %1005 = vmatpush1.bf16.msra.mxu0 0
      %1006 = vmatprep.subr.bf16.mxu0 0
      %1007 = vmatpush1.bf16.msra.mxu0 0
      %1008 = vmatprep.subr.bf16.mxu0 0
      %1009 = vmatpush1.bf16.msra.mxu0 0
      %1010 = vmatprep.subr.bf16.mxu0 0
      %1011 = vmatpush1.bf16.msra.mxu0 0
      %1012 = vmatprep.mubr.bf16.mxu0 0
      %1013 = vmatmul.mubr.bf16.gmra.mrb[0].mxu0 %v910
      %v1014 = vpop.f32.mrb[0].mxu0
      %v1015 = vadd.f32 %v906, %v1014
      %v1016 = vpop.f32.mrb[0].mxu0
      %v1017 = vadd.f32 %v906, %v1016
      %v1018 = vpop.f32.mrb[0].mxu0
      %v1019 = vpop.f32.mrb[0].mxu0
      %1020 = vdwg.mxu0
      %1021 = vmatprep.subr.bf16.mxu0 %v820
      %1022 = vmatpush1.bf16.msra.mxu0 %v817
      %1023 = vmatprep.subr.bf16.mxu0 %v892
      %1024 = vmatpush1.bf16.msra.mxu0 %v889
      %1025 = vmatprep.subr.bf16.mxu0 %v928
      %1026 = vmatpush1.bf16.msra.mxu0 %v925
      %1027 = vmatprep.subr.bf16.mxu0 0
      %1028 = vmatpush1.bf16.msra.mxu0 0
      %1029 = vmatprep.subr.bf16.mxu0 0
      %1030 = vmatpush1.bf16.msra.mxu0 0
      %1031 = vmatprep.subr.bf16.mxu0 0
      %1032 = vmatpush1.bf16.msra.mxu0 0
      %1033 = vmatprep.subr.bf16.mxu0 0
      %1034 = vmatpush1.bf16.msra.mxu0 0
      %1035 = vmatprep.subr.bf16.mxu0 0
      %1036 = vmatpush1.bf16.msra.mxu0 0
      %1037 = vmatprep.subr.bf16.mxu0 0
      %1038 = vmatpush1.bf16.msra.mxu0 0
      %1039 = vmatprep.subr.bf16.mxu0 0
      %1040 = vmatpush1.bf16.msra.mxu0 0
      %1041 = vmatprep.subr.bf16.mxu0 0
      %1042 = vmatpush1.bf16.msra.mxu0 0
      %1043 = vmatprep.subr.bf16.mxu0 0
      %1044 = vmatpush1.bf16.msra.mxu0 0
      %1045 = vmatprep.subr.bf16.mxu0 0
      %1046 = vmatpush1.bf16.msra.mxu0 0
      %1047 = vmatprep.subr.bf16.mxu0 0
      %1048 = vmatpush1.bf16.msra.mxu0 0
      %1049 = vmatprep.subr.bf16.mxu0 0
      %1050 = vmatpush1.bf16.msra.mxu0 0
      %1051 = vmatprep.subr.bf16.mxu0 0
      %1052 = vmatpush1.bf16.msra.mxu0 0
      %1053 = vmatprep.mubr.bf16.mxu0 0
      %1054 = vmatmul.mubr.bf16.gmra.mrb[0].mxu0 %v910
      %v1055 = vpop.f32.mrb[0].mxu0
      %v1056 = vadd.f32 %v906, %v1055
      %v1057 = vpop.f32.mrb[0].mxu0
      %v1058 = vadd.f32 %v906, %v1057
      %v1059 = vpop.f32.mrb[0].mxu0
      %v1060 = vpop.f32.mrb[0].mxu0
      %1061 = vdwg.mxu0
      %1062 = vmatprep.subr.bf16.mxu0 %v826
      %1063 = vmatpush1.bf16.msra.mxu0 %v823
      %1064 = vmatprep.subr.bf16.mxu0 %v898
      %1065 = vmatpush1.bf16.msra.mxu0 %v895
      %1066 = vmatprep.subr.bf16.mxu0 %v934
      %1067 = vmatpush1.bf16.msra.mxu0 %v931
      %1068 = vmatprep.subr.bf16.mxu0 0
      %1069 = vmatpush1.bf16.msra.mxu0 0
      %1070 = vmatprep.subr.bf16.mxu0 0
      %1071 = vmatpush1.bf16.msra.mxu0 0
      %1072 = vmatprep.subr.bf16.mxu0 0
      %1073 = vmatpush1.bf16.msra.mxu0 0
      %1074 = vmatprep.subr.bf16.mxu0 0
      %1075 = vmatpush1.bf16.msra.mxu0 0
      %1076 = vmatprep.subr.bf16.mxu0 0
      %1077 = vmatpush1.bf16.msra.mxu0 0
      %1078 = vmatprep.subr.bf16.mxu0 0
      %1079 = vmatpush1.bf16.msra.mxu0 0
      %1080 = vmatprep.subr.bf16.mxu0 0
      %1081 = vmatpush1.bf16.msra.mxu0 0
      %1082 = vmatprep.subr.bf16.mxu0 0
      %1083 = vmatpush1.bf16.msra.mxu0 0
      %1084 = vmatprep.subr.bf16.mxu0 0
      %1085 = vmatpush1.bf16.msra.mxu0 0
      %1086 = vmatprep.subr.bf16.mxu0 0
      %1087 = vmatpush1.bf16.msra.mxu0 0
      %1088 = vmatprep.subr.bf16.mxu0 0
      %1089 = vmatpush1.bf16.msra.mxu0 0
      %1090 = vmatprep.subr.bf16.mxu0 0
      %1091 = vmatpush1.bf16.msra.mxu0 0
      %1092 = vmatprep.subr.bf16.mxu0 0
      %1093 = vmatpush1.bf16.msra.mxu0 0
      %1094 = vmatprep.mubr.bf16.mxu0 0
      %1095 = vmatmul.mubr.bf16.gmra.mrb[0].mxu0 %v910
      %v1096 = vpop.f32.mrb[0].mxu0
      %v1097 = vadd.f32 %v906, %v1096
      %v1098 = vpop.f32.mrb[0].mxu0
      %v1099 = vadd.f32 %v906, %v1098
      %v1100 = vpop.f32.mrb[0].mxu0
      %v1101 = vpop.f32.mrb[0].mxu0
      %1102 = vdwg.mxu0
      %1103 = vmatprep.subr.bf16.mxu0 0
      %1104 = vmatpush1.bf16.msra.mxu0 %v829
      %1105 = vmatprep.subr.bf16.mxu0 0
      %1106 = vmatpush1.bf16.msra.mxu0 %v901
      %1107 = vmatprep.subr.bf16.mxu0 0
      %1108 = vmatpush1.bf16.msra.mxu0 %v937
      %1109 = vmatprep.subr.bf16.mxu0 0
      %1110 = vmatpush1.bf16.msra.mxu0 0
      %1111 = vmatprep.subr.bf16.mxu0 0
      %1112 = vmatpush1.bf16.msra.mxu0 0
      %1113 = vmatprep.subr.bf16.mxu0 0
      %1114 = vmatpush1.bf16.msra.mxu0 0
      %1115 = vmatprep.subr.bf16.mxu0 0
      %1116 = vmatpush1.bf16.msra.mxu0 0
      %1117 = vmatprep.subr.bf16.mxu0 0
      %1118 = vmatpush1.bf16.msra.mxu0 0
      %1119 = vmatprep.subr.bf16.mxu0 0
      %1120 = vmatpush1.bf16.msra.mxu0 0
      %1121 = vmatprep.subr.bf16.mxu0 0
      %1122 = vmatpush1.bf16.msra.mxu0 0
      %1123 = vmatprep.subr.bf16.mxu0 0
      %1124 = vmatpush1.bf16.msra.mxu0 0
      %1125 = vmatprep.subr.bf16.mxu0 0
      %1126 = vmatpush1.bf16.msra.mxu0 0
      %1127 = vmatprep.subr.bf16.mxu0 0
      %1128 = vmatpush1.bf16.msra.mxu0 0
      %1129 = vmatprep.subr.bf16.mxu0 0
      %1130 = vmatpush1.bf16.msra.mxu0 0
      %1131 = vmatprep.subr.bf16.mxu0 0
      %1132 = vmatpush1.bf16.msra.mxu0 0
      %1133 = vmatprep.subr.bf16.mxu0 0
      %1134 = vmatpush1.bf16.msra.mxu0 0
      %1135 = vmatprep.mubr.bf16.mxu0 0
      %1136 = vmatmul.mubr.bf16.gmra.mrb[0].mxu0 %v910
      %v1137 = vpop.f32.mrb[0].mxu0
      %v1138 = vadd.f32 %v906, %v1137
      %v1139 = vpop.f32.mrb[0].mxu0
      %v1140 = vpop.f32.mrb[0].mxu0
      %v1141 = vpop.f32.mrb[0].mxu0
      %1142 = vdwg.mxu0
      %1143 = vst [vmem:[%s346] sm:$0xff] %v974
      %1144 = vst [vmem:[%s346 + $0x8] sm:$0xff] %v976
      %1145 = vst [vmem:[%s346 + $0x10] sm:$0xff] %v1015
      %1146 = vst [vmem:[%s346 + $0x18] sm:$0xff] %v1017
      %1147 = vst [vmem:[%s346 + $0x20] sm:$0xff] %v1056
      %1148 = vst [vmem:[%s346 + $0x28] sm:$0xff] %v1058
      %1149 = vst [vmem:[%s346 + $0x30] sm:$0xff] %v1097
      %1150 = vst [vmem:[%s346 + $0x38] sm:$0xff] %v1099
      %vm1151 = vcmask 523264
      %1152 = vst.msk [vmem:[%s346 + $0x40] sm:$0xff] %vm1151, %v1138
      %v1155 = vlaneseq
      %v1156 = vshrl.u32 %v1155, 7
      %v1157 = vsub.s32 0, %v1156
      %v1158 = vrot.slane %v354, %v1157
      %v1159 = vlaneseq
      %v1160 = vshrl.u32 %v1159, 7
      %v1161 = vsub.s32 1, %v1160
      %v1162 = vrot.slane %v354, %v1161
      %v1163 = vlaneseq
      %v1164 = vshrl.u32 %v1163, 7
      %v1165 = vsub.s32 2, %v1164
      %v1166 = vrot.slane %v354, %v1165
      %v1167 = vlaneseq
      %v1168 = vshrl.u32 %v1167, 7
      %v1169 = vsub.s32 3, %v1168
      %v1170 = vrot.slane %v354, %v1169
      %v1171 = vlaneseq
      %v1172 = vshrl.u32 %v1171, 7
      %v1173 = vsub.s32 4, %v1172
      %v1174 = vrot.slane %v354, %v1173
      %v1175 = vlaneseq
      %v1176 = vshrl.u32 %v1175, 7
      %v1177 = vsub.s32 5, %v1176
      %v1178 = vrot.slane %v354, %v1177
      %v1179 = vlaneseq
      %v1180 = vshrl.u32 %v1179, 7
      %v1181 = vsub.s32 6, %v1180
      %v1182 = vrot.slane %v354, %v1181
      %v1183 = vlaneseq
      %v1184 = vshrl.u32 %v1183, 7
      %v1185 = vsub.s32 7, %v1184
      %v1186 = vrot.slane %v354, %v1185
      %v1187 = vlaneseq
      %v1188 = vshrl.u32 %v1187, 7
      %v1189 = vsub.s32 0, %v1188
      %v1190 = vrot.slane %v355, %v1189
      %v1200 = vmul.f32 %v974, %v1158
      %v1201 = vmul.f32 %v976, %v1162
      %v1202 = vmul.f32 %v1015, %v1166
      %v1203 = vmul.f32 %v1017, %v1170
      %v1204 = vmul.f32 %v1056, %v1174
      %v1205 = vmul.f32 %v1058, %v1178
      %v1206 = vmul.f32 %v1097, %v1182
      %v1207 = vmul.f32 %v1099, %v1186
      %v1208 = vmul.f32 %v1138, %v1190
      %v1209 = vadd.f32 %v1200, %v1201
      %v1210 = vadd.f32 %v1209, %v1202
      %v1211 = vadd.f32 %v1210, %v1203
      %v1212 = vadd.f32 %v1211, %v1204
      %v1213 = vadd.f32 %v1212, %v1205
      %v1214 = vadd.f32 %v1213, %v1206
      %v1215 = vadd.f32 %v1214, %v1207
      %v1216 = vsel %vm1151, %v1208, 0.0
      %v1217 = vadd.f32 %v1215, %v1216
      %1218 = vadd.xlane.f32.xlu0 %v1217
      %v1219 = vpop.xlane.xlu0 %1218
      %v1220 = vadd.f32 %v1219, 0.0
      %v1221 = vmul.f32 %v1200, %v1200
      %v1222 = vmul.f32 %v1201, %v1201
      %v1223 = vmul.f32 %v1202, %v1202
      %v1224 = vmul.f32 %v1203, %v1203
      %v1225 = vmul.f32 %v1204, %v1204
      %v1226 = vmul.f32 %v1205, %v1205
      %v1227 = vmul.f32 %v1206, %v1206
      %v1228 = vmul.f32 %v1207, %v1207
      %v1229 = vmul.f32 %v1208, %v1208
      %v1230 = vadd.f32 %v1221, %v1222
      %v1231 = vadd.f32 %v1230, %v1223
      %v1232 = vadd.f32 %v1231, %v1224
      %v1233 = vadd.f32 %v1232, %v1225
      %v1234 = vadd.f32 %v1233, %v1226
      %v1235 = vadd.f32 %v1234, %v1227
      %v1236 = vadd.f32 %v1235, %v1228
      %v1237 = vsel %vm1151, %v1229, 0.0
      %v1238 = vadd.f32 %v1236, %v1237
      %1239 = vadd.xlane.f32.xlu0 %v1238
      %v1240 = vpop.xlane.xlu0 %1239
      %v1241 = vadd.f32 %v1240, 0.0
      %vm1242 = vcmask 7168
      %v1243 = vsel %vm1242, %v1220, %v1241
      %vm1244 = vcmask 15360
      %1245 = vst.msk [vmem:[%s350] sm:$0xff] %vm1244, %v1243
      %p1246 = scmp.lt.s32.totalorder %s20, 1
      %s1247 = scalar_select %p1246, %s20, 1
      %s1248 = smul.addr %s1247, 9
      %s1249 = smul.addr %s1248, 8
      %s1250 = scalar_lea.vmem %s7, %s1249
      %p1251 = scmp.lt.s32.totalorder %s20, 1
      %s1252 = scalar_select %p1251, %s20, 1
      %s1253 = smul.addr %s1252, 8
      %s1254 = scalar_lea.vmem %s8, %s1253
      // Predicated region
      $region49: #{res_block_generator.2} parent=47 // pred_check
        %p1255 = pneg %p200
      $region50: #{res_block_generator.2} parent=47 // pred_check_branch
        %1257 = sbr.rel (%p1255) target = $region52
      $region51: #{res_block_generator.2} parent=47 // pred_region
        _
      $region52: #{res_block_generator.2} parent=47 // pred_fallthru
        _
      // Predicated region
      $region53: #{res_block_generator.2} parent=47 // pred_check
        %p1258 = pneg %p226
      $region54: #{res_block_generator.2} parent=47 // pred_check_branch
        %1260 = sbr.rel (%p1258) target = $region56
      $region55: #{res_block_generator.2} parent=47 // pred_region
        _
      $region56: #{res_block_generator.2} parent=47 // pred_fallthru
        _
    $region48: #{res_block_generator.2} parent=5 // pred_fallthru
      _
    %p1261 = scmp.le.s32.totalorder 2, %s15
    // Predicated region
    $region57: #{res_block_generator.2} parent=5 // pred_check
      %p1262 = pneg %p1261
    $region58: #{res_block_generator.2} parent=5 // pred_check_branch
      %1264 = sbr.rel (%p1262) target = $region60
    $region59: #{res_block_generator.2} parent=5 // pred_region
      %s1265 = ssub.s32 %s15, 2
      // Predicated region
      $region61: #{res_block_generator.2} parent=59 // pred_check
        %p1266 = pneg %p206
      $region62: #{res_block_generator.2} parent=59 // pred_check_branch
        %1268 = sbr.rel (%p1266) target = $region64
      $region63: #{res_block_generator.2} parent=59 // pred_region
        %p1269 = scmp.lt.s32.totalorder %s21, 1
        %s1270 = scalar_select %p1269, %s21, 1
        %s1271 = smul.addr %s1270, 9
        %s1272 = smul.addr %s1271, 8
        %s1273 = scalar_lea.vmem %s7, %s1272
      $region64: #{res_block_generator.2} parent=59 // pred_fallthru
        _
      // Predicated region
      $region65: #{res_block_generator.2} parent=59 // pred_check
        %p1274 = pneg %p232
      $region66: #{res_block_generator.2} parent=59 // pred_check_branch
        %1276 = sbr.rel (%p1274) target = $region68
      $region67: #{res_block_generator.2} parent=59 // pred_region
        %p1277 = scmp.lt.s32.totalorder %s21, 1
        %s1278 = scalar_select %p1277, %s21, 1
        %s1279 = smul.addr %s1278, 8
        %s1280 = scalar_lea.vmem %s8, %s1279
      $region68: #{res_block_generator.2} parent=59 // pred_fallthru
        _
    $region60: #{res_block_generator.2} parent=5 // pred_fallthru
      _
  $region6: #{res_block_generator.2} parent=0 // loop_footer
    %s19 = sadd.s32 1, %s15
  $region7: #{res_block_generator.2} parent=0 // loop_footer_branch
    %14 = sbr.rel target = $region3
  $region8: #{res_block_generator.2} parent=0 // loop_exit
    _

// kernel: res_block_generator.3
$region0: #{res_block_generator.3}
  #allocation0 [shape = 'u32[]', space=smem, size = 0x4, offset = 0x4, fixed_abs, tag = 'smem constant byte address 0x4 - core index']
  #allocation1 [shape = 'u32[144,128]{1,0:T(1,128)}', space=vmem, size = 0x12000, scoped, tag = 'internal scratch']
  %s0 = inlined_call_operand.vmem [shape: f32[2,8,1088], index: 0, kind: input, shape index: {}]
  %s1 = inlined_call_operand.vmem [shape: f32[2,8,1], index: 1, kind: input, shape index: {}]
  %s2 = inlined_call_operand.vmem [shape: f32[2,8,1], index: 2, kind: input, shape index: {}]
  %s3 = inlined_call_operand.vmem [shape: f32[1,1088], index: 3, kind: input, shape index: {}]
  %s4 = inlined_call_operand.vmem [shape: bf16[8,72], index: 4, kind: input, shape index: {}]
  %s5 = inlined_call_operand.vmem [shape: f32[8,1], index: 5, kind: input, shape index: {}]
  %s6 = inlined_call_operand.vmem [shape: f32[2,4,1190], index: 6, kind: input, shape index: {}]
  %s7 = inlined_call_operand.vmem [shape: bf16[8,4], index: 7, kind: input, shape index: {}]
  %s8 = inlined_call_operand.vmem [shape: f32[8,1], index: 8, kind: input, shape index: {}]
  %s9 = inlined_call_operand.vmem [shape: f32[2,8,1088], index: 9, kind: output, shape index: {}]
  %s10 = sld [smem:[#allocation0]]
  $region69: #{res_block_generator.3} parent=0
    _
  %s12 = ssub.s32 1, %s10
  %s13 = scalar_select 0, %s12, %s10
  loop: start=0, step=1, limit=4
  $region2: #{res_block_generator.3} parent=0 // loop_pre_header
    _
  $region3: #{res_block_generator.3} parent=0 // loop_header
    %s15 = sphi 0, %s19
    %p16 = scmp.ge.s32.totalorder %s15, 4
    %s25 = sphi 0, %s27
    %s28 = sphi 0, %s25
    %s29 = sphi 0, %s28
    %s45 = sphi 0, %s29
    %s51 = sphi 0, %s53
    %s54 = sphi 0, %s51
    %s55 = sphi 0, %s54
    %s71 = sphi 0, %s55
    %s77 = sphi 0, %s79
    %s80 = sphi 0, %s77
    %s81 = sphi 0, %s80
    %s97 = sphi 0, %s81
    %s101 = sphi 0, %s101
    %s103 = sphi 0, %s101
    %s104 = sphi 0, %s103
    %s118 = sphi 0, %s104
    %s122 = sphi 0, %s122
    %s124 = sphi 0, %s122
    %s125 = sphi 0, %s124
    %s139 = sphi 0, %s125
    %s143 = sphi 0, %s143
    %s145 = sphi 0, %s143
    %s146 = sphi 0, %s145
    %s160 = sphi 0, %s146
    %s166 = sphi 0, %s168
    %s169 = sphi 0, %s166
    %s170 = sphi 0, %s169
    %s186 = sphi 0, %s170
    %s190 = sphi 0, %s190
    %s192 = sphi 0, %s190
    %s193 = sphi 0, %s192
    %s207 = sphi 0, %s193
    %s211 = sphi 0, %s211
    %s213 = sphi 0, %s211
    %s214 = sphi 0, %s213
    %s228 = sphi 0, %s214
    %s234 = sphi 0, %s236
    %s237 = sphi 0, %s234
    %s238 = sphi 0, %s237
    %s254 = sphi 0, %s238
  $region4: #{res_block_generator.3} parent=0 // loop_header_branch
    %18 = sbr.rel (%p16) target = $region8
  $region5: #{res_block_generator.3} parent=0 // loop_body
    %s20 = ssub.s32 %s15, 1
    %s21 = ssub.s32 %s15, 2
    %s22 = sadd.s32 %s15, 1
    %s23 = ssub.s32 %s15, %s22
    %p24 = scmp.eq.s32.totalorder %s23, 0
    %s26 = sadd.s32 %s25, 1
    %s27 = scalar_select %p24, %s25, %s26
    %p30 = pneg %p24
    %p31 = scmp.eq.s32.totalorder %s15, 1
    %p32 = por %p30, %p31
    %p33 = scmp.ne.s32.totalorder %s25, %s28
    %p34 = scmp.eq.s32.totalorder %s15, 0
    %p35 = por %p33, %p34
    %p36 = scmp.ne.s32.totalorder %s25, %s28
    %p37 = scmp.eq.s32.totalorder %s20, 1
    %p38 = por %p36, %p37
    %p39 = scmp.ne.s32.totalorder %s28, %s29
    %p40 = scmp.eq.s32.totalorder %s20, 0
    %p41 = por %p39, %p40
    %p42 = scmp.ne.s32.totalorder %s28, %s29
    %p43 = scmp.eq.s32.totalorder %s21, 1
    %p44 = por %p42, %p43
    %p46 = scmp.ne.s32.totalorder %s29, %s45
    %p47 = scmp.eq.s32.totalorder %s21, 0
    %p48 = por %p46, %p47
    %s49 = ssub.s32 %s15, %s22
    %p50 = scmp.eq.s32.totalorder %s49, 0
    %s52 = sadd.s32 %s51, 1
    %s53 = scalar_select %p50, %s51, %s52
    %p56 = pneg %p50
    %p57 = scmp.eq.s32.totalorder %s15, 1
    %p58 = por %p56, %p57
    %p59 = scmp.ne.s32.totalorder %s51, %s54
    %p60 = scmp.eq.s32.totalorder %s15, 0
    %p61 = por %p59, %p60
    %p62 = scmp.ne.s32.totalorder %s51, %s54
    %p63 = scmp.eq.s32.totalorder %s20, 1
    %p64 = por %p62, %p63
    %p65 = scmp.ne.s32.totalorder %s54, %s55
    %p66 = scmp.eq.s32.totalorder %s20, 0
    %p67 = por %p65, %p66
    %p68 = scmp.ne.s32.totalorder %s54, %s55
    %p69 = scmp.eq.s32.totalorder %s21, 1
    %p70 = por %p68, %p69
    %p72 = scmp.ne.s32.totalorder %s55, %s71
    %p73 = scmp.eq.s32.totalorder %s21, 0
    %p74 = por %p72, %p73
    %s75 = ssub.s32 %s15, %s22
    %p76 = scmp.eq.s32.totalorder %s75, 0
    %s78 = sadd.s32 %s77, 1
    %s79 = scalar_select %p76, %s77, %s78
    %p82 = pneg %p76
    %p83 = scmp.eq.s32.totalorder %s15, 1
    %p84 = por %p82, %p83
    %p85 = scmp.ne.s32.totalorder %s77, %s80
    %p86 = scmp.eq.s32.totalorder %s15, 0
    %p87 = por %p85, %p86
    %p88 = scmp.ne.s32.totalorder %s77, %s80
    %p89 = scmp.eq.s32.totalorder %s20, 1
    %p90 = por %p88, %p89
    %p91 = scmp.ne.s32.totalorder %s80, %s81
    %p92 = scmp.eq.s32.totalorder %s20, 0
    %p93 = por %p91, %p92
    %p94 = scmp.ne.s32.totalorder %s80, %s81
    %p95 = scmp.eq.s32.totalorder %s21, 1
    %p96 = por %p94, %p95
    %p98 = scmp.ne.s32.totalorder %s81, %s97
    %p99 = scmp.eq.s32.totalorder %s21, 0
    %p100 = por %p98, %p99
    %s102 = sadd.s32 %s101, 1
    %p105 = scmp.eq.s32.totalorder %s15, 1
    %p106 = scmp.ne.s32.totalorder %s101, %s103
    %p107 = scmp.eq.s32.totalorder %s15, 0
    %p108 = por %p106, %p107
    %p109 = scmp.ne.s32.totalorder %s101, %s103
    %p110 = scmp.eq.s32.totalorder %s20, 1
    %p111 = por %p109, %p110
    %p112 = scmp.ne.s32.totalorder %s103, %s104
    %p113 = scmp.eq.s32.totalorder %s20, 0
    %p114 = por %p112, %p113
    %p115 = scmp.ne.s32.totalorder %s103, %s104
    %p116 = scmp.eq.s32.totalorder %s21, 1
    %p117 = por %p115, %p116
    %p119 = scmp.ne.s32.totalorder %s104, %s118
    %p120 = scmp.eq.s32.totalorder %s21, 0
    %p121 = por %p119, %p120
    %s123 = sadd.s32 %s122, 1
    %p126 = scmp.eq.s32.totalorder %s15, 1
    %p127 = scmp.ne.s32.totalorder %s122, %s124
    %p128 = scmp.eq.s32.totalorder %s15, 0
    %p129 = por %p127, %p128
    %p130 = scmp.ne.s32.totalorder %s122, %s124
    %p131 = scmp.eq.s32.totalorder %s20, 1
    %p132 = por %p130, %p131
    %p133 = scmp.ne.s32.totalorder %s124, %s125
    %p134 = scmp.eq.s32.totalorder %s20, 0
    %p135 = por %p133, %p134
    %p136 = scmp.ne.s32.totalorder %s124, %s125
    %p137 = scmp.eq.s32.totalorder %s21, 1
    %p138 = por %p136, %p137
    %p140 = scmp.ne.s32.totalorder %s125, %s139
    %p141 = scmp.eq.s32.totalorder %s21, 0
    %p142 = por %p140, %p141
    %s144 = sadd.s32 %s143, 1
    %p147 = scmp.eq.s32.totalorder %s15, 1
    %p148 = scmp.ne.s32.totalorder %s143, %s145
    %p149 = scmp.eq.s32.totalorder %s15, 0
    %p150 = por %p148, %p149
    %p151 = scmp.ne.s32.totalorder %s143, %s145
    %p152 = scmp.eq.s32.totalorder %s20, 1
    %p153 = por %p151, %p152
    %p154 = scmp.ne.s32.totalorder %s145, %s146
    %p155 = scmp.eq.s32.totalorder %s20, 0
    %p156 = por %p154, %p155
    %p157 = scmp.ne.s32.totalorder %s145, %s146
    %p158 = scmp.eq.s32.totalorder %s21, 1
    %p159 = por %p157, %p158
    %p161 = scmp.ne.s32.totalorder %s146, %s160
    %p162 = scmp.eq.s32.totalorder %s21, 0
    %p163 = por %p161, %p162
    %s164 = ssub.s32 %s15, %s22
    %p165 = scmp.eq.s32.totalorder %s164, 0
    %s167 = sadd.s32 %s166, 1
    %s168 = scalar_select %p165, %s166, %s167
    %p171 = pneg %p165
    %p172 = scmp.eq.s32.totalorder %s15, 1
    %p173 = por %p171, %p172
    %p174 = scmp.ne.s32.totalorder %s166, %s169
    %p175 = scmp.eq.s32.totalorder %s15, 0
    %p176 = por %p174, %p175
    %p177 = scmp.ne.s32.totalorder %s166, %s169
    %p178 = scmp.eq.s32.totalorder %s20, 1
    %p179 = por %p177, %p178
    %p180 = scmp.ne.s32.totalorder %s169, %s170
    %p181 = scmp.eq.s32.totalorder %s20, 0
    %p182 = por %p180, %p181
    %p183 = scmp.ne.s32.totalorder %s169, %s170
    %p184 = scmp.eq.s32.totalorder %s21, 1
    %p185 = por %p183, %p184
    %p187 = scmp.ne.s32.totalorder %s170, %s186
    %p188 = scmp.eq.s32.totalorder %s21, 0
    %p189 = por %p187, %p188
    %s191 = sadd.s32 %s190, 1
    %p194 = scmp.eq.s32.totalorder %s15, 1
    %p195 = scmp.ne.s32.totalorder %s190, %s192
    %p196 = scmp.eq.s32.totalorder %s15, 0
    %p197 = por %p195, %p196
    %p198 = scmp.ne.s32.totalorder %s190, %s192
    %p199 = scmp.eq.s32.totalorder %s20, 1
    %p200 = por %p198, %p199
    %p201 = scmp.ne.s32.totalorder %s192, %s193
    %p202 = scmp.eq.s32.totalorder %s20, 0
    %p203 = por %p201, %p202
    %p204 = scmp.ne.s32.totalorder %s192, %s193
    %p205 = scmp.eq.s32.totalorder %s21, 1
    %p206 = por %p204, %p205
    %p208 = scmp.ne.s32.totalorder %s193, %s207
    %p209 = scmp.eq.s32.totalorder %s21, 0
    %p210 = por %p208, %p209
    %s212 = sadd.s32 %s211, 1
    %p215 = scmp.eq.s32.totalorder %s15, 1
    %p216 = scmp.ne.s32.totalorder %s211, %s213
    %p217 = scmp.eq.s32.totalorder %s15, 0
    %p218 = por %p216, %p217
    %p219 = scmp.ne.s32.totalorder %s211, %s213
    %p220 = scmp.eq.s32.totalorder %s20, 1
    %p221 = por %p219, %p220
    %p222 = scmp.ne.s32.totalorder %s213, %s214
    %p223 = scmp.eq.s32.totalorder %s20, 0
    %p224 = por %p222, %p223
    %p225 = scmp.ne.s32.totalorder %s213, %s214
    %p226 = scmp.eq.s32.totalorder %s21, 1
    %p227 = por %p225, %p226
    %p229 = scmp.ne.s32.totalorder %s214, %s228
    %p230 = scmp.eq.s32.totalorder %s21, 0
    %p231 = por %p229, %p230
    %s232 = ssub.s32 %s15, %s22
    %p233 = scmp.eq.s32.totalorder %s232, 0
    %s235 = sadd.s32 %s234, 1
    %s236 = scalar_select %p233, %s234, %s235
    %p239 = pneg %p233
    %p240 = scmp.eq.s32.totalorder %s15, 1
    %p241 = por %p239, %p240
    %p242 = scmp.ne.s32.totalorder %s234, %s237
    %p243 = scmp.eq.s32.totalorder %s15, 0
    %p244 = por %p242, %p243
    %p245 = scmp.ne.s32.totalorder %s234, %s237
    %p246 = scmp.eq.s32.totalorder %s20, 1
    %p247 = por %p245, %p246
    %p248 = scmp.ne.s32.totalorder %s237, %s238
    %p249 = scmp.eq.s32.totalorder %s20, 0
    %p250 = por %p248, %p249
    %p251 = scmp.ne.s32.totalorder %s237, %s238
    %p252 = scmp.eq.s32.totalorder %s21, 1
    %p253 = por %p251, %p252
    %p255 = scmp.ne.s32.totalorder %s238, %s254
    %p256 = scmp.eq.s32.totalorder %s21, 0
    %p257 = por %p255, %p256
    %p258 = scmp.le.s32.totalorder 1, %s15
    %p259 = scmp.lt.s32.totalorder %s15, 3
    %p260 = pnand %p258, %p259
    %p261 = pneg %p260
    // Predicated region
    $region9: #{res_block_generator.3} parent=5 // pred_check
      _
    $region10: #{res_block_generator.3} parent=5 // pred_check_branch
      %263 = sbr.rel (%p260) target = $region12
    $region11: #{res_block_generator.3} parent=5 // pred_region
      %s264 = ssub.s32 %s15, 1
      // Predicated region
      $region13: #{res_block_generator.3} parent=11 // pred_check
        %p265 = pneg %p114
      $region14: #{res_block_generator.3} parent=11 // pred_check_branch
        %267 = sbr.rel (%p265) target = $region16
      $region15: #{res_block_generator.3} parent=11 // pred_region
        _
      $region16: #{res_block_generator.3} parent=11 // pred_fallthru
        _
      // Predicated region
      $region17: #{res_block_generator.3} parent=11 // pred_check
        %p268 = pneg %p135
      $region18: #{res_block_generator.3} parent=11 // pred_check_branch
        %270 = sbr.rel (%p268) target = $region20
      $region19: #{res_block_generator.3} parent=11 // pred_region
        _
      $region20: #{res_block_generator.3} parent=11 // pred_fallthru
        _
      // Predicated region
      $region21: #{res_block_generator.3} parent=11 // pred_check
        %p271 = pneg %p156
      $region22: #{res_block_generator.3} parent=11 // pred_check_branch
        %273 = sbr.rel (%p271) target = $region24
      $region23: #{res_block_generator.3} parent=11 // pred_region
        _
      $region24: #{res_block_generator.3} parent=11 // pred_fallthru
        _
      // Predicated region
      $region25: #{res_block_generator.3} parent=11 // pred_check
        %p274 = pneg %p203
      $region26: #{res_block_generator.3} parent=11 // pred_check_branch
        %276 = sbr.rel (%p274) target = $region28
      $region27: #{res_block_generator.3} parent=11 // pred_region
        _
      $region28: #{res_block_generator.3} parent=11 // pred_fallthru
        _
      // Predicated region
      $region29: #{res_block_generator.3} parent=11 // pred_check
        %p277 = pneg %p224
      $region30: #{res_block_generator.3} parent=11 // pred_check_branch
        %279 = sbr.rel (%p277) target = $region32
      $region31: #{res_block_generator.3} parent=11 // pred_region
        _
      $region32: #{res_block_generator.3} parent=11 // pred_fallthru
        _
    $region12: #{res_block_generator.3} parent=5 // pred_fallthru
      _
    %p280 = scmp.lt.s32.totalorder %s15, 2
    // Predicated region
    $region33: #{res_block_generator.3} parent=5 // pred_check
      %p281 = pneg %p280
    $region34: #{res_block_generator.3} parent=5 // pred_check_branch
      %283 = sbr.rel (%p281) target = $region36
    $region35: #{res_block_generator.3} parent=5 // pred_region
      // Predicated region
      $region37: #{res_block_generator.3} parent=35 // pred_check
        %p284 = pneg %p35
      $region38: #{res_block_generator.3} parent=35 // pred_check_branch
        %286 = sbr.rel (%p284) target = $region40
      $region39: #{res_block_generator.3} parent=35 // pred_region
        %p287 = scmp.lt.s32.totalorder %s15, 1
        %s288 = scalar_select %p287, %s15, 1
        %s289 = smul.addr %s288, 9
        %s290 = smul.addr %s289, 8
        %s291 = scalar_lea.vmem %s0, %s290
      $region40: #{res_block_generator.3} parent=35 // pred_fallthru
        _
      // Predicated region
      $region41: #{res_block_generator.3} parent=35 // pred_check
        %p292 = pneg %p61
      $region42: #{res_block_generator.3} parent=35 // pred_check_branch
        %294 = sbr.rel (%p292) target = $region44
      $region43: #{res_block_generator.3} parent=35 // pred_region
        %p295 = scmp.lt.s32.totalorder %s15, 1
        %s296 = scalar_select %p295, %s15, 1
        %s297 = smul.addr %s296, 8
        %s298 = scalar_lea.vmem %s1, %s297
      $region44: #{res_block_generator.3} parent=35 // pred_fallthru
        _
      // Predicated region
      $region45: #{res_block_generator.3} parent=35 // pred_check
        %p299 = pneg %p87
      $region46: #{res_block_generator.3} parent=35 // pred_check_branch
        %301 = sbr.rel (%p299) target = $region48
      $region47: #{res_block_generator.3} parent=35 // pred_region
        %p302 = scmp.lt.s32.totalorder %s15, 1
        %s303 = scalar_select %p302, %s15, 1
        %s304 = smul.addr %s303, 8
        %s305 = scalar_lea.vmem %s2, %s304
      $region48: #{res_block_generator.3} parent=35 // pred_fallthru
        _
      // Predicated region
      $region49: #{res_block_generator.3} parent=35 // pred_check
        %p306 = pneg %p176
      $region50: #{res_block_generator.3} parent=35 // pred_check_branch
        %308 = sbr.rel (%p306) target = $region52
      $region51: #{res_block_generator.3} parent=35 // pred_region
        %p309 = scmp.lt.s32.totalorder %s15, 1
        %s310 = scalar_select %p309, %s15, 1
        %s311 = smul.addr %s310, 10
        %s312 = smul.addr %s311, 4
        %s313 = scalar_lea.vmem %s6, %s312
      $region52: #{res_block_generator.3} parent=35 // pred_fallthru
        _
    $region36: #{res_block_generator.3} parent=5 // pred_fallthru
      _
    %p314 = scmp.le.s32.totalorder 1, %s15
    %p315 = scmp.lt.s32.totalorder %s15, 3
    %p316 = pnand %p314, %p315
    %p317 = pneg %p316
    // Predicated region
    $region53: #{res_block_generator.3} parent=5 // pred_check
      _
    $region54: #{res_block_generator.3} parent=5 // pred_check_branch
      %319 = sbr.rel (%p316) target = $region56
    $region55: #{res_block_generator.3} parent=5 // pred_region
      %s320 = ssub.s32 %s15, 1
      %p321 = scmp.lt.s32.totalorder %s20, 1
      %s322 = scalar_select %p321, %s20, 1
      %s323 = smul.addr %s322, 9
      %s324 = smul.addr %s323, 8
      %s325 = scalar_lea.vmem %s0, %s324
      %p326 = pneg %p41
      %p327 = pneg %p38
      %p328 = scmp.lt.s32.totalorder %s20, 1
      %s329 = scalar_select %p328, %s20, 1
      %s330 = smul.addr %s329, 8
      %s331 = scalar_lea.vmem %s1, %s330
      %p332 = pneg %p67
      %p333 = pneg %p64
      %p334 = scmp.lt.s32.totalorder %s20, 1
      %s335 = scalar_select %p334, %s20, 1
      %s336 = smul.addr %s335, 8
      %s337 = scalar_lea.vmem %s2, %s336
      %p338 = pneg %p93
      %p339 = pneg %p90
      %p340 = pneg %p114
      %p341 = pneg %p111
      %p342 = pneg %p135
      %p343 = pneg %p132
      %p344 = pneg %p156
      %p345 = pneg %p153
      %p346 = scmp.lt.s32.totalorder %s20, 1
      %s347 = scalar_select %p346, %s20, 1
      %s348 = smul.addr %s347, 10
      %s349 = smul.addr %s348, 4
      %s350 = scalar_lea.vmem %s6, %s349
      %p351 = pneg %p182
      %p352 = pneg %p179
      %p353 = pneg %p203
      %p354 = pneg %p200
      %p355 = pneg %p224
      %p356 = pneg %p221
      %p357 = pneg %p250
      %p358 = pneg %p247
      %p359 = scmp.lt.s32.totalorder %s20, 1
      %s360 = scalar_select %p359, %s20, 1
      %s361 = smul.addr %s360, 9
      %s362 = smul.addr %s361, 8
      %s363 = scalar_lea.vmem %s9, %s362
      %p364 = scmp.lt.s32.totalorder %s20, 1
      %s365 = scalar_select %p364, %s20, 1
      %s366 = smul.addr %s365, 9
      %s367 = smul.addr %s366, 8
      %s368 = scalar_lea.vmem %s0, %s367
      %p369 = scmp.lt.s32.totalorder %s20, 1
      %s370 = scalar_select %p369, %s20, 1
      %s371 = smul.addr %s370, 8
      %s372 = scalar_lea.vmem %s1, %s371
      %p373 = scmp.lt.s32.totalorder %s20, 1
      %s374 = scalar_select %p373, %s20, 1
      %s375 = smul.addr %s374, 8
      %s376 = scalar_lea.vmem %s2, %s375
      %p377 = scmp.lt.s32.totalorder %s20, 1
      %s378 = scalar_select %p377, %s20, 1
      %s379 = smul.addr %s378, 10
      %s380 = smul.addr %s379, 4
      %s381 = scalar_lea.vmem %s6, %s380
      %p382 = scmp.lt.s32.totalorder %s20, 1
      %s383 = scalar_select %p382, %s20, 1
      %s384 = smul.addr %s383, 9
      %s385 = smul.addr %s384, 8
      %s386 = scalar_lea.vmem %s9, %s385
      %v388 = vld [vmem:[%s3] sm:$0xff]
      %v389 = vld [vmem:[%s3 + $0x8] sm:$0x1]
      %v390 = vld [vmem:[%s4] sm:$0xf]
      %v391 = vld [vmem:[%s5] sm:$0xff]
      %v392 = vld [vmem:[%s7] sm:$0xf]
      %v393 = vld [vmem:[%s8] sm:$0xff]
      %v394 = vld [vmem:[%s372] sm:$0xff]
      %v395 = vld [vmem:[%s368] sm:$0xff]
      %v396 = vld [vmem:[%s368 + $0x8] sm:$0xff]
      %v397 = vld [vmem:[%s368 + $0x10] sm:$0xff]
      %v398 = vld [vmem:[%s368 + $0x18] sm:$0xff]
      %v399 = vld [vmem:[%s368 + $0x20] sm:$0xff]
      %v400 = vld [vmem:[%s368 + $0x28] sm:$0xff]
      %v401 = vld [vmem:[%s368 + $0x30] sm:$0xff]
      %v402 = vld [vmem:[%s368 + $0x38] sm:$0xff]
      %v403 = vld [vmem:[%s368 + $0x40] sm:$0xff]
      %405 = vset.pattern.permute.xlu0 0
      %406 = vperm.xlu0 %405, %v394
      %v407 = vpop.permute.xlu0 %406
      %v409 = vmul.f32 %v407, %v395
      %v410 = vmul.f32 %v407, %v396
      %v411 = vmul.f32 %v407, %v397
      %v412 = vmul.f32 %v407, %v398
      %v413 = vmul.f32 %v407, %v399
      %v414 = vmul.f32 %v407, %v400
      %v415 = vmul.f32 %v407, %v401
      %v416 = vmul.f32 %v407, %v402
      %v417 = vmul.f32 %v407, %v403
      %v418 = vld [vmem:[%s376] sm:$0xff]
      %420 = vset.pattern.permute.xlu0 0
      %421 = vperm.xlu0 %420, %v418
      %v422 = vpop.permute.xlu0 %421
      %v424 = vadd.f32 %v409, %v422
      %v425 = vadd.f32 %v410, %v422
      %v426 = vadd.f32 %v411, %v422
      %v427 = vadd.f32 %v412, %v422
      %v428 = vadd.f32 %v413, %v422
      %v429 = vadd.f32 %v414, %v422
      %v430 = vadd.f32 %v415, %v422
      %v431 = vadd.f32 %v416, %v422
      %v432 = vadd.f32 %v417, %v422
      %v433 = vmax.f32 %v424, 0.0
      %v434 = vmax.f32 %v425, 0.0
      %v435 = vmax.f32 %v426, 0.0
      %v436 = vmax.f32 %v427, 0.0
      %v437 = vmax.f32 %v428, 0.0
      %v438 = vmax.f32 %v429, 0.0
      %v439 = vmax.f32 %v430, 0.0
      %v440 = vmax.f32 %v431, 0.0
      %v441 = vmax.f32 %v432, 0.0
      %v444 = vlaneseq
      %v445 = vshrl.u32 %v444, 7
      %v446 = vsub.s32 0, %v445
      %v447 = vrot.slane %v388, %v446
      %v448 = vlaneseq
      %v449 = vshrl.u32 %v448, 7
      %v450 = vsub.s32 1, %v449
      %v451 = vrot.slane %v388, %v450
      %v452 = vlaneseq
      %v453 = vshrl.u32 %v452, 7
      %v454 = vsub.s32 2, %v453
      %v455 = vrot.slane %v388, %v454
      %v456 = vlaneseq
      %v457 = vshrl.u32 %v456, 7
      %v458 = vsub.s32 3, %v457
      %v459 = vrot.slane %v388, %v458
      %v460 = vlaneseq
      %v461 = vshrl.u32 %v460, 7
      %v462 = vsub.s32 4, %v461
      %v463 = vrot.slane %v388, %v462
      %v464 = vlaneseq
      %v465 = vshrl.u32 %v464, 7
      %v466 = vsub.s32 5, %v465
      %v467 = vrot.slane %v388, %v466
      %v468 = vlaneseq
      %v469 = vshrl.u32 %v468, 7
      %v470 = vsub.s32 6, %v469
      %v471 = vrot.slane %v388, %v470
      %v472 = vlaneseq
      %v473 = vshrl.u32 %v472, 7
      %v474 = vsub.s32 7, %v473
      %v475 = vrot.slane %v388, %v474
      %v476 = vlaneseq
      %v477 = vshrl.u32 %v476, 7
      %v478 = vsub.s32 0, %v477
      %v479 = vrot.slane %v389, %v478
      %v489 = vmul.f32 %v433, %v447
      %v490 = vmul.f32 %v434, %v451
      %v491 = vmul.f32 %v435, %v455
      %v492 = vmul.f32 %v436, %v459
      %v493 = vmul.f32 %v437, %v463
      %v494 = vmul.f32 %v438, %v467
      %v495 = vmul.f32 %v439, %v471
      %v496 = vmul.f32 %v440, %v475
      %v497 = vmul.f32 %v441, %v479
      %v498 = vpack.c.bf16 %v489, %v489
      %v499 = vpack.c.bf16 %v490, %v490
      %v500 = vpack.c.bf16 %v491, %v491
      %v501 = vpack.c.bf16 %v492, %v492
      %v502 = vpack.c.bf16 %v493, %v493
      %v503 = vpack.c.bf16 %v494, %v494
      %v504 = vpack.c.bf16 %v495, %v495
      %v505 = vpack.c.bf16 %v496, %v496
      %v506 = vpack.c.bf16 %v497, %v497
      %516 = vrot.lane.b32.xlu0 %v498, 35
      %v517 = vpop.permute.xlu0 %516
      %518 = vrot.lane.b32.xlu0 %v499, 35
      %v519 = vpop.permute.xlu0 %518
      %520 = vrot.lane.b32.xlu0 %v500, 35
      %v521 = vpop.permute.xlu0 %520
      %522 = vrot.lane.b32.xlu0 %v501, 35
      %v523 = vpop.permute.xlu0 %522
      %524 = vrot.lane.b32.xlu0 %v502, 35
      %v525 = vpop.permute.xlu0 %524
      %526 = vrot.lane.b32.xlu0 %v503, 35
      %v527 = vpop.permute.xlu0 %526
      %528 = vrot.lane.b32.xlu0 %v504, 35
      %v529 = vpop.permute.xlu0 %528
      %530 = vrot.lane.b32.xlu0 %v505, 35
      %v531 = vpop.permute.xlu0 %530
      %532 = vrot.lane.b32.xlu0 %v506, 35
      %v533 = vpop.permute.xlu0 %532
      %vm534 = vcmask 285696
      %v535 = vsel %vm534, %v517, %v519
      %v536 = vsel %vm534, %v519, %v521
      %v537 = vsel %vm534, %v521, %v523
      %v538 = vsel %vm534, %v523, %v525
      %v539 = vsel %vm534, %v525, %v527
      %v540 = vsel %vm534, %v527, %v529
      %v541 = vsel %vm534, %v529, %v531
      %v542 = vsel %vm534, %v531, %v533
      %vm543 = vcmask 285696
      %v546 = vsel %vm543, 0, %v517
      %vm547 = vcmask 809984
      %v549 = vsel %vm547, %v542, 0
      %v552 = vrot.slane %v546, 4
      %v553 = vrot.slane %v535, 4
      %v554 = vrot.slane %v536, 4
      %v555 = vrot.slane %v537, 4
      %v556 = vrot.slane %v538, 4
      %v557 = vrot.slane %v539, 4
      %v558 = vrot.slane %v540, 4
      %v559 = vrot.slane %v541, 4
      %v560 = vrot.slane %v549, 4
      %561 = vrot.lane.b32.xlu0 %v552, 127
      %v562 = vpop.permute.xlu0 %561
      %563 = vrot.lane.b32.xlu0 %v553, 127
      %v564 = vpop.permute.xlu0 %563
      %565 = vrot.lane.b32.xlu0 %v554, 127
      %v566 = vpop.permute.xlu0 %565
      %567 = vrot.lane.b32.xlu0 %v555, 127
      %v568 = vpop.permute.xlu0 %567
      %569 = vrot.lane.b32.xlu0 %v556, 127
      %v570 = vpop.permute.xlu0 %569
      %571 = vrot.lane.b32.xlu0 %v557, 127
      %v572 = vpop.permute.xlu0 %571
      %573 = vrot.lane.b32.xlu0 %v558, 127
      %v574 = vpop.permute.xlu0 %573
      %575 = vrot.lane.b32.xlu0 %v559, 127
      %v576 = vpop.permute.xlu0 %575
      %577 = vrot.lane.b32.xlu0 %v560, 127
      %v578 = vpop.permute.xlu0 %577
      %vm579 = vcmask 1039360
      %v580 = vsel %vm579, %v562, %v564
      %v581 = vsel %vm579, %v564, %v566
      %v582 = vsel %vm579, %v566, %v568
      %v583 = vsel %vm579, %v568, %v570
      %v584 = vsel %vm579, %v570, %v572
      %v585 = vsel %vm579, %v572, %v574
      %v586 = vsel %vm579, %v574, %v576
      %v587 = vsel %vm579, %v576, %v578
      %588 = vrot.lane.b32.xlu0 %v546, 126
      %v589 = vpop.permute.xlu0 %588
      %590 = vrot.lane.b32.xlu0 %v535, 126
      %v591 = vpop.permute.xlu0 %590
      %592 = vrot.lane.b32.xlu0 %v536, 126
      %v593 = vpop.permute.xlu0 %592
      %594 = vrot.lane.b32.xlu0 %v537, 126
      %v595 = vpop.permute.xlu0 %594
      %596 = vrot.lane.b32.xlu0 %v538, 126
      %v597 = vpop.permute.xlu0 %596
      %598 = vrot.lane.b32.xlu0 %v539, 126
      %v599 = vpop.permute.xlu0 %598
      %600 = vrot.lane.b32.xlu0 %v540, 126
      %v601 = vpop.permute.xlu0 %600
      %602 = vrot.lane.b32.xlu0 %v541, 126
      %v603 = vpop.permute.xlu0 %602
      %604 = vrot.lane.b32.xlu0 %v549, 126
      %v605 = vpop.permute.xlu0 %604
      %vm606 = vcmask 1031168
      %v607 = vsel %vm606, %v589, %v591
      %v608 = vsel %vm606, %v591, %v593
      %v609 = vsel %vm606, %v593, %v595
      %v610 = vsel %vm606, %v595, %v597
      %v611 = vsel %vm606, %v597, %v599
      %v612 = vsel %vm606, %v599, %v601
      %v613 = vsel %vm606, %v601, %v603
      %v614 = vsel %vm606, %v603, %v605
      %615 = vrot.lane.b32.xlu0 %v552, 94
      %v616 = vpop.permute.xlu0 %615
      %617 = vrot.lane.b32.xlu0 %v553, 94
      %v618 = vpop.permute.xlu0 %617
      %619 = vrot.lane.b32.xlu0 %v554, 94
      %v620 = vpop.permute.xlu0 %619
      %621 = vrot.lane.b32.xlu0 %v555, 94
      %v622 = vpop.permute.xlu0 %621
      %623 = vrot.lane.b32.xlu0 %v556, 94
      %v624 = vpop.permute.xlu0 %623
      %625 = vrot.lane.b32.xlu0 %v557, 94
      %v626 = vpop.permute.xlu0 %625
      %627 = vrot.lane.b32.xlu0 %v558, 94
      %v628 = vpop.permute.xlu0 %627
      %629 = vrot.lane.b32.xlu0 %v559, 94
      %v630 = vpop.permute.xlu0 %629
      %631 = vrot.lane.b32.xlu0 %v560, 94
      %v632 = vpop.permute.xlu0 %631
      %vm633 = vcmask 769024
      %v634 = vsel %vm633, %v616, %v618
      %v635 = vsel %vm633, %v618, %v620
      %v636 = vsel %vm633, %v620, %v622
      %v637 = vsel %vm633, %v622, %v624
      %v638 = vsel %vm633, %v624, %v626
      %v639 = vsel %vm633, %v626, %v628
      %v640 = vsel %vm633, %v628, %v630
      %v641 = vsel %vm633, %v630, %v632
      %642 = vrot.lane.b32.xlu0 %v546, 93
      %v643 = vpop.permute.xlu0 %642
      %644 = vrot.lane.b32.xlu0 %v535, 93
      %v645 = vpop.permute.xlu0 %644
      %646 = vrot.lane.b32.xlu0 %v536, 93
      %v647 = vpop.permute.xlu0 %646
      %648 = vrot.lane.b32.xlu0 %v537, 93
      %v649 = vpop.permute.xlu0 %648
      %650 = vrot.lane.b32.xlu0 %v538, 93
      %v651 = vpop.permute.xlu0 %650
      %652 = vrot.lane.b32.xlu0 %v539, 93
      %v653 = vpop.permute.xlu0 %652
      %654 = vrot.lane.b32.xlu0 %v540, 93
      %v655 = vpop.permute.xlu0 %654
      %656 = vrot.lane.b32.xlu0 %v541, 93
      %v657 = vpop.permute.xlu0 %656
      %658 = vrot.lane.b32.xlu0 %v549, 93
      %v659 = vpop.permute.xlu0 %658
      %vm660 = vcmask 760832
      %v661 = vsel %vm660, %v643, %v645
      %v662 = vsel %vm660, %v645, %v647
      %v663 = vsel %vm660, %v647, %v649
      %v664 = vsel %vm660, %v649, %v651
      %v665 = vsel %vm660, %v651, %v653
      %v666 = vsel %vm660, %v653, %v655
      %v667 = vsel %vm660, %v655, %v657
      %v668 = vsel %vm660, %v657, %v659
      %669 = vrot.lane.b32.xlu0 %v552, 92
      %v670 = vpop.permute.xlu0 %669
      %671 = vrot.lane.b32.xlu0 %v553, 92
      %v672 = vpop.permute.xlu0 %671
      %673 = vrot.lane.b32.xlu0 %v554, 92
      %v674 = vpop.permute.xlu0 %673
      %675 = vrot.lane.b32.xlu0 %v555, 92
      %v676 = vpop.permute.xlu0 %675
      %677 = vrot.lane.b32.xlu0 %v556, 92
      %v678 = vpop.permute.xlu0 %677
      %679 = vrot.lane.b32.xlu0 %v557, 92
      %v680 = vpop.permute.xlu0 %679
      %681 = vrot.lane.b32.xlu0 %v558, 92
      %v682 = vpop.permute.xlu0 %681
      %683 = vrot.lane.b32.xlu0 %v559, 92
      %v684 = vpop.permute.xlu0 %683
      %685 = vrot.lane.b32.xlu0 %v560, 92
      %v686 = vpop.permute.xlu0 %685
      %vm687 = vcmask 752640
      %v688 = vsel %vm687, %v670, %v672
      %v689 = vsel %vm687, %v672, %v674
      %v690 = vsel %vm687, %v674, %v676
      %v691 = vsel %vm687, %v676, %v678
      %v692 = vsel %vm687, %v678, %v680
      %v693 = vsel %vm687, %v680, %v682
      %v694 = vsel %vm687, %v682, %v684
      %v695 = vsel %vm687, %v684, %v686
      %697 = vrot.lane.b32.xlu0 %v546, 60
      %v698 = vpop.permute.xlu0 %697
      %699 = vrot.lane.b32.xlu0 %v535, 60
      %v700 = vpop.permute.xlu0 %699
      %701 = vrot.lane.b32.xlu0 %v536, 60
      %v702 = vpop.permute.xlu0 %701
      %703 = vrot.lane.b32.xlu0 %v537, 60
      %v704 = vpop.permute.xlu0 %703
      %705 = vrot.lane.b32.xlu0 %v538, 60
      %v706 = vpop.permute.xlu0 %705
      %707 = vrot.lane.b32.xlu0 %v539, 60
      %v708 = vpop.permute.xlu0 %707
      %709 = vrot.lane.b32.xlu0 %v540, 60
      %v710 = vpop.permute.xlu0 %709
      %711 = vrot.lane.b32.xlu0 %v541, 60
      %v712 = vpop.permute.xlu0 %711
      %713 = vrot.lane.b32.xlu0 %v549, 60
      %v714 = vpop.permute.xlu0 %713
      %715 = vrot.lane.b32.xlu0 0, 60
      %v716 = vpop.permute.xlu0 %715
      %vm717 = vcmask 490496
      %v718 = vsel %vm717, %v698, %v700
      %v719 = vsel %vm717, %v700, %v702
      %v720 = vsel %vm717, %v702, %v704
      %v721 = vsel %vm717, %v704, %v706
      %v722 = vsel %vm717, %v706, %v708
      %v723 = vsel %vm717, %v708, %v710
      %v724 = vsel %vm717, %v710, %v712
      %v725 = vsel %vm717, %v712, %v714
      %v726 = vsel %vm717, %v714, %v716
      %v727 = vrot.slane 0, 4
      %728 = vrot.lane.b32.xlu0 %v552, 59
      %v729 = vpop.permute.xlu0 %728
      %730 = vrot.lane.b32.xlu0 %v553, 59
      %v731 = vpop.permute.xlu0 %730
      %732 = vrot.lane.b32.xlu0 %v554, 59
      %v733 = vpop.permute.xlu0 %732
      %734 = vrot.lane.b32.xlu0 %v555, 59
      %v735 = vpop.permute.xlu0 %734
      %736 = vrot.lane.b32.xlu0 %v556, 59
      %v737 = vpop.permute.xlu0 %736
      %738 = vrot.lane.b32.xlu0 %v557, 59
      %v739 = vpop.permute.xlu0 %738
      %740 = vrot.lane.b32.xlu0 %v558, 59
      %v741 = vpop.permute.xlu0 %740
      %742 = vrot.lane.b32.xlu0 %v559, 59
      %v743 = vpop.permute.xlu0 %742
      %744 = vrot.lane.b32.xlu0 %v560, 59
      %v745 = vpop.permute.xlu0 %744
      %746 = vrot.lane.b32.xlu0 %v727, 59
      %v747 = vpop.permute.xlu0 %746
      %vm748 = vcmask 482304
      %v749 = vsel %vm748, %v729, %v731
      %v750 = vsel %vm748, %v731, %v733
      %v751 = vsel %vm748, %v733, %v735
      %v752 = vsel %vm748, %v735, %v737
      %v753 = vsel %vm748, %v737, %v739
      %v754 = vsel %vm748, %v739, %v741
      %v755 = vsel %vm748, %v741, %v743
      %v756 = vsel %vm748, %v743, %v745
      %v757 = vsel %vm748, %v745, %v747
      %758 = vrot.lane.b32.xlu0 %v546, 58
      %v759 = vpop.permute.xlu0 %758
      %760 = vrot.lane.b32.xlu0 %v535, 58
      %v761 = vpop.permute.xlu0 %760
      %762 = vrot.lane.b32.xlu0 %v536, 58
      %v763 = vpop.permute.xlu0 %762
      %764 = vrot.lane.b32.xlu0 %v537, 58
      %v765 = vpop.permute.xlu0 %764
      %766 = vrot.lane.b32.xlu0 %v538, 58
      %v767 = vpop.permute.xlu0 %766
      %768 = vrot.lane.b32.xlu0 %v539, 58
      %v769 = vpop.permute.xlu0 %768
      %770 = vrot.lane.b32.xlu0 %v540, 58
      %v771 = vpop.permute.xlu0 %770
      %772 = vrot.lane.b32.xlu0 %v541, 58
      %v773 = vpop.permute.xlu0 %772
      %774 = vrot.lane.b32.xlu0 %v549, 58
      %v775 = vpop.permute.xlu0 %774
      %776 = vrot.lane.b32.xlu0 0, 58
      %v777 = vpop.permute.xlu0 %776
      %vm778 = vcmask 474112
      %v779 = vsel %vm778, %v759, %v761
      %v780 = vsel %vm778, %v761, %v763
      %v781 = vsel %vm778, %v763, %v765
      %v782 = vsel %vm778, %v765, %v767
      %v783 = vsel %vm778, %v767, %v769
      %v784 = vsel %vm778, %v769, %v771
      %v785 = vsel %vm778, %v771, %v773
      %v786 = vsel %vm778, %v773, %v775
      %v787 = vsel %vm778, %v775, %v777
      %vm788 = vcmask 1043456
      %v790 = vsel %vm788, %v546, %v580
      %v794 = vsel %vm788, %v535, %v581
      %v798 = vsel %vm788, %v536, %v582
      %v802 = vsel %vm788, %v537, %v583
      %v806 = vsel %vm788, %v538, %v584
      %v810 = vsel %vm788, %v539, %v585
      %v814 = vsel %vm788, %v540, %v586
      %v818 = vsel %vm788, %v541, %v587
      %v821 = vsel %vm788, %v549, %v578
      %v825 = vsel %vm788, %v607, %v634
      %v829 = vsel %vm788, %v608, %v635
      %v833 = vsel %vm788, %v609, %v636
      %v837 = vsel %vm788, %v610, %v637
      %v841 = vsel %vm788, %v611, %v638
      %v845 = vsel %vm788, %v612, %v639
      %v849 = vsel %vm788, %v613, %v640
      %v853 = vsel %vm788, %v614, %v641
      %v857 = vsel %vm788, %v605, %v632
      %v861 = vsel %vm788, %v661, %v688
      %v865 = vsel %vm788, %v662, %v689
      %v869 = vsel %vm788, %v663, %v690
      %v873 = vsel %vm788, %v664, %v691
      %v877 = vsel %vm788, %v665, %v692
      %v881 = vsel %vm788, %v666, %v693
      %v885 = vsel %vm788, %v667, %v694
      %v889 = vsel %vm788, %v668, %v695
      %v893 = vsel %vm788, %v659, %v686
      %v897 = vsel %vm788, %v718, %v749
      %v901 = vsel %vm788, %v719, %v750
      %v905 = vsel %vm788, %v720, %v751
      %v909 = vsel %vm788, %v721, %v752
      %v913 = vsel %vm788, %v722, %v753
      %v917 = vsel %vm788, %v723, %v754
      %v921 = vsel %vm788, %v724, %v755
      %v925 = vsel %vm788, %v725, %v756
      %v929 = vsel %vm788, %v726, %v757
      %932 = vset.pattern.permute.xlu0 0
      %933 = vperm.xlu0 %932, %v391
      %v934 = vpop.permute.xlu0 %933
      %vm936 = vcmask 588800
      %v938 = vsel %vm936, %v390, 0
      %v941 = vsel %vm788, %v779, 0
      %v944 = vsel %vm788, %v780, 0
      %v947 = vsel %vm788, %v781, 0
      %v950 = vsel %vm788, %v782, 0
      %v953 = vsel %vm788, %v783, 0
      %v956 = vsel %vm788, %v784, 0
      %v959 = vsel %vm788, %v785, 0
      %v962 = vsel %vm788, %v786, 0
      %v965 = vsel %vm788, %v787, 0
      %967 = vmatprep.subr.bf16.mxu0 %v794
      %968 = vmatpush1.bf16.msra.mxu0 %v790
      %969 = vmatprep.subr.bf16.mxu0 %v829
      %970 = vmatpush1.bf16.msra.mxu0 %v825
      %971 = vmatprep.subr.bf16.mxu0 %v865
      %972 = vmatpush1.bf16.msra.mxu0 %v861
      %973 = vmatprep.subr.bf16.mxu0 %v901
      %974 = vmatpush1.bf16.msra.mxu0 %v897
      %975 = vmatprep.subr.bf16.mxu0 %v944
      %976 = vmatpush1.bf16.msra.mxu0 %v941
      %977 = vmatprep.subr.bf16.mxu0 0
      %978 = vmatpush1.bf16.msra.mxu0 0
      %979 = vmatprep.subr.bf16.mxu0 0
      %980 = vmatpush1.bf16.msra.mxu0 0
      %981 = vmatprep.subr.bf16.mxu0 0
      %982 = vmatpush1.bf16.msra.mxu0 0
      %983 = vmatprep.subr.bf16.mxu0 0
      %984 = vmatpush1.bf16.msra.mxu0 0
      %985 = vmatprep.subr.bf16.mxu0 0
      %986 = vmatpush1.bf16.msra.mxu0 0
      %987 = vmatprep.subr.bf16.mxu0 0
      %988 = vmatpush1.bf16.msra.mxu0 0
      %989 = vmatprep.subr.bf16.mxu0 0
      %990 = vmatpush1.bf16.msra.mxu0 0
      %991 = vmatprep.subr.bf16.mxu0 0
      %992 = vmatpush1.bf16.msra.mxu0 0
      %993 = vmatprep.subr.bf16.mxu0 0
      %994 = vmatpush1.bf16.msra.mxu0 0
      %995 = vmatprep.subr.bf16.mxu0 0
      %996 = vmatpush1.bf16.msra.mxu0 0
      %997 = vmatprep.subr.bf16.mxu0 0
      %998 = vmatpush1.bf16.msra.mxu0 0
      %999 = vmatprep.mubr.bf16.mxu0 0
      %1000 = vmatmul.mubr.bf16.gmra.mrb[0].mxu0 %v938
      %v1001 = vpop.f32.mrb[0].mxu0
      %v1002 = vadd.f32 %v934, %v1001
      %v1003 = vpop.f32.mrb[0].mxu0
      %v1004 = vadd.f32 %v934, %v1003
      %v1005 = vpop.f32.mrb[0].mxu0
      %v1006 = vpop.f32.mrb[0].mxu0
      %1007 = vdwg.mxu0
      %1008 = vmatprep.subr.bf16.mxu0 %v802
      %1009 = vmatpush1.bf16.msra.mxu0 %v798
      %1010 = vmatprep.subr.bf16.mxu0 %v837
      %1011 = vmatpush1.bf16.msra.mxu0 %v833
      %1012 = vmatprep.subr.bf16.mxu0 %v873
      %1013 = vmatpush1.bf16.msra.mxu0 %v869
      %1014 = vmatprep.subr.bf16.mxu0 %v909
      %1015 = vmatpush1.bf16.msra.mxu0 %v905
      %1016 = vmatprep.subr.bf16.mxu0 %v950
      %1017 = vmatpush1.bf16.msra.mxu0 %v947
      %1018 = vmatprep.subr.bf16.mxu0 0
      %1019 = vmatpush1.bf16.msra.mxu0 0
      %1020 = vmatprep.subr.bf16.mxu0 0
      %1021 = vmatpush1.bf16.msra.mxu0 0
      %1022 = vmatprep.subr.bf16.mxu0 0
      %1023 = vmatpush1.bf16.msra.mxu0 0
      %1024 = vmatprep.subr.bf16.mxu0 0
      %1025 = vmatpush1.bf16.msra.mxu0 0
      %1026 = vmatprep.subr.bf16.mxu0 0
      %1027 = vmatpush1.bf16.msra.mxu0 0
      %1028 = vmatprep.subr.bf16.mxu0 0
      %1029 = vmatpush1.bf16.msra.mxu0 0
      %1030 = vmatprep.subr.bf16.mxu0 0
      %1031 = vmatpush1.bf16.msra.mxu0 0
      %1032 = vmatprep.subr.bf16.mxu0 0
      %1033 = vmatpush1.bf16.msra.mxu0 0
      %1034 = vmatprep.subr.bf16.mxu0 0
      %1035 = vmatpush1.bf16.msra.mxu0 0
      %1036 = vmatprep.subr.bf16.mxu0 0
      %1037 = vmatpush1.bf16.msra.mxu0 0
      %1038 = vmatprep.subr.bf16.mxu0 0
      %1039 = vmatpush1.bf16.msra.mxu0 0
      %1040 = vmatprep.mubr.bf16.mxu0 0
      %1041 = vmatmul.mubr.bf16.gmra.mrb[0].mxu0 %v938
      %v1042 = vpop.f32.mrb[0].mxu0
      %v1043 = vadd.f32 %v934, %v1042
      %v1044 = vpop.f32.mrb[0].mxu0
      %v1045 = vadd.f32 %v934, %v1044
      %v1046 = vpop.f32.mrb[0].mxu0
      %v1047 = vpop.f32.mrb[0].mxu0
      %1048 = vdwg.mxu0
      %1049 = vmatprep.subr.bf16.mxu0 %v810
      %1050 = vmatpush1.bf16.msra.mxu0 %v806
      %1051 = vmatprep.subr.bf16.mxu0 %v845
      %1052 = vmatpush1.bf16.msra.mxu0 %v841
      %1053 = vmatprep.subr.bf16.mxu0 %v881
      %1054 = vmatpush1.bf16.msra.mxu0 %v877
      %1055 = vmatprep.subr.bf16.mxu0 %v917
      %1056 = vmatpush1.bf16.msra.mxu0 %v913
      %1057 = vmatprep.subr.bf16.mxu0 %v956
      %1058 = vmatpush1.bf16.msra.mxu0 %v953
      %1059 = vmatprep.subr.bf16.mxu0 0
      %1060 = vmatpush1.bf16.msra.mxu0 0
      %1061 = vmatprep.subr.bf16.mxu0 0
      %1062 = vmatpush1.bf16.msra.mxu0 0
      %1063 = vmatprep.subr.bf16.mxu0 0
      %1064 = vmatpush1.bf16.msra.mxu0 0
      %1065 = vmatprep.subr.bf16.mxu0 0
      %1066 = vmatpush1.bf16.msra.mxu0 0
      %1067 = vmatprep.subr.bf16.mxu0 0
      %1068 = vmatpush1.bf16.msra.mxu0 0
      %1069 = vmatprep.subr.bf16.mxu0 0
      %1070 = vmatpush1.bf16.msra.mxu0 0
      %1071 = vmatprep.subr.bf16.mxu0 0
      %1072 = vmatpush1.bf16.msra.mxu0 0
      %1073 = vmatprep.subr.bf16.mxu0 0
      %1074 = vmatpush1.bf16.msra.mxu0 0
      %1075 = vmatprep.subr.bf16.mxu0 0
      %1076 = vmatpush1.bf16.msra.mxu0 0
      %1077 = vmatprep.subr.bf16.mxu0 0
      %1078 = vmatpush1.bf16.msra.mxu0 0
      %1079 = vmatprep.subr.bf16.mxu0 0
      %1080 = vmatpush1.bf16.msra.mxu0 0
      %1081 = vmatprep.mubr.bf16.mxu0 0
      %1082 = vmatmul.mubr.bf16.gmra.mrb[0].mxu0 %v938
      %v1083 = vpop.f32.mrb[0].mxu0
      %v1084 = vadd.f32 %v934, %v1083
      %v1085 = vpop.f32.mrb[0].mxu0
      %v1086 = vadd.f32 %v934, %v1085
      %v1087 = vpop.f32.mrb[0].mxu0
      %v1088 = vpop.f32.mrb[0].mxu0
      %1089 = vdwg.mxu0
      %1090 = vmatprep.subr.bf16.mxu0 %v818
      %1091 = vmatpush1.bf16.msra.mxu0 %v814
      %1092 = vmatprep.subr.bf16.mxu0 %v853
      %1093 = vmatpush1.bf16.msra.mxu0 %v849
      %1094 = vmatprep.subr.bf16.mxu0 %v889
      %1095 = vmatpush1.bf16.msra.mxu0 %v885
      %1096 = vmatprep.subr.bf16.mxu0 %v925
      %1097 = vmatpush1.bf16.msra.mxu0 %v921
      %1098 = vmatprep.subr.bf16.mxu0 %v962
      %1099 = vmatpush1.bf16.msra.mxu0 %v959
      %1100 = vmatprep.subr.bf16.mxu0 0
      %1101 = vmatpush1.bf16.msra.mxu0 0
      %1102 = vmatprep.subr.bf16.mxu0 0
      %1103 = vmatpush1.bf16.msra.mxu0 0
      %1104 = vmatprep.subr.bf16.mxu0 0
      %1105 = vmatpush1.bf16.msra.mxu0 0
      %1106 = vmatprep.subr.bf16.mxu0 0
      %1107 = vmatpush1.bf16.msra.mxu0 0
      %1108 = vmatprep.subr.bf16.mxu0 0
      %1109 = vmatpush1.bf16.msra.mxu0 0
      %1110 = vmatprep.subr.bf16.mxu0 0
      %1111 = vmatpush1.bf16.msra.mxu0 0
      %1112 = vmatprep.subr.bf16.mxu0 0
      %1113 = vmatpush1.bf16.msra.mxu0 0
      %1114 = vmatprep.subr.bf16.mxu0 0
      %1115 = vmatpush1.bf16.msra.mxu0 0
      %1116 = vmatprep.subr.bf16.mxu0 0
      %1117 = vmatpush1.bf16.msra.mxu0 0
      %1118 = vmatprep.subr.bf16.mxu0 0
      %1119 = vmatpush1.bf16.msra.mxu0 0
      %1120 = vmatprep.subr.bf16.mxu0 0
      %1121 = vmatpush1.bf16.msra.mxu0 0
      %1122 = vmatprep.mubr.bf16.mxu0 0
      %1123 = vmatmul.mubr.bf16.gmra.mrb[0].mxu0 %v938
      %v1124 = vpop.f32.mrb[0].mxu0
      %v1125 = vadd.f32 %v934, %v1124
      %v1126 = vpop.f32.mrb[0].mxu0
      %v1127 = vadd.f32 %v934, %v1126
      %v1128 = vpop.f32.mrb[0].mxu0
      %v1129 = vpop.f32.mrb[0].mxu0
      %1130 = vdwg.mxu0
      %1131 = vmatprep.subr.bf16.mxu0 0
      %1132 = vmatpush1.bf16.msra.mxu0 %v821
      %1133 = vmatprep.subr.bf16.mxu0 0
      %1134 = vmatpush1.bf16.msra.mxu0 %v857
      %1135 = vmatprep.subr.bf16.mxu0 0
      %1136 = vmatpush1.bf16.msra.mxu0 %v893
      %1137 = vmatprep.subr.bf16.mxu0 0
      %1138 = vmatpush1.bf16.msra.mxu0 %v929
      %1139 = vmatprep.subr.bf16.mxu0 0
      %1140 = vmatpush1.bf16.msra.mxu0 %v965
      %1141 = vmatprep.subr.bf16.mxu0 0
      %1142 = vmatpush1.bf16.msra.mxu0 0
      %1143 = vmatprep.subr.bf16.mxu0 0
      %1144 = vmatpush1.bf16.msra.mxu0 0
      %1145 = vmatprep.subr.bf16.mxu0 0
      %1146 = vmatpush1.bf16.msra.mxu0 0
      %1147 = vmatprep.subr.bf16.mxu0 0
      %1148 = vmatpush1.bf16.msra.mxu0 0
      %1149 = vmatprep.subr.bf16.mxu0 0
      %1150 = vmatpush1.bf16.msra.mxu0 0
      %1151 = vmatprep.subr.bf16.mxu0 0
      %1152 = vmatpush1.bf16.msra.mxu0 0
      %1153 = vmatprep.subr.bf16.mxu0 0
      %1154 = vmatpush1.bf16.msra.mxu0 0
      %1155 = vmatprep.subr.bf16.mxu0 0
      %1156 = vmatpush1.bf16.msra.mxu0 0
      %1157 = vmatprep.subr.bf16.mxu0 0
      %1158 = vmatpush1.bf16.msra.mxu0 0
      %1159 = vmatprep.subr.bf16.mxu0 0
      %1160 = vmatpush1.bf16.msra.mxu0 0
      %1161 = vmatprep.subr.bf16.mxu0 0
      %1162 = vmatpush1.bf16.msra.mxu0 0
      %1163 = vmatprep.mubr.bf16.mxu0 0
      %1164 = vmatmul.mubr.bf16.gmra.mrb[0].mxu0 %v938
      %v1165 = vpop.f32.mrb[0].mxu0
      %v1166 = vadd.f32 %v934, %v1165
      %v1167 = vpop.f32.mrb[0].mxu0
      %v1168 = vpop.f32.mrb[0].mxu0
      %v1169 = vpop.f32.mrb[0].mxu0
      %1170 = vdwg.mxu0
      %v1171 = vld [vmem:[%s381] sm:$0xff]
      %v1172 = vld [vmem:[%s381 + $0x8] sm:$0xff]
      %v1173 = vld [vmem:[%s381 + $0x10] sm:$0xff]
      %v1174 = vld [vmem:[%s381 + $0x18] sm:$0xff]
      %v1175 = vld [vmem:[%s381 + $0x20] sm:$0xff]
      %v1180 = vcombine.high %v1171, %v1171
      %v1181 = vcombine.high %v1172, %v1172
      %v1182 = vcombine.high %v1173, %v1173
      %v1183 = vcombine.high %v1174, %v1174
      %v1188 = vpack.c.bf16 %v1171, %v1171
      %v1189 = vpack.c.bf16 %v1180, %v1180
      %v1190 = vpack.c.bf16 %v1172, %v1172
      %v1191 = vpack.c.bf16 %v1181, %v1181
      %v1192 = vpack.c.bf16 %v1173, %v1173
      %v1193 = vpack.c.bf16 %v1182, %v1182
      %v1194 = vpack.c.bf16 %v1174, %v1174
      %v1195 = vpack.c.bf16 %v1183, %v1183
      %v1196 = vpack.c.bf16 %v1175, %v1175
      %1198 = vset.pattern.permute.xlu0 0
      %1199 = vperm.xlu0 %1198, %v393
      %v1200 = vpop.permute.xlu0 %1199
      %1211 = vrot.lane.b32.xlu0 %v1188, 93
      %v1212 = vpop.permute.xlu0 %1211
      %1213 = vrot.lane.b32.xlu0 %v1189, 93
      %v1214 = vpop.permute.xlu0 %1213
      %1215 = vrot.lane.b32.xlu0 %v1190, 93
      %v1216 = vpop.permute.xlu0 %1215
      %1217 = vrot.lane.b32.xlu0 %v1191, 93
      %v1218 = vpop.permute.xlu0 %1217
      %1219 = vrot.lane.b32.xlu0 %v1192, 93
      %v1220 = vpop.permute.xlu0 %1219
      %1221 = vrot.lane.b32.xlu0 %v1193, 93
      %v1222 = vpop.permute.xlu0 %1221
      %1223 = vrot.lane.b32.xlu0 %v1194, 93
      %v1224 = vpop.permute.xlu0 %1223
      %1225 = vrot.lane.b32.xlu0 %v1195, 93
      %v1226 = vpop.permute.xlu0 %1225
      %1227 = vrot.lane.b32.xlu0 %v1196, 93
      %v1228 = vpop.permute.xlu0 %1227
      %v1229 = vsel %vm660, %v1212, %v1214
      %v1230 = vsel %vm660, %v1214, %v1216
      %v1231 = vsel %vm660, %v1216, %v1218
      %v1232 = vsel %vm660, %v1218, %v1220
      %v1233 = vsel %vm660, %v1220, %v1222
      %v1234 = vsel %vm660, %v1222, %v1224
      %v1235 = vsel %vm660, %v1224, %v1226
      %v1236 = vsel %vm660, %v1226, %v1228
      %vm1237 = vcmask 31744
      %v1239 = vsel %vm1237, %v392, 0
      %vm1241 = vcmask 1041408
      %v1243 = vsel %vm1241, %v1229, 0
      %v1246 = vsel %vm1241, %v1230, 0
      %v1249 = vsel %vm1241, %v1231, 0
      %v1252 = vsel %vm1241, %v1232, 0
      %v1255 = vsel %vm1241, %v1233, 0
      %v1258 = vsel %vm1241, %v1234, 0
      %v1261 = vsel %vm1241, %v1235, 0
      %v1264 = vsel %vm1241, %v1236, 0
      %v1267 = vsel %vm1241, %v1228, 0
      %1269 = vmatprep.subr.bf16.mxu0 %v1246
      %1270 = vmatpush1.bf16.msra.mxu0 %v1243
      %1271 = vmatprep.subr.bf16.mxu0 0
      %1272 = vmatpush1.bf16.msra.mxu0 0
      %1273 = vmatprep.subr.bf16.mxu0 0
      %1274 = vmatpush1.bf16.msra.mxu0 0
      %1275 = vmatprep.subr.bf16.mxu0 0
      %1276 = vmatpush1.bf16.msra.mxu0 0
      %1277 = vmatprep.subr.bf16.mxu0 0
      %1278 = vmatpush1.bf16.msra.mxu0 0
      %1279 = vmatprep.subr.bf16.mxu0 0
      %1280 = vmatpush1.bf16.msra.mxu0 0
      %1281 = vmatprep.subr.bf16.mxu0 0
      %1282 = vmatpush1.bf16.msra.mxu0 0
      %1283 = vmatprep.subr.bf16.mxu0 0
      %1284 = vmatpush1.bf16.msra.mxu0 0
      %1285 = vmatprep.subr.bf16.mxu0 0
      %1286 = vmatpush1.bf16.msra.mxu0 0
      %1287 = vmatprep.subr.bf16.mxu0 0
      %1288 = vmatpush1.bf16.msra.mxu0 0
      %1289 = vmatprep.subr.bf16.mxu0 0
      %1290 = vmatpush1.bf16.msra.mxu0 0
      %1291 = vmatprep.subr.bf16.mxu0 0
      %1292 = vmatpush1.bf16.msra.mxu0 0
      %1293 = vmatprep.subr.bf16.mxu0 0
      %1294 = vmatpush1.bf16.msra.mxu0 0
      %1295 = vmatprep.subr.bf16.mxu0 0
      %1296 = vmatpush1.bf16.msra.mxu0 0
      %1297 = vmatprep.subr.bf16.mxu0 0
      %1298 = vmatpush1.bf16.msra.mxu0 0
      %1299 = vmatprep.subr.bf16.mxu0 0
      %1300 = vmatpush1.bf16.msra.mxu0 0
      %1301 = vmatprep.mubr.bf16.mxu0 0
      %1302 = vmatmul.mubr.bf16.gmra.mrb[0].mxu0 %v1239
      %v1303 = vpop.f32.mrb[0].mxu0
      %v1304 = vadd.f32 %v1200, %v1303
      %v1305 = vpop.f32.mrb[0].mxu0
      %v1306 = vadd.f32 %v1200, %v1305
      %v1307 = vpop.f32.mrb[0].mxu0
      %v1308 = vpop.f32.mrb[0].mxu0
      %1309 = vdwg.mxu0
      %1310 = vmatprep.subr.bf16.mxu0 %v1252
      %1311 = vmatpush1.bf16.msra.mxu0 %v1249
      %1312 = vmatprep.subr.bf16.mxu0 0
      %1313 = vmatpush1.bf16.msra.mxu0 0
      %1314 = vmatprep.subr.bf16.mxu0 0
      %1315 = vmatpush1.bf16.msra.mxu0 0
      %1316 = vmatprep.subr.bf16.mxu0 0
      %1317 = vmatpush1.bf16.msra.mxu0 0
      %1318 = vmatprep.subr.bf16.mxu0 0
      %1319 = vmatpush1.bf16.msra.mxu0 0
      %1320 = vmatprep.subr.bf16.mxu0 0
      %1321 = vmatpush1.bf16.msra.mxu0 0
      %1322 = vmatprep.subr.bf16.mxu0 0
      %1323 = vmatpush1.bf16.msra.mxu0 0
      %1324 = vmatprep.subr.bf16.mxu0 0
      %1325 = vmatpush1.bf16.msra.mxu0 0
      %1326 = vmatprep.subr.bf16.mxu0 0
      %1327 = vmatpush1.bf16.msra.mxu0 0
      %1328 = vmatprep.subr.bf16.mxu0 0
      %1329 = vmatpush1.bf16.msra.mxu0 0
      %1330 = vmatprep.subr.bf16.mxu0 0
      %1331 = vmatpush1.bf16.msra.mxu0 0
      %1332 = vmatprep.subr.bf16.mxu0 0
      %1333 = vmatpush1.bf16.msra.mxu0 0
      %1334 = vmatprep.subr.bf16.mxu0 0
      %1335 = vmatpush1.bf16.msra.mxu0 0
      %1336 = vmatprep.subr.bf16.mxu0 0
      %1337 = vmatpush1.bf16.msra.mxu0 0
      %1338 = vmatprep.subr.bf16.mxu0 0
      %1339 = vmatpush1.bf16.msra.mxu0 0
      %1340 = vmatprep.subr.bf16.mxu0 0
      %1341 = vmatpush1.bf16.msra.mxu0 0
      %1342 = vmatprep.mubr.bf16.mxu0 0
      %1343 = vmatmul.mubr.bf16.gmra.mrb[0].mxu0 %v1239
      %v1344 = vpop.f32.mrb[0].mxu0
      %v1345 = vadd.f32 %v1200, %v1344
      %v1346 = vpop.f32.mrb[0].mxu0
      %v1347 = vadd.f32 %v1200, %v1346
      %v1348 = vpop.f32.mrb[0].mxu0
      %v1349 = vpop.f32.mrb[0].mxu0
      %1350 = vdwg.mxu0
      %1351 = vmatprep.subr.bf16.mxu0 %v1258
      %1352 = vmatpush1.bf16.msra.mxu0 %v1255
      %1353 = vmatprep.subr.bf16.mxu0 0
      %1354 = vmatpush1.bf16.msra.mxu0 0
      %1355 = vmatprep.subr.bf16.mxu0 0
      %1356 = vmatpush1.bf16.msra.mxu0 0
      %1357 = vmatprep.subr.bf16.mxu0 0
      %1358 = vmatpush1.bf16.msra.mxu0 0
      %1359 = vmatprep.subr.bf16.mxu0 0
      %1360 = vmatpush1.bf16.msra.mxu0 0
      %1361 = vmatprep.subr.bf16.mxu0 0
      %1362 = vmatpush1.bf16.msra.mxu0 0
      %1363 = vmatprep.subr.bf16.mxu0 0
      %1364 = vmatpush1.bf16.msra.mxu0 0
      %1365 = vmatprep.subr.bf16.mxu0 0
      %1366 = vmatpush1.bf16.msra.mxu0 0
      %1367 = vmatprep.subr.bf16.mxu0 0
      %1368 = vmatpush1.bf16.msra.mxu0 0
      %1369 = vmatprep.subr.bf16.mxu0 0
      %1370 = vmatpush1.bf16.msra.mxu0 0
      %1371 = vmatprep.subr.bf16.mxu0 0
      %1372 = vmatpush1.bf16.msra.mxu0 0
      %1373 = vmatprep.subr.bf16.mxu0 0
      %1374 = vmatpush1.bf16.msra.mxu0 0
      %1375 = vmatprep.subr.bf16.mxu0 0
      %1376 = vmatpush1.bf16.msra.mxu0 0
      %1377 = vmatprep.subr.bf16.mxu0 0
      %1378 = vmatpush1.bf16.msra.mxu0 0
      %1379 = vmatprep.subr.bf16.mxu0 0
      %1380 = vmatpush1.bf16.msra.mxu0 0
      %1381 = vmatprep.subr.bf16.mxu0 0
      %1382 = vmatpush1.bf16.msra.mxu0 0
      %1383 = vmatprep.mubr.bf16.mxu0 0
      %1384 = vmatmul.mubr.bf16.gmra.mrb[0].mxu0 %v1239
      %v1385 = vpop.f32.mrb[0].mxu0
      %v1386 = vadd.f32 %v1200, %v1385
      %v1387 = vpop.f32.mrb[0].mxu0
      %v1388 = vadd.f32 %v1200, %v1387
      %v1389 = vpop.f32.mrb[0].mxu0
      %v1390 = vpop.f32.mrb[0].mxu0
      %1391 = vdwg.mxu0
      %1392 = vmatprep.subr.bf16.mxu0 %v1264
      %1393 = vmatpush1.bf16.msra.mxu0 %v1261
      %1394 = vmatprep.subr.bf16.mxu0 0
      %1395 = vmatpush1.bf16.msra.mxu0 0
      %1396 = vmatprep.subr.bf16.mxu0 0
      %1397 = vmatpush1.bf16.msra.mxu0 0
      %1398 = vmatprep.subr.bf16.mxu0 0
      %1399 = vmatpush1.bf16.msra.mxu0 0
      %1400 = vmatprep.subr.bf16.mxu0 0
      %1401 = vmatpush1.bf16.msra.mxu0 0
      %1402 = vmatprep.subr.bf16.mxu0 0
      %1403 = vmatpush1.bf16.msra.mxu0 0
      %1404 = vmatprep.subr.bf16.mxu0 0
      %1405 = vmatpush1.bf16.msra.mxu0 0
      %1406 = vmatprep.subr.bf16.mxu0 0
      %1407 = vmatpush1.bf16.msra.mxu0 0
      %1408 = vmatprep.subr.bf16.mxu0 0
      %1409 = vmatpush1.bf16.msra.mxu0 0
      %1410 = vmatprep.subr.bf16.mxu0 0
      %1411 = vmatpush1.bf16.msra.mxu0 0
      %1412 = vmatprep.subr.bf16.mxu0 0
      %1413 = vmatpush1.bf16.msra.mxu0 0
      %1414 = vmatprep.subr.bf16.mxu0 0
      %1415 = vmatpush1.bf16.msra.mxu0 0
      %1416 = vmatprep.subr.bf16.mxu0 0
      %1417 = vmatpush1.bf16.msra.mxu0 0
      %1418 = vmatprep.subr.bf16.mxu0 0
      %1419 = vmatpush1.bf16.msra.mxu0 0
      %1420 = vmatprep.subr.bf16.mxu0 0
      %1421 = vmatpush1.bf16.msra.mxu0 0
      %1422 = vmatprep.subr.bf16.mxu0 0
      %1423 = vmatpush1.bf16.msra.mxu0 0
      %1424 = vmatprep.mubr.bf16.mxu0 0
      %1425 = vmatmul.mubr.bf16.gmra.mrb[0].mxu0 %v1239
      %v1426 = vpop.f32.mrb[0].mxu0
      %v1427 = vadd.f32 %v1200, %v1426
      %v1428 = vpop.f32.mrb[0].mxu0
      %v1429 = vadd.f32 %v1200, %v1428
      %v1430 = vpop.f32.mrb[0].mxu0
      %v1431 = vpop.f32.mrb[0].mxu0
      %1432 = vdwg.mxu0
      %1433 = vmatprep.subr.bf16.mxu0 0
      %1434 = vmatpush1.bf16.msra.mxu0 %v1267
      %1435 = vmatprep.subr.bf16.mxu0 0
      %1436 = vmatpush1.bf16.msra.mxu0 0
      %1437 = vmatprep.subr.bf16.mxu0 0
      %1438 = vmatpush1.bf16.msra.mxu0 0
      %1439 = vmatprep.subr.bf16.mxu0 0
      %1440 = vmatpush1.bf16.msra.mxu0 0
      %1441 = vmatprep.subr.bf16.mxu0 0
      %1442 = vmatpush1.bf16.msra.mxu0 0
      %1443 = vmatprep.subr.bf16.mxu0 0
      %1444 = vmatpush1.bf16.msra.mxu0 0
      %1445 = vmatprep.subr.bf16.mxu0 0
      %1446 = vmatpush1.bf16.msra.mxu0 0
      %1447 = vmatprep.subr.bf16.mxu0 0
      %1448 = vmatpush1.bf16.msra.mxu0 0
      %1449 = vmatprep.subr.bf16.mxu0 0
      %1450 = vmatpush1.bf16.msra.mxu0 0
      %1451 = vmatprep.subr.bf16.mxu0 0
      %1452 = vmatpush1.bf16.msra.mxu0 0
      %1453 = vmatprep.subr.bf16.mxu0 0
      %1454 = vmatpush1.bf16.msra.mxu0 0
      %1455 = vmatprep.subr.bf16.mxu0 0
      %1456 = vmatpush1.bf16.msra.mxu0 0
      %1457 = vmatprep.subr.bf16.mxu0 0
      %1458 = vmatpush1.bf16.msra.mxu0 0
      %1459 = vmatprep.subr.bf16.mxu0 0
      %1460 = vmatpush1.bf16.msra.mxu0 0
      %1461 = vmatprep.subr.bf16.mxu0 0
      %1462 = vmatpush1.bf16.msra.mxu0 0
      %1463 = vmatprep.subr.bf16.mxu0 0
      %1464 = vmatpush1.bf16.msra.mxu0 0
      %1465 = vmatprep.mubr.bf16.mxu0 0
      %1466 = vmatmul.mubr.bf16.gmra.mrb[0].mxu0 %v1239
      %v1467 = vpop.f32.mrb[0].mxu0
      %v1468 = vadd.f32 %v1200, %v1467
      %v1469 = vpop.f32.mrb[0].mxu0
      %v1470 = vpop.f32.mrb[0].mxu0
      %v1471 = vpop.f32.mrb[0].mxu0
      %1472 = vdwg.mxu0
      %v1473 = vadd.f32 %v1002, %v1304
      %v1474 = vadd.f32 %v1004, %v1306
      %v1475 = vadd.f32 %v1043, %v1345
      %v1476 = vadd.f32 %v1045, %v1347
      %v1477 = vadd.f32 %v1084, %v1386
      %v1478 = vadd.f32 %v1086, %v1388
      %v1479 = vadd.f32 %v1125, %v1427
      %v1480 = vadd.f32 %v1127, %v1429
      %v1481 = vadd.f32 %v1166, %v1468
      %1482 = vst [vmem:[%s386] sm:$0xff] %v1473
      %1483 = vst [vmem:[%s386 + $0x8] sm:$0xff] %v1474
      %1484 = vst [vmem:[%s386 + $0x10] sm:$0xff] %v1475
      %1485 = vst [vmem:[%s386 + $0x18] sm:$0xff] %v1476
      %1486 = vst [vmem:[%s386 + $0x20] sm:$0xff] %v1477
      %1487 = vst [vmem:[%s386 + $0x28] sm:$0xff] %v1478
      %1488 = vst [vmem:[%s386 + $0x30] sm:$0xff] %v1479
      %1489 = vst [vmem:[%s386 + $0x38] sm:$0xff] %v1480
      %vm1490 = vcmask 523264
      %1491 = vst.msk [vmem:[%s386 + $0x40] sm:$0xff] %vm1490, %v1481
      %p1492 = scmp.lt.s32.totalorder %s20, 1
      %s1493 = scalar_select %p1492, %s20, 1
      %s1494 = smul.addr %s1493, 9
      %s1495 = smul.addr %s1494, 8
      %s1496 = scalar_lea.vmem %s9, %s1495
      // Predicated region
      $region57: #{res_block_generator.3} parent=55 // pred_check
        %p1497 = pneg %p247
      $region58: #{res_block_generator.3} parent=55 // pred_check_branch
        %1499 = sbr.rel (%p1497) target = $region60
      $region59: #{res_block_generator.3} parent=55 // pred_region
        _
      $region60: #{res_block_generator.3} parent=55 // pred_fallthru
        _
    $region56: #{res_block_generator.3} parent=5 // pred_fallthru
      _
    %p1500 = scmp.le.s32.totalorder 2, %s15
    // Predicated region
    $region61: #{res_block_generator.3} parent=5 // pred_check
      %p1501 = pneg %p1500
    $region62: #{res_block_generator.3} parent=5 // pred_check_branch
      %1503 = sbr.rel (%p1501) target = $region64
    $region63: #{res_block_generator.3} parent=5 // pred_region
      %s1504 = ssub.s32 %s15, 2
      // Predicated region
      $region65: #{res_block_generator.3} parent=63 // pred_check
        %p1505 = pneg %p253
      $region66: #{res_block_generator.3} parent=63 // pred_check_branch
        %1507 = sbr.rel (%p1505) target = $region68
      $region67: #{res_block_generator.3} parent=63 // pred_region
        %p1508 = scmp.lt.s32.totalorder %s21, 1
        %s1509 = scalar_select %p1508, %s21, 1
        %s1510 = smul.addr %s1509, 9
        %s1511 = smul.addr %s1510, 8
        %s1512 = scalar_lea.vmem %s9, %s1511
      $region68: #{res_block_generator.3} parent=63 // pred_fallthru
        _
    $region64: #{res_block_generator.3} parent=5 // pred_fallthru
      _
  $region6: #{res_block_generator.3} parent=0 // loop_footer
    %s19 = sadd.s32 1, %s15
  $region7: #{res_block_generator.3} parent=0 // loop_footer_branch
    %14 = sbr.rel target = $region3
  $region8: #{res_block_generator.3} parent=0 // loop_exit
    _

</llo_original>
